<compile_context>
chip_gen: v5e
topology: v5e:2x2
jax: 0.10.0
libtpu: 0.0.40
codegen_flags: <defaults>
</compile_context>

<pallas_src>
import functools
import math

import jax
import jax.numpy as jnp
from jax.experimental import pallas as pl
from jax.experimental.pallas import tpu as pltpu


def _round_up(n, m):
    return ((n + m - 1) // m) * m


# ----------------------------- Pallas kernels ------------------------------

def _instance_norm_kernel(x_ref, o_ref, *, eps):
    # InstanceNorm2d(affine=False): per-sample, per-channel normalization over H*W.
    x = x_ref[0]                                        # (HW, C) f32
    mean = jnp.mean(x, axis=0, keepdims=True)
    var = jnp.mean((x - mean) ** 2, axis=0, keepdims=True)   # biased variance
    o_ref[0] = (x - mean) * jax.lax.rsqrt(var + eps)


def _conv_shared_kernel(p_ref, w_ref, b_ref, s_ref, o_ref):
    # o = relu(p @ W1 + b1) + avatar_shared[n]   (fused conv_shared epilogue)
    y = jnp.dot(p_ref[...], w_ref[...], preferred_element_type=jnp.float32)
    y = jnp.maximum(y + b_ref[...], 0.0)
    o_ref[...] = (y + s_ref[0]).astype(o_ref.dtype)


def _spade_out_kernel(p_ref, wg_ref, wb_ref, xn_ref, gs_ref, bs_ref, o_ref):
    # gamma = p @ Wg + (b_gamma + avatar_gamma[n])
    # beta  = p @ Wb + (b_beta  + avatar_beta[n])
    # out   = x_norm * (1 + gamma) + beta          (fused SPADE affine)
    g = jnp.dot(p_ref[...], wg_ref[...], preferred_element_type=jnp.float32) + gs_ref[0]
    b = jnp.dot(p_ref[...], wb_ref[...], preferred_element_type=jnp.float32) + bs_ref[0]
    o_ref[...] = xn_ref[...] * (1.0 + g) + b


# ------------------------------ Pallas wrappers -----------------------------

def instance_norm(x_bhwc, eps=1e-5):
    B, H, W, C = x_bhwc.shape
    HW = H * W
    x2 = x_bhwc.reshape(B, HW, C).astype(jnp.float32)
    return pl.pallas_call(
        functools.partial(_instance_norm_kernel, eps=eps),
        out_shape=jax.ShapeDtypeStruct((B, HW, C), jnp.float32),
        grid_spec=pltpu.PrefetchScalarGridSpec(
            num_scalar_prefetch=0,
            grid=(B,),
            in_specs=[pl.BlockSpec((1, HW, C), lambda b: (b, 0, 0))],
            out_specs=pl.BlockSpec((1, HW, C), lambda b: (b, 0, 0)),
        ),
        compiler_params=pltpu.CompilerParams(dimension_semantics=("parallel",)),
    )(x2)                                               # (B, HW, C) f32


def conv_shared_gemm(patches, w_mat, bias, avatar_shared, B, HW):
    """relu(patches @ w_mat + bias) + avatar_shared[n]  -> (B*HW, 128) bf16."""
    M, K = patches.shape
    Cout = w_mat.shape[1]
    bias2 = bias.astype(jnp.float32).reshape(1, Cout)
    s3 = avatar_shared.astype(jnp.float32).reshape(B, 1, Cout)
    flops = 2 * M * K * Cout
    bytes_accessed = (patches.size + w_mat.size + M * Cout) * 2 + (bias2.size + s3.size) * 4
    return pl.pallas_call(
        _conv_shared_kernel,
        out_shape=jax.ShapeDtypeStruct((M, Cout), jnp.bfloat16),
        grid_spec=pltpu.PrefetchScalarGridSpec(
            num_scalar_prefetch=0,
            grid=(B,),
            in_specs=[
                pl.BlockSpec((HW, K), lambda b: (b, 0)),
                pl.BlockSpec((K, Cout), lambda b: (0, 0)),
                pl.BlockSpec((1, Cout), lambda b: (0, 0)),
                pl.BlockSpec((1, 1, Cout), lambda b: (b, 0, 0)),
            ],
            out_specs=pl.BlockSpec((HW, Cout), lambda b: (b, 0)),
        ),
        compiler_params=pltpu.CompilerParams(dimension_semantics=("parallel",)),
        cost_estimate=pl.CostEstimate(flops=flops, transcendentals=0,
                                      bytes_accessed=bytes_accessed),
    )(patches, w_mat, bias2, s3)


def spade_out_gemm(patches, wg, wb, xn_pad, gshift, bshift, B, HW):
    """x_norm * (1 + patches@Wg + gshift[n]) + (patches@Wb + bshift[n])."""
    M, K = patches.shape
    NP = wg.shape[1]
    gs3 = gshift.astype(jnp.float32).reshape(B, 1, NP)
    bs3 = bshift.astype(jnp.float32).reshape(B, 1, NP)
    flops = 2 * 2 * M * K * NP
    bytes_accessed = (patches.size + wg.size + wb.size) * 2 + (xn_pad.size + M * NP) * 4
    return pl.pallas_call(
        _spade_out_kernel,
        out_shape=jax.ShapeDtypeStruct((M, NP), jnp.float32),
        grid_spec=pltpu.PrefetchScalarGridSpec(
            num_scalar_prefetch=0,
            grid=(B,),
            in_specs=[
                pl.BlockSpec((HW, K), lambda b: (b, 0)),
                pl.BlockSpec((K, NP), lambda b: (0, 0)),
                pl.BlockSpec((K, NP), lambda b: (0, 0)),
                pl.BlockSpec((HW, NP), lambda b: (b, 0)),
                pl.BlockSpec((1, 1, NP), lambda b: (b, 0, 0)),
                pl.BlockSpec((1, 1, NP), lambda b: (b, 0, 0)),
            ],
            out_specs=pl.BlockSpec((HW, NP), lambda b: (b, 0)),
        ),
        compiler_params=pltpu.CompilerParams(dimension_semantics=("parallel",)),
        cost_estimate=pl.CostEstimate(flops=flops, transcendentals=0,
                                      bytes_accessed=bytes_accessed),
    )(patches, wg, wb, xn_pad, gs3, bs3)


# -------------------------------- glue (JAX) --------------------------------

def im2col_3x3(x_bhwc):
    """3x3, stride 1, pad 1.  (B,H,W,C) -> (B*H*W, 9*C), column order (kh, kw, c)."""
    B, H, W, C = x_bhwc.shape
    xp = jnp.pad(x_bhwc, ((0, 0), (1, 1), (1, 1), (0, 0)))
    cols = [xp[:, kh:kh + H, kw:kw + W, :] for kh in range(3) for kw in range(3)]
    return jnp.concatenate(cols, axis=-1).reshape(B * H * W, 9 * C)


def spade_forward(x_nchw, avatar_index, params, norm_nc):
    B, C, H, W = x_nchw.shape          # C == norm_nc == 3 (conv_shared has in_channels=3)
    HW = H * W
    NP = _round_up(norm_nc, 128)       # lane-dense output channels for the fused GEMM

    # Embedding lookups (tiny gathers; done in XLA glue).
    a_shared = params["emb_shared"][avatar_index]            # (B, 128)
    a_gamma = params["emb_gamma"][avatar_index]              # (B, norm_nc)
    a_beta = params["emb_beta"][avatar_index]                # (B, norm_nc)

    # ---- InstanceNorm2d (Pallas kernel K1) ----
    x_nhwc = jnp.transpose(x_nchw, (0, 2, 3, 1))             # (B, H, W, C)
    xn = instance_norm(x_nhwc)                               # (B, HW, C) f32

    # ---- conv_shared 3x3 + ReLU + avatar_shared (Pallas kernel K2) ----
    w1, b1 = params["conv_shared"]                           # (128, C, 3, 3), (128,)
    k1 = 9 * C
    k1p = _round_up(k1, 16)                                  # bf16 sublane-friendly K
    p1 = im2col_3x3(xn.reshape(B, H, W, C)).astype(jnp.bfloat16)
    p1 = jnp.pad(p1, ((0, 0), (0, k1p - k1)))
    w1m = jnp.transpose(w1, (2, 3, 1, 0)).reshape(k1, 128).astype(jnp.bfloat16)
    w1m = jnp.pad(w1m, ((0, k1p - k1), (0, 0)))
    shared = conv_shared_gemm(p1, w1m, b1, a_shared, B, HW)  # (B*HW, 128) bf16

    # ---- conv_gamma / conv_beta 3x3 + SPADE affine (Pallas kernel K3) ----
    wg, bg = params["conv_gamma"]
    wb, bb = params["conv_beta"]
    k2 = 9 * 128
    p2 = im2col_3x3(shared.reshape(B, H, W, 128))            # (B*HW, 1152) bf16
    wgm = jnp.pad(jnp.transpose(wg, (2, 3, 1, 0)).reshape(k2, norm_nc),
                  ((0, 0), (0, NP - norm_nc))).astype(jnp.bfloat16)
    wbm = jnp.pad(jnp.transpose(wb, (2, 3, 1, 0)).reshape(k2, norm_nc),
                  ((0, 0), (0, NP - norm_nc))).astype(jnp.bfloat16)
    # conv biases folded into the per-sample shifts together with the avatar embeddings.
    gshift = jnp.pad((bg[None, :] + a_gamma).astype(jnp.float32),
                     ((0, 0), (0, NP - norm_nc)))            # (B, NP)
    bshift = jnp.pad((bb[None, :] + a_beta).astype(jnp.float32),
                     ((0, 0), (0, NP - norm_nc)))            # (B, NP)
    xn_pad = jnp.pad(xn.reshape(B * HW, C), ((0, 0), (0, NP - C)))  # (B*HW, NP) f32

    out = spade_out_gemm(p2, wgm, wbm, xn_pad, gshift, bshift, B, HW)  # (B*HW, NP)
    out = out[:, :norm_nc].reshape(B, H, W, norm_nc)
    return jnp.transpose(out, (0, 3, 1, 2))                  # NCHW


# ------------------------------ param init ----------------------------------

def init_params(key, norm_nc, num_avatars):
    ks = jax.random.split(key, 9)

    def conv_init(kw_, kb_, cout, cin, ksz):
        fan_in = cin * ksz * ksz
        bound = 1.0 / math.sqrt(fan_in)
        w = jax.random.uniform(kw_, (cout, cin, ksz, ksz), jnp.float32, -bound, bound)
        b = jax.random.uniform(kb_, (cout,), jnp.float32, -bound, bound)
        return (w, b)

    return {
        "conv_shared": conv_init(ks[0], ks[1], 128, 3, 3),
        "conv_gamma":  conv_init(ks[2], ks[3], norm_nc, 128, 3),
        "conv_beta":   conv_init(ks[4], ks[5], norm_nc, 128, 3),
        "emb_shared":  jax.random.normal(ks[6], (num_avatars, 128), jnp.float32),
        "emb_gamma":   jax.random.normal(ks[7], (num_avatars, norm_nc), jnp.float32),
        "emb_beta":    jax.random.normal(ks[8], (num_avatars, norm_nc), jnp.float32),
    }


# ---------------------------- pure-JAX reference -----------------------------

def spade_reference(x, avatar_index, params, norm_nc):
    eps = 1e-5
    mean = jnp.mean(x, axis=(2, 3), keepdims=True)
    var = jnp.mean((x - mean) ** 2, axis=(2, 3), keepdims=True)
    xn = (x - mean) / jnp.sqrt(var + eps)

    def conv(z, w, b):
        y = jax.lax.conv_general_dilated(
            z, w, window_strides=(1, 1), padding=((1, 1), (1, 1)),
            dimension_numbers=("NCHW", "OIHW", "NCHW"))
        return y + b[None, :, None, None]

    a_s = params["emb_shared"][avatar_index][:, :, None, None]
    a_g = params["emb_gamma"][avatar_index][:, :, None, None]
    a_b = params["emb_beta"][avatar_index][:, :, None, None]
    w1, b1 = params["conv_shared"]
    wg, bg = params["conv_gamma"]
    wb, bb = params["conv_beta"]
    shared = jax.nn.relu(conv(xn, w1, b1)) + a_s
    gamma = conv(shared, wg, bg) + a_g
    beta = conv(shared, wb, bb) + a_b
    return xn * (1.0 + gamma) + beta


# ----------------------------------- main ------------------------------------

if __name__ == "__main__":
    key = jax.random.PRNGKey(0)
    k_x, k_i, k_p = jax.random.split(key, 3)

    norm_nc, num_avatars = 3, 4          # conv_shared takes 3-channel input -> norm_nc = 3
    batch, spatial = 2, 16

    x = jax.random.normal(k_x, (batch, norm_nc, spatial, spatial), jnp.float32)
    avatar_index = jax.random.randint(k_i, (batch,), 0, num_avatars)
    params = init_params(k_p, norm_nc, num_avatars)

    fwd = jax.jit(functools.partial(spade_forward, params=params, norm_nc=norm_nc))
    out = jax.block_until_ready(fwd(x, avatar_index))

    assert out.shape == (batch, norm_nc, spatial, spatial), out.shape
    assert bool(jnp.all(jnp.isfinite(out)))

    ref = spade_reference(x, avatar_index, params, norm_nc)
    err = float(jnp.max(jnp.abs(out - ref)))
    assert err < 5e-2, f"max abs err vs f32 reference: {err}"
    print("KERNEL_OK")
</pallas_src>

<mosaic_0001>
module attributes {stable_mosaic.version = 11 : i64} {
  func.func @_instance_norm_kernel(%arg0: i32, %arg1: memref<1x256x3xf32, #tpu.memory_space<vmem>>, %arg2: memref<1x256x3xf32, #tpu.memory_space<vmem>>) attributes {dimension_semantics = [#tpu.dimension_semantics<parallel>], iteration_bounds = array<i64: 2>, scalar_prefetch = 0 : i64, scratch_operands = 0 : i64, tpu.core_type = #tpu.core_type<tc>, window_params = [{transform_indices = @transform_0, window_bounds = array<i64: 1, 256, 3>}, {transform_indices = @transform_1, window_bounds = array<i64: 1, 256, 3>}]} {
    %c0 = arith.constant 0 : index
    %c0_0 = arith.constant 0 : index
    %c0_1 = arith.constant 0 : index
    %0 = vector.load %arg1[%c0, %c0_0, %c0_1] : memref<1x256x3xf32, #tpu.memory_space<vmem>>, vector<1x256x3xf32>
    %1 = vector.shape_cast %0 : vector<1x256x3xf32> to vector<256x3xf32>
    %cst = arith.constant dense<0.000000e+00> : vector<3xf32>
    %2 = vector.multi_reduction <add>, %1, %cst [0] : vector<256x3xf32> to vector<3xf32>
    %3 = vector.shape_cast %2 : vector<3xf32> to vector<1x3xf32>
    %cst_2 = arith.constant 2.560000e+02 : f32
    %4 = vector.broadcast %cst_2 : f32 to vector<1x3xf32>
    %5 = arith.divf %3, %4 : vector<1x3xf32>
    %6 = vector.broadcast %5 : vector<1x3xf32> to vector<256x3xf32>
    %7 = arith.subf %1, %6 : vector<256x3xf32>
    %8 = arith.mulf %7, %7 : vector<256x3xf32>
    %cst_3 = arith.constant dense<0.000000e+00> : vector<3xf32>
    %9 = vector.multi_reduction <add>, %8, %cst_3 [0] : vector<256x3xf32> to vector<3xf32>
    %10 = vector.shape_cast %9 : vector<3xf32> to vector<1x3xf32>
    %cst_4 = arith.constant 2.560000e+02 : f32
    %11 = vector.broadcast %cst_4 : f32 to vector<1x3xf32>
    %12 = arith.divf %10, %11 : vector<1x3xf32>
    %13 = vector.broadcast %5 : vector<1x3xf32> to vector<256x3xf32>
    %14 = arith.subf %1, %13 : vector<256x3xf32>
    %cst_5 = arith.constant 9.99999974E-6 : f32
    %15 = vector.broadcast %cst_5 : f32 to vector<1x3xf32>
    %16 = arith.addf %12, %15 : vector<1x3xf32>
    %17 = math.rsqrt %16 : vector<1x3xf32>
    %18 = vector.broadcast %17 : vector<1x3xf32> to vector<256x3xf32>
    %19 = arith.mulf %14, %18 : vector<256x3xf32>
    %c0_6 = arith.constant 0 : index
    %c0_7 = arith.constant 0 : index
    %c0_8 = arith.constant 0 : index
    %20 = vector.load %arg2[%c0_6, %c0_7, %c0_8] : memref<1x256x3xf32, #tpu.memory_space<vmem>>, vector<1x256x3xf32>
    %21 = vector.shape_cast %20 : vector<1x256x3xf32> to vector<256x3xf32>
    %22 = vector.shape_cast %19 : vector<256x3xf32> to vector<1x256x3xf32>
    tpu.vector_store %arg2[%c0_6, %c0_7, %c0_8], %22 {strides = array<i32>} : memref<1x256x3xf32, #tpu.memory_space<vmem>>, vector<1x256x3xf32>,
    return
  }
  func.func @transform_0(%arg0: i32) -> (i32, i32, i32) {
    %c0_i32 = arith.constant 0 : i32
    %c0_i32_0 = arith.constant 0 : i32
    %c0_i32_1 = arith.constant 0 : i32
    return %arg0, %c0_i32, %c0_i32_0 : i32, i32, i32
  }
  func.func @transform_1(%arg0: i32) -> (i32, i32, i32) {
    %c0_i32 = arith.constant 0 : i32
    %c0_i32_0 = arith.constant 0 : i32
    %c0_i32_1 = arith.constant 0 : i32
    return %arg0, %c0_i32, %c0_i32_0 : i32, i32, i32
  }
}

module attributes {stable_mosaic.version = 11 : i64} {
  func.func @_conv_shared_kernel(%arg0: i32, %arg1: memref<256x32xbf16, #tpu.memory_space<vmem>>, %arg2: memref<32x128xbf16, #tpu.memory_space<vmem>>, %arg3: memref<1x128xf32, #tpu.memory_space<vmem>>, %arg4: memref<1x1x128xf32, #tpu.memory_space<vmem>>, %arg5: memref<256x128xbf16, #tpu.memory_space<vmem>>) attributes {dimension_semantics = [#tpu.dimension_semantics<parallel>], iteration_bounds = array<i64: 2>, scalar_prefetch = 0 : i64, scratch_operands = 0 : i64, tpu.core_type = #tpu.core_type<tc>, window_params = [{transform_indices = @transform_0, window_bounds = array<i64: 256, 32>}, {pipeline_mode = #tpu.pipeline_mode<synchronous>, transform_indices = @transform_1, window_bounds = array<i64: 32, 128>}, {pipeline_mode = #tpu.pipeline_mode<synchronous>, transform_indices = @transform_2, window_bounds = array<i64: 1, 128>}, {transform_indices = @transform_3, window_bounds = array<i64: 1, 1, 128>}, {transform_indices = @transform_4, window_bounds = array<i64: 256, 128>}]} {
    %c0 = arith.constant 0 : index
    %c0_0 = arith.constant 0 : index
    %0 = vector.load %arg1[%c0, %c0_0] : memref<256x32xbf16, #tpu.memory_space<vmem>>, vector<256x32xbf16>
    %c0_1 = arith.constant 0 : index
    %c0_2 = arith.constant 0 : index
    %1 = vector.load %arg2[%c0_1, %c0_2] : memref<32x128xbf16, #tpu.memory_space<vmem>>, vector<32x128xbf16>
    %cst = arith.constant dense<0.000000e+00> : vector<256x128xf32>
    %2 = tpu.matmul %0, %1, %cst {dimension_numbers = #tpu.dot_dimension_numbers<[1], [0], [0], [1], [0, 0, 1, 1], [], []>} : vector<256x32xbf16>, vector<32x128xbf16>, vector<256x128xf32> -> vector<256x128xf32>
    %c0_3 = arith.constant 0 : index
    %c0_4 = arith.constant 0 : index
    %3 = vector.load %arg3[%c0_3, %c0_4] : memref<1x128xf32, #tpu.memory_space<vmem>>, vector<1x128xf32>
    %4 = vector.broadcast %3 : vector<1x128xf32> to vector<256x128xf32>
    %5 = arith.addf %2, %4 : vector<256x128xf32>
    %cst_5 = arith.constant 0.000000e+00 : f32
    %6 = vector.broadcast %cst_5 : f32 to vector<256x128xf32>
    %7 = arith.maximumf %5, %6 : vector<256x128xf32>
    %c0_6 = arith.constant 0 : index
    %c0_7 = arith.constant 0 : index
    %c0_8 = arith.constant 0 : index
    %8 = vector.load %arg4[%c0_6, %c0_7, %c0_8] : memref<1x1x128xf32, #tpu.memory_space<vmem>>, vector<1x1x128xf32>
    %9 = vector.shape_cast %8 : vector<1x1x128xf32> to vector<1x128xf32>
    %10 = vector.broadcast %9 : vector<1x128xf32> to vector<256x128xf32>
    %11 = arith.addf %7, %10 : vector<256x128xf32>
    %12 = arith.truncf %11 : vector<256x128xf32> to vector<256x128xbf16>
    %c0_9 = arith.constant 0 : index
    %c0_10 = arith.constant 0 : index
    %13 = vector.load %arg5[%c0_9, %c0_10] : memref<256x128xbf16, #tpu.memory_space<vmem>>, vector<256x128xbf16>
    tpu.vector_store %arg5[%c0_9, %c0_10], %12 {strides = array<i32>} : memref<256x128xbf16, #tpu.memory_space<vmem>>, vector<256x128xbf16>,
    return
  }
  func.func @transform_0(%arg0: i32) -> (i32, i32) {
    %c0_i32 = arith.constant 0 : i32
    %c0_i32_0 = arith.constant 0 : i32
    return %arg0, %c0_i32 : i32, i32
  }
  func.func @transform_1(%arg0: i32) -> (i32, i32) {
    %c0_i32 = arith.constant 0 : i32
    %c0_i32_0 = arith.constant 0 : i32
    %c0_i32_1 = arith.constant 0 : i32
    return %c0_i32, %c0_i32_0 : i32, i32
  }
  func.func @transform_2(%arg0: i32) -> (i32, i32) {
    %c0_i32 = arith.constant 0 : i32
    %c0_i32_0 = arith.constant 0 : i32
    %c0_i32_1 = arith.constant 0 : i32
    return %c0_i32, %c0_i32_0 : i32, i32
  }
  func.func @transform_3(%arg0: i32) -> (i32, i32, i32) {
    %c0_i32 = arith.constant 0 : i32
    %c0_i32_0 = arith.constant 0 : i32
    %c0_i32_1 = arith.constant 0 : i32
    return %arg0, %c0_i32, %c0_i32_0 : i32, i32, i32
  }
  func.func @transform_4(%arg0: i32) -> (i32, i32) {
    %c0_i32 = arith.constant 0 : i32
    %c0_i32_0 = arith.constant 0 : i32
    return %arg0, %c0_i32 : i32, i32
  }
}

module attributes {stable_mosaic.version = 11 : i64} {
  func.func @_spade_out_kernel(%arg0: i32, %arg1: memref<256x1152xbf16, #tpu.memory_space<vmem>>, %arg2: memref<1152x128xbf16, #tpu.memory_space<vmem>>, %arg3: memref<1152x128xbf16, #tpu.memory_space<vmem>>, %arg4: memref<256x128xf32, #tpu.memory_space<vmem>>, %arg5: memref<1x1x128xf32, #tpu.memory_space<vmem>>, %arg6: memref<1x1x128xf32, #tpu.memory_space<vmem>>, %arg7: memref<256x128xf32, #tpu.memory_space<vmem>>) attributes {dimension_semantics = [#tpu.dimension_semantics<parallel>], iteration_bounds = array<i64: 2>, scalar_prefetch = 0 : i64, scratch_operands = 0 : i64, tpu.core_type = #tpu.core_type<tc>, window_params = [{transform_indices = @transform_0, window_bounds = array<i64: 256, 1152>}, {pipeline_mode = #tpu.pipeline_mode<synchronous>, transform_indices = @transform_1, window_bounds = array<i64: 1152, 128>}, {pipeline_mode = #tpu.pipeline_mode<synchronous>, transform_indices = @transform_2, window_bounds = array<i64: 1152, 128>}, {transform_indices = @transform_3, window_bounds = array<i64: 256, 128>}, {transform_indices = @transform_4, window_bounds = array<i64: 1, 1, 128>}, {transform_indices = @transform_5, window_bounds = array<i64: 1, 1, 128>}, {transform_indices = @transform_6, window_bounds = array<i64: 256, 128>}]} {
    %c0 = arith.constant 0 : index
    %c0_0 = arith.constant 0 : index
    %0 = vector.load %arg1[%c0, %c0_0] : memref<256x1152xbf16, #tpu.memory_space<vmem>>, vector<256x1152xbf16>
    %c0_1 = arith.constant 0 : index
    %c0_2 = arith.constant 0 : index
    %1 = vector.load %arg2[%c0_1, %c0_2] : memref<1152x128xbf16, #tpu.memory_space<vmem>>, vector<1152x128xbf16>
    %cst = arith.constant dense<0.000000e+00> : vector<256x128xf32>
    %2 = tpu.matmul %0, %1, %cst {dimension_numbers = #tpu.dot_dimension_numbers<[1], [0], [0], [1], [0, 0, 1, 1], [], []>} : vector<256x1152xbf16>, vector<1152x128xbf16>, vector<256x128xf32> -> vector<256x128xf32>
    %c0_3 = arith.constant 0 : index
    %c0_4 = arith.constant 0 : index
    %c0_5 = arith.constant 0 : index
    %3 = vector.load %arg5[%c0_3, %c0_4, %c0_5] : memref<1x1x128xf32, #tpu.memory_space<vmem>>, vector<1x1x128xf32>
    %4 = vector.shape_cast %3 : vector<1x1x128xf32> to vector<1x128xf32>
    %5 = vector.broadcast %4 : vector<1x128xf32> to vector<256x128xf32>
    %6 = arith.addf %2, %5 : vector<256x128xf32>
    %c0_6 = arith.constant 0 : index
    %c0_7 = arith.constant 0 : index
    %7 = vector.load %arg1[%c0_6, %c0_7] : memref<256x1152xbf16, #tpu.memory_space<vmem>>, vector<256x1152xbf16>
    %c0_8 = arith.constant 0 : index
    %c0_9 = arith.constant 0 : index
    %8 = vector.load %arg3[%c0_8, %c0_9] : memref<1152x128xbf16, #tpu.memory_space<vmem>>, vector<1152x128xbf16>
    %cst_10 = arith.constant dense<0.000000e+00> : vector<256x128xf32>
    %9 = tpu.matmul %7, %8, %cst_10 {dimension_numbers = #tpu.dot_dimension_numbers<[1], [0], [0], [1], [0, 0, 1, 1], [], []>} : vector<256x1152xbf16>, vector<1152x128xbf16>, vector<256x128xf32> -> vector<256x128xf32>
    %c0_11 = arith.constant 0 : index
    %c0_12 = arith.constant 0 : index
    %c0_13 = arith.constant 0 : index
    %10 = vector.load %arg6[%c0_11, %c0_12, %c0_13] : memref<1x1x128xf32, #tpu.memory_space<vmem>>, vector<1x1x128xf32>
    %11 = vector.shape_cast %10 : vector<1x1x128xf32> to vector<1x128xf32>
    %12 = vector.broadcast %11 : vector<1x128xf32> to vector<256x128xf32>
    %13 = arith.addf %9, %12 : vector<256x128xf32>
    %c0_14 = arith.constant 0 : index
    %c0_15 = arith.constant 0 : index
    %14 = vector.load %arg4[%c0_14, %c0_15] : memref<256x128xf32, #tpu.memory_space<vmem>>, vector<256x128xf32>
    %cst_16 = arith.constant 1.000000e+00 : f32
    %15 = vector.broadcast %cst_16 : f32 to vector<256x128xf32>
    %16 = arith.addf %15, %6 : vector<256x128xf32>
    %17 = arith.mulf %14, %16 : vector<256x128xf32>
    %18 = arith.addf %17, %13 : vector<256x128xf32>
    %c0_17 = arith.constant 0 : index
    %c0_18 = arith.constant 0 : index
    %19 = vector.load %arg7[%c0_17, %c0_18] : memref<256x128xf32, #tpu.memory_space<vmem>>, vector<256x128xf32>
    tpu.vector_store %arg7[%c0_17, %c0_18], %18 {strides = array<i32>} : memref<256x128xf32, #tpu.memory_space<vmem>>, vector<256x128xf32>,
    return
  }
  func.func @transform_0(%arg0: i32) -> (i32, i32) {
    %c0_i32 = arith.constant 0 : i32
    %c0_i32_0 = arith.constant 0 : i32
    return %arg0, %c0_i32 : i32, i32
  }
  func.func @transform_1(%arg0: i32) -> (i32, i32) {
    %c0_i32 = arith.constant 0 : i32
    %c0_i32_0 = arith.constant 0 : i32
    %c0_i32_1 = arith.constant 0 : i32
    return %c0_i32, %c0_i32_0 : i32, i32
  }
  func.func @transform_2(%arg0: i32) -> (i32, i32) {
    %c0_i32 = arith.constant 0 : i32
    %c0_i32_0 = arith.constant 0 : i32
    %c0_i32_1 = arith.constant 0 : i32
    return %c0_i32, %c0_i32_0 : i32, i32
  }
  func.func @transform_3(%arg0: i32) -> (i32, i32) {
    %c0_i32 = arith.constant 0 : i32
    %c0_i32_0 = arith.constant 0 : i32
    return %arg0, %c0_i32 : i32, i32
  }
  func.func @transform_4(%arg0: i32) -> (i32, i32, i32) {
    %c0_i32 = arith.constant 0 : i32
    %c0_i32_0 = arith.constant 0 : i32
    %c0_i32_1 = arith.constant 0 : i32
    return %arg0, %c0_i32, %c0_i32_0 : i32, i32, i32
  }
  func.func @transform_5(%arg0: i32) -> (i32, i32, i32) {
    %c0_i32 = arith.constant 0 : i32
    %c0_i32_0 = arith.constant 0 : i32
    %c0_i32_1 = arith.constant 0 : i32
    return %arg0, %c0_i32, %c0_i32_0 : i32, i32, i32
  }
  func.func @transform_6(%arg0: i32) -> (i32, i32) {
    %c0_i32 = arith.constant 0 : i32
    %c0_i32_0 = arith.constant 0 : i32
    return %arg0, %c0_i32 : i32, i32
  }
}

</mosaic_0001>

<llo_original>
// kernel: spade_forward.3
$region0: #{spade_forward.3}
  #allocation0 [shape = 'u32[]', space=smem, size = 0x4, offset = 0x4, fixed_abs, tag = 'smem constant byte address 0x4 - core index']
  #allocation1 [shape = 'u32[72,128]{1,0:T(1,128)}', space=vmem, size = 0x9000, scoped, tag = 'internal scratch']
  %s0 = inlined_call_operand.vmem [shape: f32[2,256,3], index: 0, kind: input, shape index: {}]
  %s1 = inlined_call_operand.vmem [shape: f32[2,256,3], index: 1, kind: output, shape index: {}]
  %s2 = sld [smem:[#allocation0]]
  $region37: #{spade_forward.3} parent=0
    _
  %s4 = ssub.s32 1, %s2
  %s5 = scalar_select 0, %s4, %s2
  loop: start=0, step=1, limit=4
  $region2: #{spade_forward.3} parent=0 // loop_pre_header
    _
  $region3: #{spade_forward.3} parent=0 // loop_header
    %s7 = sphi 0, %s11
    %p8 = scmp.ge.s32.totalorder %s7, 4
    %s17 = sphi 0, %s19
    %s20 = sphi 0, %s17
    %s21 = sphi 0, %s20
    %s37 = sphi 0, %s21
    %s43 = sphi 0, %s45
    %s46 = sphi 0, %s43
    %s47 = sphi 0, %s46
    %s63 = sphi 0, %s47
  $region4: #{spade_forward.3} parent=0 // loop_header_branch
    %10 = sbr.rel (%p8) target = $region8
  $region5: #{spade_forward.3} parent=0 // loop_body
    %s12 = ssub.s32 %s7, 1
    %s13 = ssub.s32 %s7, 2
    %s14 = sadd.s32 %s7, 1
    %s15 = ssub.s32 %s7, %s14
    %p16 = scmp.eq.s32.totalorder %s15, 0
    %s18 = sadd.s32 %s17, 1
    %s19 = scalar_select %p16, %s17, %s18
    %p22 = pneg %p16
    %p23 = scmp.eq.s32.totalorder %s7, 1
    %p24 = por %p22, %p23
    %p25 = scmp.ne.s32.totalorder %s17, %s20
    %p26 = scmp.eq.s32.totalorder %s7, 0
    %p27 = por %p25, %p26
    %p28 = scmp.ne.s32.totalorder %s17, %s20
    %p29 = scmp.eq.s32.totalorder %s12, 1
    %p30 = por %p28, %p29
    %p31 = scmp.ne.s32.totalorder %s20, %s21
    %p32 = scmp.eq.s32.totalorder %s12, 0
    %p33 = por %p31, %p32
    %p34 = scmp.ne.s32.totalorder %s20, %s21
    %p35 = scmp.eq.s32.totalorder %s13, 1
    %p36 = por %p34, %p35
    %p38 = scmp.ne.s32.totalorder %s21, %s37
    %p39 = scmp.eq.s32.totalorder %s13, 0
    %p40 = por %p38, %p39
    %s41 = ssub.s32 %s7, %s14
    %p42 = scmp.eq.s32.totalorder %s41, 0
    %s44 = sadd.s32 %s43, 1
    %s45 = scalar_select %p42, %s43, %s44
    %p48 = pneg %p42
    %p49 = scmp.eq.s32.totalorder %s7, 1
    %p50 = por %p48, %p49
    %p51 = scmp.ne.s32.totalorder %s43, %s46
    %p52 = scmp.eq.s32.totalorder %s7, 0
    %p53 = por %p51, %p52
    %p54 = scmp.ne.s32.totalorder %s43, %s46
    %p55 = scmp.eq.s32.totalorder %s12, 1
    %p56 = por %p54, %p55
    %p57 = scmp.ne.s32.totalorder %s46, %s47
    %p58 = scmp.eq.s32.totalorder %s12, 0
    %p59 = por %p57, %p58
    %p60 = scmp.ne.s32.totalorder %s46, %s47
    %p61 = scmp.eq.s32.totalorder %s13, 1
    %p62 = por %p60, %p61
    %p64 = scmp.ne.s32.totalorder %s47, %s63
    %p65 = scmp.eq.s32.totalorder %s13, 0
    %p66 = por %p64, %p65
    %p67 = scmp.le.s32.totalorder 1, %s7
    %p68 = scmp.lt.s32.totalorder %s7, 3
    %p69 = pnand %p67, %p68
    %p70 = pneg %p69
    // Predicated region
    $region9: #{spade_forward.3} parent=5 // pred_check
      _
    $region10: #{spade_forward.3} parent=5 // pred_check_branch
      %72 = sbr.rel (%p69) target = $region12
    $region11: #{spade_forward.3} parent=5 // pred_region
      %s73 = ssub.s32 %s7, 1
    $region12: #{spade_forward.3} parent=5 // pred_fallthru
      _
    %p74 = scmp.lt.s32.totalorder %s7, 2
    // Predicated region
    $region13: #{spade_forward.3} parent=5 // pred_check
      %p75 = pneg %p74
    $region14: #{spade_forward.3} parent=5 // pred_check_branch
      %77 = sbr.rel (%p75) target = $region16
    $region15: #{spade_forward.3} parent=5 // pred_region
      // Predicated region
      $region17: #{spade_forward.3} parent=15 // pred_check
        %p78 = pneg %p27
      $region18: #{spade_forward.3} parent=15 // pred_check_branch
        %80 = sbr.rel (%p78) target = $region20
      $region19: #{spade_forward.3} parent=15 // pred_region
        %p81 = scmp.lt.s32.totalorder %s7, 1
        %s82 = scalar_select %p81, %s7, 1
        %s83 = smul.addr %s82, 32
        %s84 = smul.addr %s83, 8
        %s85 = scalar_lea.vmem %s0, %s84
      $region20: #{spade_forward.3} parent=15 // pred_fallthru
        _
    $region16: #{spade_forward.3} parent=5 // pred_fallthru
      _
    %p86 = scmp.le.s32.totalorder 1, %s7
    %p87 = scmp.lt.s32.totalorder %s7, 3
    %p88 = pnand %p86, %p87
    %p89 = pneg %p88
    // Predicated region
    $region21: #{spade_forward.3} parent=5 // pred_check
      _
    $region22: #{spade_forward.3} parent=5 // pred_check_branch
      %91 = sbr.rel (%p88) target = $region24
    $region23: #{spade_forward.3} parent=5 // pred_region
      %s92 = ssub.s32 %s7, 1
      %p93 = scmp.lt.s32.totalorder %s12, 1
      %s94 = scalar_select %p93, %s12, 1
      %s95 = smul.addr %s94, 32
      %s96 = smul.addr %s95, 8
      %s97 = scalar_lea.vmem %s0, %s96
      %p98 = pneg %p33
      %p99 = pneg %p30
      %p100 = pneg %p59
      %p101 = pneg %p56
      %p102 = scmp.lt.s32.totalorder %s12, 1
      %s103 = scalar_select %p102, %s12, 1
      %s104 = smul.addr %s103, 32
      %s105 = smul.addr %s104, 8
      %s106 = scalar_lea.vmem %s1, %s105
      %p107 = scmp.lt.s32.totalorder %s12, 1
      %s108 = scalar_select %p107, %s12, 1
      %s109 = smul.addr %s108, 32
      %s110 = smul.addr %s109, 8
      %s111 = scalar_lea.vmem %s0, %s110
      %p112 = scmp.lt.s32.totalorder %s12, 1
      %s113 = scalar_select %p112, %s12, 1
      %s114 = smul.addr %s113, 32
      %s115 = smul.addr %s114, 8
      %s116 = scalar_lea.vmem %s1, %s115
      %v117 = vld [vmem:[%s111] sm:$0xff]
      %v118 = vld [vmem:[%s111 + $0x8] sm:$0xff]
      %v119 = vld [vmem:[%s111 + $0x10] sm:$0xff]
      %v120 = vld [vmem:[%s111 + $0x18] sm:$0xff]
      %v121 = vld [vmem:[%s111 + $0x20] sm:$0xff]
      %v122 = vld [vmem:[%s111 + $0x28] sm:$0xff]
      %v123 = vld [vmem:[%s111 + $0x30] sm:$0xff]
      %v124 = vld [vmem:[%s111 + $0x38] sm:$0xff]
      %v125 = vld [vmem:[%s111 + $0x40] sm:$0xff]
      %v126 = vld [vmem:[%s111 + $0x48] sm:$0xff]
      %v127 = vld [vmem:[%s111 + $0x50] sm:$0xff]
      %v128 = vld [vmem:[%s111 + $0x58] sm:$0xff]
      %v129 = vld [vmem:[%s111 + $0x60] sm:$0xff]
      %v130 = vld [vmem:[%s111 + $0x68] sm:$0xff]
      %v131 = vld [vmem:[%s111 + $0x70] sm:$0xff]
      %v132 = vld [vmem:[%s111 + $0x78] sm:$0xff]
      %v133 = vld [vmem:[%s111 + $0x80] sm:$0xff]
      %v134 = vld [vmem:[%s111 + $0x88] sm:$0xff]
      %v135 = vld [vmem:[%s111 + $0x90] sm:$0xff]
      %v136 = vld [vmem:[%s111 + $0x98] sm:$0xff]
      %v137 = vld [vmem:[%s111 + $0xa0] sm:$0xff]
      %v138 = vld [vmem:[%s111 + $0xa8] sm:$0xff]
      %v139 = vld [vmem:[%s111 + $0xb0] sm:$0xff]
      %v140 = vld [vmem:[%s111 + $0xb8] sm:$0xff]
      %v141 = vld [vmem:[%s111 + $0xc0] sm:$0xff]
      %v142 = vld [vmem:[%s111 + $0xc8] sm:$0xff]
      %v143 = vld [vmem:[%s111 + $0xd0] sm:$0xff]
      %v144 = vld [vmem:[%s111 + $0xd8] sm:$0xff]
      %v145 = vld [vmem:[%s111 + $0xe0] sm:$0xff]
      %v146 = vld [vmem:[%s111 + $0xe8] sm:$0xff]
      %v147 = vld [vmem:[%s111 + $0xf0] sm:$0xff]
      %v148 = vld [vmem:[%s111 + $0xf8] sm:$0xff]
      %vm149 = vcmask 23552
      %v150 = vsel %vm149, %v117, 0.0
      %v151 = vsel %vm149, %v118, 0.0
      %v152 = vadd.f32 %v150, %v151
      %v153 = vsel %vm149, %v119, 0.0
      %v154 = vadd.f32 %v152, %v153
      %v155 = vsel %vm149, %v120, 0.0
      %v156 = vadd.f32 %v154, %v155
      %v157 = vsel %vm149, %v121, 0.0
      %v158 = vadd.f32 %v156, %v157
      %v159 = vsel %vm149, %v122, 0.0
      %v160 = vadd.f32 %v158, %v159
      %v161 = vsel %vm149, %v123, 0.0
      %v162 = vadd.f32 %v160, %v161
      %v163 = vsel %vm149, %v124, 0.0
      %v164 = vadd.f32 %v162, %v163
      %v165 = vsel %vm149, %v125, 0.0
      %v166 = vadd.f32 %v164, %v165
      %v167 = vsel %vm149, %v126, 0.0
      %v168 = vadd.f32 %v166, %v167
      %v169 = vsel %vm149, %v127, 0.0
      %v170 = vadd.f32 %v168, %v169
      %v171 = vsel %vm149, %v128, 0.0
      %v172 = vadd.f32 %v170, %v171
      %v173 = vsel %vm149, %v129, 0.0
      %v174 = vadd.f32 %v172, %v173
      %v175 = vsel %vm149, %v130, 0.0
      %v176 = vadd.f32 %v174, %v175
      %v177 = vsel %vm149, %v131, 0.0
      %v178 = vadd.f32 %v176, %v177
      %v179 = vsel %vm149, %v132, 0.0
      %v180 = vadd.f32 %v178, %v179
      %v181 = vsel %vm149, %v133, 0.0
      %v182 = vadd.f32 %v180, %v181
      %v183 = vsel %vm149, %v134, 0.0
      %v184 = vadd.f32 %v182, %v183
      %v185 = vsel %vm149, %v135, 0.0
      %v186 = vadd.f32 %v184, %v185
      %v187 = vsel %vm149, %v136, 0.0
      %v188 = vadd.f32 %v186, %v187
      %v189 = vsel %vm149, %v137, 0.0
      %v190 = vadd.f32 %v188, %v189
      %v191 = vsel %vm149, %v138, 0.0
      %v192 = vadd.f32 %v190, %v191
      %v193 = vsel %vm149, %v139, 0.0
      %v194 = vadd.f32 %v192, %v193
      %v195 = vsel %vm149, %v140, 0.0
      %v196 = vadd.f32 %v194, %v195
      %v197 = vsel %vm149, %v141, 0.0
      %v198 = vadd.f32 %v196, %v197
      %v199 = vsel %vm149, %v142, 0.0
      %v200 = vadd.f32 %v198, %v199
      %v201 = vsel %vm149, %v143, 0.0
      %v202 = vadd.f32 %v200, %v201
      %v203 = vsel %vm149, %v144, 0.0
      %v204 = vadd.f32 %v202, %v203
      %v205 = vsel %vm149, %v145, 0.0
      %v206 = vadd.f32 %v204, %v205
      %v207 = vsel %vm149, %v146, 0.0
      %v208 = vadd.f32 %v206, %v207
      %v209 = vsel %vm149, %v147, 0.0
      %v210 = vadd.f32 %v208, %v209
      %v211 = vsel %vm149, %v148, 0.0
      %v212 = vadd.f32 %v210, %v211
      %v213 = vrot.slane %v212, 4
      %v214 = vadd.f32 %v212, %v213
      %v215 = vrot.slane %v214, 2
      %v216 = vadd.f32 %v214, %v215
      %v217 = vrot.slane %v216, 1
      %v218 = vadd.f32 %v216, %v217
      %v219 = vrcp.pop 256.0
      %v220 = vmul.f32 256.0, %v219
      %v221 = vsub.f32 1.0, %v220
      %v222 = vmul.f32 %v219, %v221
      %v223 = vadd.f32 %v219, %v222
      %vm224 = vweird.f32 %v219
      %v225 = vsel %vm224, %v219, %v223
      %v226 = vmul.f32 %v218, %v225
      %v227 = vsub.f32 %v117, %v226
      %v228 = vsub.f32 %v118, %v226
      %v229 = vsub.f32 %v119, %v226
      %v230 = vsub.f32 %v120, %v226
      %v231 = vsub.f32 %v121, %v226
      %v232 = vsub.f32 %v122, %v226
      %v233 = vsub.f32 %v123, %v226
      %v234 = vsub.f32 %v124, %v226
      %v235 = vsub.f32 %v125, %v226
      %v236 = vsub.f32 %v126, %v226
      %v237 = vsub.f32 %v127, %v226
      %v238 = vsub.f32 %v128, %v226
      %v239 = vsub.f32 %v129, %v226
      %v240 = vsub.f32 %v130, %v226
      %v241 = vsub.f32 %v131, %v226
      %v242 = vsub.f32 %v132, %v226
      %v243 = vsub.f32 %v133, %v226
      %v244 = vsub.f32 %v134, %v226
      %v245 = vsub.f32 %v135, %v226
      %v246 = vsub.f32 %v136, %v226
      %v247 = vsub.f32 %v137, %v226
      %v248 = vsub.f32 %v138, %v226
      %v249 = vsub.f32 %v139, %v226
      %v250 = vsub.f32 %v140, %v226
      %v251 = vsub.f32 %v141, %v226
      %v252 = vsub.f32 %v142, %v226
      %v253 = vsub.f32 %v143, %v226
      %v254 = vsub.f32 %v144, %v226
      %v255 = vsub.f32 %v145, %v226
      %v256 = vsub.f32 %v146, %v226
      %v257 = vsub.f32 %v147, %v226
      %v258 = vsub.f32 %v148, %v226
      %v259 = vmul.f32 %v227, %v227
      %v260 = vmul.f32 %v228, %v228
      %v261 = vmul.f32 %v229, %v229
      %v262 = vmul.f32 %v230, %v230
      %v263 = vmul.f32 %v231, %v231
      %v264 = vmul.f32 %v232, %v232
      %v265 = vmul.f32 %v233, %v233
      %v266 = vmul.f32 %v234, %v234
      %v267 = vmul.f32 %v235, %v235
      %v268 = vmul.f32 %v236, %v236
      %v269 = vmul.f32 %v237, %v237
      %v270 = vmul.f32 %v238, %v238
      %v271 = vmul.f32 %v239, %v239
      %v272 = vmul.f32 %v240, %v240
      %v273 = vmul.f32 %v241, %v241
      %v274 = vmul.f32 %v242, %v242
      %v275 = vmul.f32 %v243, %v243
      %v276 = vmul.f32 %v244, %v244
      %v277 = vmul.f32 %v245, %v245
      %v278 = vmul.f32 %v246, %v246
      %v279 = vmul.f32 %v247, %v247
      %v280 = vmul.f32 %v248, %v248
      %v281 = vmul.f32 %v249, %v249
      %v282 = vmul.f32 %v250, %v250
      %v283 = vmul.f32 %v251, %v251
      %v284 = vmul.f32 %v252, %v252
      %v285 = vmul.f32 %v253, %v253
      %v286 = vmul.f32 %v254, %v254
      %v287 = vmul.f32 %v255, %v255
      %v288 = vmul.f32 %v256, %v256
      %v289 = vmul.f32 %v257, %v257
      %v290 = vmul.f32 %v258, %v258
      %v291 = vsel %vm149, %v259, 0.0
      %v292 = vsel %vm149, %v260, 0.0
      %v293 = vadd.f32 %v291, %v292
      %v294 = vsel %vm149, %v261, 0.0
      %v295 = vadd.f32 %v293, %v294
      %v296 = vsel %vm149, %v262, 0.0
      %v297 = vadd.f32 %v295, %v296
      %v298 = vsel %vm149, %v263, 0.0
      %v299 = vadd.f32 %v297, %v298
      %v300 = vsel %vm149, %v264, 0.0
      %v301 = vadd.f32 %v299, %v300
      %v302 = vsel %vm149, %v265, 0.0
      %v303 = vadd.f32 %v301, %v302
      %v304 = vsel %vm149, %v266, 0.0
      %v305 = vadd.f32 %v303, %v304
      %v306 = vsel %vm149, %v267, 0.0
      %v307 = vadd.f32 %v305, %v306
      %v308 = vsel %vm149, %v268, 0.0
      %v309 = vadd.f32 %v307, %v308
      %v310 = vsel %vm149, %v269, 0.0
      %v311 = vadd.f32 %v309, %v310
      %v312 = vsel %vm149, %v270, 0.0
      %v313 = vadd.f32 %v311, %v312
      %v314 = vsel %vm149, %v271, 0.0
      %v315 = vadd.f32 %v313, %v314
      %v316 = vsel %vm149, %v272, 0.0
      %v317 = vadd.f32 %v315, %v316
      %v318 = vsel %vm149, %v273, 0.0
      %v319 = vadd.f32 %v317, %v318
      %v320 = vsel %vm149, %v274, 0.0
      %v321 = vadd.f32 %v319, %v320
      %v322 = vsel %vm149, %v275, 0.0
      %v323 = vadd.f32 %v321, %v322
      %v324 = vsel %vm149, %v276, 0.0
      %v325 = vadd.f32 %v323, %v324
      %v326 = vsel %vm149, %v277, 0.0
      %v327 = vadd.f32 %v325, %v326
      %v328 = vsel %vm149, %v278, 0.0
      %v329 = vadd.f32 %v327, %v328
      %v330 = vsel %vm149, %v279, 0.0
      %v331 = vadd.f32 %v329, %v330
      %v332 = vsel %vm149, %v280, 0.0
      %v333 = vadd.f32 %v331, %v332
      %v334 = vsel %vm149, %v281, 0.0
      %v335 = vadd.f32 %v333, %v334
      %v336 = vsel %vm149, %v282, 0.0
      %v337 = vadd.f32 %v335, %v336
      %v338 = vsel %vm149, %v283, 0.0
      %v339 = vadd.f32 %v337, %v338
      %v340 = vsel %vm149, %v284, 0.0
      %v341 = vadd.f32 %v339, %v340
      %v342 = vsel %vm149, %v285, 0.0
      %v343 = vadd.f32 %v341, %v342
      %v344 = vsel %vm149, %v286, 0.0
      %v345 = vadd.f32 %v343, %v344
      %v346 = vsel %vm149, %v287, 0.0
      %v347 = vadd.f32 %v345, %v346
      %v348 = vsel %vm149, %v288, 0.0
      %v349 = vadd.f32 %v347, %v348
      %v350 = vsel %vm149, %v289, 0.0
      %v351 = vadd.f32 %v349, %v350
      %v352 = vsel %vm149, %v290, 0.0
      %v353 = vadd.f32 %v351, %v352
      %v354 = vrot.slane %v353, 4
      %v355 = vadd.f32 %v353, %v354
      %v356 = vrot.slane %v355, 2
      %v357 = vadd.f32 %v355, %v356
      %v358 = vrot.slane %v357, 1
      %v359 = vadd.f32 %v357, %v358
      %v360 = vmul.f32 %v359, %v225
      %v361 = vadd.f32 %v360, 1e-05
      %v362 = vrsqrt.pop %v361
      %v363 = vmul.f32 %v362, %v361
      %v364 = vmul.f32 %v363, %v362
      %v365 = vmul.f32 0.5, %v364
      %v366 = vsub.f32 1.5, %v365
      %v367 = vmul.f32 %v362, %v366
      %vm368 = vweird.f32 %v361
      %vm369 = vweird.f32 %v362
      %vm370 = vmor %vm368, %vm369
      %v371 = vsel %vm370, %v362, %v367
      %v372 = vmul.f32 %v227, %v371
      %v373 = vmul.f32 %v228, %v371
      %v374 = vmul.f32 %v229, %v371
      %v375 = vmul.f32 %v230, %v371
      %v376 = vmul.f32 %v231, %v371
      %v377 = vmul.f32 %v232, %v371
      %v378 = vmul.f32 %v233, %v371
      %v379 = vmul.f32 %v234, %v371
      %v380 = vmul.f32 %v235, %v371
      %v381 = vmul.f32 %v236, %v371
      %v382 = vmul.f32 %v237, %v371
      %v383 = vmul.f32 %v238, %v371
      %v384 = vmul.f32 %v239, %v371
      %v385 = vmul.f32 %v240, %v371
      %v386 = vmul.f32 %v241, %v371
      %v387 = vmul.f32 %v242, %v371
      %v388 = vmul.f32 %v243, %v371
      %v389 = vmul.f32 %v244, %v371
      %v390 = vmul.f32 %v245, %v371
      %v391 = vmul.f32 %v246, %v371
      %v392 = vmul.f32 %v247, %v371
      %v393 = vmul.f32 %v248, %v371
      %v394 = vmul.f32 %v249, %v371
      %v395 = vmul.f32 %v250, %v371
      %v396 = vmul.f32 %v251, %v371
      %v397 = vmul.f32 %v252, %v371
      %v398 = vmul.f32 %v253, %v371
      %v399 = vmul.f32 %v254, %v371
      %v400 = vmul.f32 %v255, %v371
      %v401 = vmul.f32 %v256, %v371
      %v402 = vmul.f32 %v257, %v371
      %v403 = vmul.f32 %v258, %v371
      %404 = vst.msk [vmem:[%s116] sm:$0xff] %vm149, %v372
      %405 = vst.msk [vmem:[%s116 + $0x8] sm:$0xff] %vm149, %v373
      %406 = vst.msk [vmem:[%s116 + $0x10] sm:$0xff] %vm149, %v374
      %407 = vst.msk [vmem:[%s116 + $0x18] sm:$0xff] %vm149, %v375
      %408 = vst.msk [vmem:[%s116 + $0x20] sm:$0xff] %vm149, %v376
      %409 = vst.msk [vmem:[%s116 + $0x28] sm:$0xff] %vm149, %v377
      %410 = vst.msk [vmem:[%s116 + $0x30] sm:$0xff] %vm149, %v378
      %411 = vst.msk [vmem:[%s116 + $0x38] sm:$0xff] %vm149, %v379
      %412 = vst.msk [vmem:[%s116 + $0x40] sm:$0xff] %vm149, %v380
      %413 = vst.msk [vmem:[%s116 + $0x48] sm:$0xff] %vm149, %v381
      %414 = vst.msk [vmem:[%s116 + $0x50] sm:$0xff] %vm149, %v382
      %415 = vst.msk [vmem:[%s116 + $0x58] sm:$0xff] %vm149, %v383
      %416 = vst.msk [vmem:[%s116 + $0x60] sm:$0xff] %vm149, %v384
      %417 = vst.msk [vmem:[%s116 + $0x68] sm:$0xff] %vm149, %v385
      %418 = vst.msk [vmem:[%s116 + $0x70] sm:$0xff] %vm149, %v386
      %419 = vst.msk [vmem:[%s116 + $0x78] sm:$0xff] %vm149, %v387
      %420 = vst.msk [vmem:[%s116 + $0x80] sm:$0xff] %vm149, %v388
      %421 = vst.msk [vmem:[%s116 + $0x88] sm:$0xff] %vm149, %v389
      %422 = vst.msk [vmem:[%s116 + $0x90] sm:$0xff] %vm149, %v390
      %423 = vst.msk [vmem:[%s116 + $0x98] sm:$0xff] %vm149, %v391
      %424 = vst.msk [vmem:[%s116 + $0xa0] sm:$0xff] %vm149, %v392
      %425 = vst.msk [vmem:[%s116 + $0xa8] sm:$0xff] %vm149, %v393
      %426 = vst.msk [vmem:[%s116 + $0xb0] sm:$0xff] %vm149, %v394
      %427 = vst.msk [vmem:[%s116 + $0xb8] sm:$0xff] %vm149, %v395
      %428 = vst.msk [vmem:[%s116 + $0xc0] sm:$0xff] %vm149, %v396
      %429 = vst.msk [vmem:[%s116 + $0xc8] sm:$0xff] %vm149, %v397
      %430 = vst.msk [vmem:[%s116 + $0xd0] sm:$0xff] %vm149, %v398
      %431 = vst.msk [vmem:[%s116 + $0xd8] sm:$0xff] %vm149, %v399
      %432 = vst.msk [vmem:[%s116 + $0xe0] sm:$0xff] %vm149, %v400
      %433 = vst.msk [vmem:[%s116 + $0xe8] sm:$0xff] %vm149, %v401
      %434 = vst.msk [vmem:[%s116 + $0xf0] sm:$0xff] %vm149, %v402
      %435 = vst.msk [vmem:[%s116 + $0xf8] sm:$0xff] %vm149, %v403
      %p436 = scmp.lt.s32.totalorder %s12, 1
      %s437 = scalar_select %p436, %s12, 1
      %s438 = smul.addr %s437, 32
      %s439 = smul.addr %s438, 8
      %s440 = scalar_lea.vmem %s1, %s439
      // Predicated region
      $region25: #{spade_forward.3} parent=23 // pred_check
        %p441 = pneg %p56
      $region26: #{spade_forward.3} parent=23 // pred_check_branch
        %443 = sbr.rel (%p441) target = $region28
      $region27: #{spade_forward.3} parent=23 // pred_region
        _
      $region28: #{spade_forward.3} parent=23 // pred_fallthru
        _
    $region24: #{spade_forward.3} parent=5 // pred_fallthru
      _
    %p444 = scmp.le.s32.totalorder 2, %s7
    // Predicated region
    $region29: #{spade_forward.3} parent=5 // pred_check
      %p445 = pneg %p444
    $region30: #{spade_forward.3} parent=5 // pred_check_branch
      %447 = sbr.rel (%p445) target = $region32
    $region31: #{spade_forward.3} parent=5 // pred_region
      %s448 = ssub.s32 %s7, 2
      // Predicated region
      $region33: #{spade_forward.3} parent=31 // pred_check
        %p449 = pneg %p62
      $region34: #{spade_forward.3} parent=31 // pred_check_branch
        %451 = sbr.rel (%p449) target = $region36
      $region35: #{spade_forward.3} parent=31 // pred_region
        %p452 = scmp.lt.s32.totalorder %s13, 1
        %s453 = scalar_select %p452, %s13, 1
        %s454 = smul.addr %s453, 32
        %s455 = smul.addr %s454, 8
        %s456 = scalar_lea.vmem %s1, %s455
      $region36: #{spade_forward.3} parent=31 // pred_fallthru
        _
    $region32: #{spade_forward.3} parent=5 // pred_fallthru
      _
  $region6: #{spade_forward.3} parent=0 // loop_footer
    %s11 = sadd.s32 1, %s7
  $region7: #{spade_forward.3} parent=0 // loop_footer_branch
    %6 = sbr.rel target = $region3
  $region8: #{spade_forward.3} parent=0 // loop_exit
    _

// kernel: spade_forward.4
$region0: #{spade_forward.4}
  #allocation0 [shape = 'u32[]', space=smem, size = 0x4, offset = 0x4, fixed_abs, tag = 'smem constant byte address 0x4 - core index']
  #allocation1 [shape = 'u32[72,128]{1,0:T(1,128)}', space=vmem, size = 0x9000, scoped, tag = 'internal scratch']
  %s0 = inlined_call_operand.vmem [shape: bf16[512,32], index: 0, kind: input, shape index: {}]
  %s1 = inlined_call_operand.vmem [shape: bf16[32,128], index: 1, kind: input, shape index: {}]
  %s2 = inlined_call_operand.vmem [shape: f32[1,128], index: 2, kind: input, shape index: {}]
  %s3 = inlined_call_operand.vmem [shape: f32[2,1,128], index: 3, kind: input, shape index: {}]
  %s4 = inlined_call_operand.vmem [shape: bf16[512,128], index: 4, kind: output, shape index: {}]
  %s5 = sld [smem:[#allocation0]]
  $region49: #{spade_forward.4} parent=0
    _
  %s7 = ssub.s32 1, %s5
  %s8 = scalar_select 0, %s7, %s5
  loop: start=0, step=1, limit=4
  $region2: #{spade_forward.4} parent=0 // loop_pre_header
    _
  $region3: #{spade_forward.4} parent=0 // loop_header
    %s10 = sphi 0, %s14
    %p11 = scmp.ge.s32.totalorder %s10, 4
    %s20 = sphi 0, %s22
    %s23 = sphi 0, %s20
    %s24 = sphi 0, %s23
    %s40 = sphi 0, %s24
    %s44 = sphi 0, %s44
    %s46 = sphi 0, %s44
    %s47 = sphi 0, %s46
    %s61 = sphi 0, %s47
    %s65 = sphi 0, %s65
    %s67 = sphi 0, %s65
    %s68 = sphi 0, %s67
    %s82 = sphi 0, %s68
    %s88 = sphi 0, %s90
    %s91 = sphi 0, %s88
    %s92 = sphi 0, %s91
    %s108 = sphi 0, %s92
    %s114 = sphi 0, %s116
    %s117 = sphi 0, %s114
    %s118 = sphi 0, %s117
    %s134 = sphi 0, %s118
  $region4: #{spade_forward.4} parent=0 // loop_header_branch
    %13 = sbr.rel (%p11) target = $region8
  $region5: #{spade_forward.4} parent=0 // loop_body
    %s15 = ssub.s32 %s10, 1
    %s16 = ssub.s32 %s10, 2
    %s17 = sadd.s32 %s10, 1
    %s18 = ssub.s32 %s10, %s17
    %p19 = scmp.eq.s32.totalorder %s18, 0
    %s21 = sadd.s32 %s20, 1
    %s22 = scalar_select %p19, %s20, %s21
    %p25 = pneg %p19
    %p26 = scmp.eq.s32.totalorder %s10, 1
    %p27 = por %p25, %p26
    %p28 = scmp.ne.s32.totalorder %s20, %s23
    %p29 = scmp.eq.s32.totalorder %s10, 0
    %p30 = por %p28, %p29
    %p31 = scmp.ne.s32.totalorder %s20, %s23
    %p32 = scmp.eq.s32.totalorder %s15, 1
    %p33 = por %p31, %p32
    %p34 = scmp.ne.s32.totalorder %s23, %s24
    %p35 = scmp.eq.s32.totalorder %s15, 0
    %p36 = por %p34, %p35
    %p37 = scmp.ne.s32.totalorder %s23, %s24
    %p38 = scmp.eq.s32.totalorder %s16, 1
    %p39 = por %p37, %p38
    %p41 = scmp.ne.s32.totalorder %s24, %s40
    %p42 = scmp.eq.s32.totalorder %s16, 0
    %p43 = por %p41, %p42
    %s45 = sadd.s32 %s44, 1
    %p48 = scmp.eq.s32.totalorder %s10, 1
    %p49 = scmp.ne.s32.totalorder %s44, %s46
    %p50 = scmp.eq.s32.totalorder %s10, 0
    %p51 = por %p49, %p50
    %p52 = scmp.ne.s32.totalorder %s44, %s46
    %p53 = scmp.eq.s32.totalorder %s15, 1
    %p54 = por %p52, %p53
    %p55 = scmp.ne.s32.totalorder %s46, %s47
    %p56 = scmp.eq.s32.totalorder %s15, 0
    %p57 = por %p55, %p56
    %p58 = scmp.ne.s32.totalorder %s46, %s47
    %p59 = scmp.eq.s32.totalorder %s16, 1
    %p60 = por %p58, %p59
    %p62 = scmp.ne.s32.totalorder %s47, %s61
    %p63 = scmp.eq.s32.totalorder %s16, 0
    %p64 = por %p62, %p63
    %s66 = sadd.s32 %s65, 1
    %p69 = scmp.eq.s32.totalorder %s10, 1
    %p70 = scmp.ne.s32.totalorder %s65, %s67
    %p71 = scmp.eq.s32.totalorder %s10, 0
    %p72 = por %p70, %p71
    %p73 = scmp.ne.s32.totalorder %s65, %s67
    %p74 = scmp.eq.s32.totalorder %s15, 1
    %p75 = por %p73, %p74
    %p76 = scmp.ne.s32.totalorder %s67, %s68
    %p77 = scmp.eq.s32.totalorder %s15, 0
    %p78 = por %p76, %p77
    %p79 = scmp.ne.s32.totalorder %s67, %s68
    %p80 = scmp.eq.s32.totalorder %s16, 1
    %p81 = por %p79, %p80
    %p83 = scmp.ne.s32.totalorder %s68, %s82
    %p84 = scmp.eq.s32.totalorder %s16, 0
    %p85 = por %p83, %p84
    %s86 = ssub.s32 %s10, %s17
    %p87 = scmp.eq.s32.totalorder %s86, 0
    %s89 = sadd.s32 %s88, 1
    %s90 = scalar_select %p87, %s88, %s89
    %p93 = pneg %p87
    %p94 = scmp.eq.s32.totalorder %s10, 1
    %p95 = por %p93, %p94
    %p96 = scmp.ne.s32.totalorder %s88, %s91
    %p97 = scmp.eq.s32.totalorder %s10, 0
    %p98 = por %p96, %p97
    %p99 = scmp.ne.s32.totalorder %s88, %s91
    %p100 = scmp.eq.s32.totalorder %s15, 1
    %p101 = por %p99, %p100
    %p102 = scmp.ne.s32.totalorder %s91, %s92
    %p103 = scmp.eq.s32.totalorder %s15, 0
    %p104 = por %p102, %p103
    %p105 = scmp.ne.s32.totalorder %s91, %s92
    %p106 = scmp.eq.s32.totalorder %s16, 1
    %p107 = por %p105, %p106
    %p109 = scmp.ne.s32.totalorder %s92, %s108
    %p110 = scmp.eq.s32.totalorder %s16, 0
    %p111 = por %p109, %p110
    %s112 = ssub.s32 %s10, %s17
    %p113 = scmp.eq.s32.totalorder %s112, 0
    %s115 = sadd.s32 %s114, 1
    %s116 = scalar_select %p113, %s114, %s115
    %p119 = pneg %p113
    %p120 = scmp.eq.s32.totalorder %s10, 1
    %p121 = por %p119, %p120
    %p122 = scmp.ne.s32.totalorder %s114, %s117
    %p123 = scmp.eq.s32.totalorder %s10, 0
    %p124 = por %p122, %p123
    %p125 = scmp.ne.s32.totalorder %s114, %s117
    %p126 = scmp.eq.s32.totalorder %s15, 1
    %p127 = por %p125, %p126
    %p128 = scmp.ne.s32.totalorder %s117, %s118
    %p129 = scmp.eq.s32.totalorder %s15, 0
    %p130 = por %p128, %p129
    %p131 = scmp.ne.s32.totalorder %s117, %s118
    %p132 = scmp.eq.s32.totalorder %s16, 1
    %p133 = por %p131, %p132
    %p135 = scmp.ne.s32.totalorder %s118, %s134
    %p136 = scmp.eq.s32.totalorder %s16, 0
    %p137 = por %p135, %p136
    %p138 = scmp.le.s32.totalorder 1, %s10
    %p139 = scmp.lt.s32.totalorder %s10, 3
    %p140 = pnand %p138, %p139
    %p141 = pneg %p140
    // Predicated region
    $region9: #{spade_forward.4} parent=5 // pred_check
      _
    $region10: #{spade_forward.4} parent=5 // pred_check_branch
      %143 = sbr.rel (%p140) target = $region12
    $region11: #{spade_forward.4} parent=5 // pred_region
      %s144 = ssub.s32 %s10, 1
      // Predicated region
      $region13: #{spade_forward.4} parent=11 // pred_check
        %p145 = pneg %p57
      $region14: #{spade_forward.4} parent=11 // pred_check_branch
        %147 = sbr.rel (%p145) target = $region16
      $region15: #{spade_forward.4} parent=11 // pred_region
        _
      $region16: #{spade_forward.4} parent=11 // pred_fallthru
        _
      // Predicated region
      $region17: #{spade_forward.4} parent=11 // pred_check
        %p148 = pneg %p78
      $region18: #{spade_forward.4} parent=11 // pred_check_branch
        %150 = sbr.rel (%p148) target = $region20
      $region19: #{spade_forward.4} parent=11 // pred_region
        _
      $region20: #{spade_forward.4} parent=11 // pred_fallthru
        _
    $region12: #{spade_forward.4} parent=5 // pred_fallthru
      _
    %p151 = scmp.lt.s32.totalorder %s10, 2
    // Predicated region
    $region21: #{spade_forward.4} parent=5 // pred_check
      %p152 = pneg %p151
    $region22: #{spade_forward.4} parent=5 // pred_check_branch
      %154 = sbr.rel (%p152) target = $region24
    $region23: #{spade_forward.4} parent=5 // pred_region
      // Predicated region
      $region25: #{spade_forward.4} parent=23 // pred_check
        %p155 = pneg %p30
      $region26: #{spade_forward.4} parent=23 // pred_check_branch
        %157 = sbr.rel (%p155) target = $region28
      $region27: #{spade_forward.4} parent=23 // pred_region
        %s158 = smul.u32 32, %s10
        %p159 = scmp.lt.s32.totalorder %s158, 63
        %s160 = scalar_select %p159, %s158, 63
        %s161 = smul.addr %s160, 4
        %s162 = scalar_lea.vmem %s0, %s161
        %s163 = smul.u32 32, %s10
      $region28: #{spade_forward.4} parent=23 // pred_fallthru
        _
      // Predicated region
      $region29: #{spade_forward.4} parent=23 // pred_check
        %p164 = pneg %p98
      $region30: #{spade_forward.4} parent=23 // pred_check_branch
        %166 = sbr.rel (%p164) target = $region32
      $region31: #{spade_forward.4} parent=23 // pred_region
        %p167 = scmp.lt.s32.totalorder %s10, 1
        %s168 = scalar_select %p167, %s10, 1
        %s169 = scalar_lea.vmem %s3, %s168
      $region32: #{spade_forward.4} parent=23 // pred_fallthru
        _
    $region24: #{spade_forward.4} parent=5 // pred_fallthru
      _
    %p170 = scmp.le.s32.totalorder 1, %s10
    %p171 = scmp.lt.s32.totalorder %s10, 3
    %p172 = pnand %p170, %p171
    %p173 = pneg %p172
    // Predicated region
    $region33: #{spade_forward.4} parent=5 // pred_check
      _
    $region34: #{spade_forward.4} parent=5 // pred_check_branch
      %175 = sbr.rel (%p172) target = $region36
    $region35: #{spade_forward.4} parent=5 // pred_region
      %s176 = ssub.s32 %s10, 1
      %s177 = smul.u32 32, %s15
      %p178 = scmp.lt.s32.totalorder %s177, 63
      %s179 = scalar_select %p178, %s177, 63
      %s180 = smul.addr %s179, 4
      %s181 = scalar_lea.vmem %s0, %s180
      %p182 = pneg %p36
      %p183 = pneg %p33
      %p184 = pneg %p57
      %p185 = pneg %p54
      %p186 = pneg %p78
      %p187 = pneg %p75
      %p188 = scmp.lt.s32.totalorder %s15, 1
      %s189 = scalar_select %p188, %s15, 1
      %s190 = scalar_lea.vmem %s3, %s189
      %p191 = pneg %p104
      %p192 = pneg %p101
      %p193 = pneg %p130
      %p194 = pneg %p127
      %s195 = smul.u32 32, %s15
      %p196 = scmp.lt.s32.totalorder %s195, 63
      %s197 = scalar_select %p196, %s195, 63
      %s198 = smul.addr %s197, 4
      %s199 = scalar_lea.vmem %s4, %s198
      %s200 = smul.u32 32, %s15
      %p201 = scmp.lt.s32.totalorder %s200, 63
      %s202 = scalar_select %p201, %s200, 63
      %s203 = smul.addr %s202, 4
      %s204 = scalar_lea.vmem %s0, %s203
      %s205 = smul.u32 32, %s15
      %p206 = scmp.lt.s32.totalorder %s15, 1
      %s207 = scalar_select %p206, %s15, 1
      %s208 = scalar_lea.vmem %s3, %s207
      %s209 = smul.u32 32, %s15
      %p210 = scmp.lt.s32.totalorder %s209, 63
      %s211 = scalar_select %p210, %s209, 63
      %s212 = smul.addr %s211, 4
      %s213 = scalar_lea.vmem %s4, %s212
      %s214 = smul.u32 32, %s15
      %v216 = vld [vmem:[%s204] sm:$0xf]
      %v217 = vld [vmem:[%s204 + $0x4] sm:$0xf]
      %v218 = vld [vmem:[%s204 + $0x8] sm:$0xf]
      %v219 = vld [vmem:[%s204 + $0xc] sm:$0xf]
      %v220 = vld [vmem:[%s204 + $0x10] sm:$0xf]
      %v221 = vld [vmem:[%s204 + $0x14] sm:$0xf]
      %v222 = vld [vmem:[%s204 + $0x18] sm:$0xf]
      %v223 = vld [vmem:[%s204 + $0x1c] sm:$0xf]
      %v224 = vld [vmem:[%s204 + $0x20] sm:$0xf]
      %v225 = vld [vmem:[%s204 + $0x24] sm:$0xf]
      %v226 = vld [vmem:[%s204 + $0x28] sm:$0xf]
      %v227 = vld [vmem:[%s204 + $0x2c] sm:$0xf]
      %v228 = vld [vmem:[%s204 + $0x30] sm:$0xf]
      %v229 = vld [vmem:[%s204 + $0x34] sm:$0xf]
      %v230 = vld [vmem:[%s204 + $0x38] sm:$0xf]
      %v231 = vld [vmem:[%s204 + $0x3c] sm:$0xf]
      %v232 = vld [vmem:[%s204 + $0x40] sm:$0xf]
      %v233 = vld [vmem:[%s204 + $0x44] sm:$0xf]
      %v234 = vld [vmem:[%s204 + $0x48] sm:$0xf]
      %v235 = vld [vmem:[%s204 + $0x4c] sm:$0xf]
      %v236 = vld [vmem:[%s204 + $0x50] sm:$0xf]
      %v237 = vld [vmem:[%s204 + $0x54] sm:$0xf]
      %v238 = vld [vmem:[%s204 + $0x58] sm:$0xf]
      %v239 = vld [vmem:[%s204 + $0x5c] sm:$0xf]
      %v240 = vld [vmem:[%s204 + $0x60] sm:$0xf]
      %v241 = vld [vmem:[%s204 + $0x64] sm:$0xf]
      %v242 = vld [vmem:[%s204 + $0x68] sm:$0xf]
      %v243 = vld [vmem:[%s204 + $0x6c] sm:$0xf]
      %v244 = vld [vmem:[%s204 + $0x70] sm:$0xf]
      %v245 = vld [vmem:[%s204 + $0x74] sm:$0xf]
      %v246 = vld [vmem:[%s204 + $0x78] sm:$0xf]
      %v247 = vld [vmem:[%s204 + $0x7c] sm:$0xf]
      %v248 = vld [vmem:[%s1] sm:$0xf]
      %v249 = vld [vmem:[%s1 + $0x4] sm:$0xf]
      %v250 = vld [vmem:[%s1 + $0x8] sm:$0xf]
      %v251 = vld [vmem:[%s1 + $0xc] sm:$0xf]
      %v252 = vld [vmem:[%s2] sm:$0x1]
      %v254 = vperm.slane %v252, 0
      %v288 = vunpack.c.l.b16 %v216
      %v289 = vunpack.c.l.b16 %v217
      %v290 = vunpack.c.l.b16 %v218
      %v291 = vunpack.c.l.b16 %v219
      %v292 = vunpack.c.l.b16 %v220
      %v293 = vunpack.c.l.b16 %v221
      %v294 = vunpack.c.l.b16 %v222
      %v295 = vunpack.c.l.b16 %v223
      %v296 = vunpack.c.l.b16 %v224
      %v297 = vunpack.c.l.b16 %v225
      %v298 = vunpack.c.l.b16 %v226
      %v299 = vunpack.c.l.b16 %v227
      %v300 = vunpack.c.l.b16 %v228
      %v301 = vunpack.c.l.b16 %v229
      %v302 = vunpack.c.l.b16 %v230
      %v303 = vunpack.c.l.b16 %v231
      %v304 = vunpack.c.l.b16 %v232
      %v305 = vunpack.c.l.b16 %v233
      %v306 = vunpack.c.l.b16 %v234
      %v307 = vunpack.c.l.b16 %v235
      %v308 = vunpack.c.l.b16 %v236
      %v309 = vunpack.c.l.b16 %v237
      %v310 = vunpack.c.l.b16 %v238
      %v311 = vunpack.c.l.b16 %v239
      %v312 = vunpack.c.l.b16 %v240
      %v313 = vunpack.c.l.b16 %v241
      %v314 = vunpack.c.l.b16 %v242
      %v315 = vunpack.c.l.b16 %v243
      %v316 = vunpack.c.l.b16 %v244
      %v317 = vunpack.c.l.b16 %v245
      %v318 = vunpack.c.l.b16 %v246
      %v319 = vunpack.c.l.b16 %v247
      %v320 = vpack.c.b16 %v289, %v288
      %v321 = vpack.c.b16 %v291, %v290
      %v322 = vpack.c.b16 %v293, %v292
      %v323 = vpack.c.b16 %v295, %v294
      %v324 = vpack.c.b16 %v297, %v296
      %v325 = vpack.c.b16 %v299, %v298
      %v326 = vpack.c.b16 %v301, %v300
      %v327 = vpack.c.b16 %v303, %v302
      %v328 = vpack.c.b16 %v305, %v304
      %v329 = vpack.c.b16 %v307, %v306
      %v330 = vpack.c.b16 %v309, %v308
      %v331 = vpack.c.b16 %v311, %v310
      %v332 = vpack.c.b16 %v313, %v312
      %v333 = vpack.c.b16 %v315, %v314
      %v334 = vpack.c.b16 %v317, %v316
      %v335 = vpack.c.b16 %v319, %v318
      %v340 = vunpack.c.l.b16 %v248
      %v341 = vunpack.c.l.b16 %v249
      %v342 = vunpack.c.l.b16 %v250
      %v343 = vunpack.c.l.b16 %v251
      %v344 = vpack.c.b16 %v341, %v340
      %v345 = vpack.c.b16 %v343, %v342
      %vm348 = vcmask 261120
      %v350 = vsel %vm348, %v320, 0
      %v353 = vsel %vm348, %v321, 0
      %v356 = vsel %vm348, %v322, 0
      %v359 = vsel %vm348, %v323, 0
      %v362 = vsel %vm348, %v324, 0
      %v365 = vsel %vm348, %v325, 0
      %v368 = vsel %vm348, %v326, 0
      %v371 = vsel %vm348, %v327, 0
      %v374 = vsel %vm348, %v328, 0
      %v377 = vsel %vm348, %v329, 0
      %v380 = vsel %vm348, %v330, 0
      %v383 = vsel %vm348, %v331, 0
      %v386 = vsel %vm348, %v332, 0
      %v389 = vsel %vm348, %v333, 0
      %v392 = vsel %vm348, %v334, 0
      %v395 = vsel %vm348, %v335, 0
      %397 = vmatpush.bf16.msra.mxu0 0
      %398 = vmatpush.bf16.msra.mxu0 0
      %399 = vmatpush.bf16.msra.mxu0 0
      %400 = vmatpush.bf16.msra.mxu0 0
      %401 = vmatpush.bf16.msra.mxu0 0
      %402 = vmatpush.bf16.msra.mxu0 0
      %403 = vmatpush.bf16.msra.mxu0 %v345
      %404 = vmatpush.bf16.msra.mxu0 %v344
      %405 = vmatmul.bf16.gmra.mxu0 %v350
      %v406 = vpop.f32.mrf.mxu0
      %v407 = vadd.f32 %v254, %v406
      %v408 = vpop.f32.mrf.mxu0
      %v409 = vadd.f32 %v254, %v408
      %410 = vmatmul.bf16.gmra.mxu0 %v353
      %v411 = vpop.f32.mrf.mxu0
      %v412 = vadd.f32 %v254, %v411
      %v413 = vpop.f32.mrf.mxu0
      %v414 = vadd.f32 %v254, %v413
      %415 = vmatmul.bf16.gmra.mxu0 %v356
      %v416 = vpop.f32.mrf.mxu0
      %v417 = vadd.f32 %v254, %v416
      %v418 = vpop.f32.mrf.mxu0
      %v419 = vadd.f32 %v254, %v418
      %420 = vmatmul.bf16.gmra.mxu0 %v359
      %v421 = vpop.f32.mrf.mxu0
      %v422 = vadd.f32 %v254, %v421
      %v423 = vpop.f32.mrf.mxu0
      %v424 = vadd.f32 %v254, %v423
      %425 = vmatmul.bf16.gmra.mxu0 %v362
      %v426 = vpop.f32.mrf.mxu0
      %v427 = vadd.f32 %v254, %v426
      %v428 = vpop.f32.mrf.mxu0
      %v429 = vadd.f32 %v254, %v428
      %430 = vmatmul.bf16.gmra.mxu0 %v365
      %v431 = vpop.f32.mrf.mxu0
      %v432 = vadd.f32 %v254, %v431
      %v433 = vpop.f32.mrf.mxu0
      %v434 = vadd.f32 %v254, %v433
      %435 = vmatmul.bf16.gmra.mxu0 %v368
      %v436 = vpop.f32.mrf.mxu0
      %v437 = vadd.f32 %v254, %v436
      %v438 = vpop.f32.mrf.mxu0
      %v439 = vadd.f32 %v254, %v438
      %440 = vmatmul.bf16.gmra.mxu0 %v371
      %v441 = vpop.f32.mrf.mxu0
      %v442 = vadd.f32 %v254, %v441
      %v443 = vpop.f32.mrf.mxu0
      %v444 = vadd.f32 %v254, %v443
      %445 = vmatmul.bf16.gmra.mxu0 %v374
      %v446 = vpop.f32.mrf.mxu0
      %v447 = vadd.f32 %v254, %v446
      %v448 = vpop.f32.mrf.mxu0
      %v449 = vadd.f32 %v254, %v448
      %450 = vmatmul.bf16.gmra.mxu0 %v377
      %v451 = vpop.f32.mrf.mxu0
      %v452 = vadd.f32 %v254, %v451
      %v453 = vpop.f32.mrf.mxu0
      %v454 = vadd.f32 %v254, %v453
      %455 = vmatmul.bf16.gmra.mxu0 %v380
      %v456 = vpop.f32.mrf.mxu0
      %v457 = vadd.f32 %v254, %v456
      %v458 = vpop.f32.mrf.mxu0
      %v459 = vadd.f32 %v254, %v458
      %460 = vmatmul.bf16.gmra.mxu0 %v383
      %v461 = vpop.f32.mrf.mxu0
      %v462 = vadd.f32 %v254, %v461
      %v463 = vpop.f32.mrf.mxu0
      %v464 = vadd.f32 %v254, %v463
      %465 = vmatmul.bf16.gmra.mxu0 %v386
      %v466 = vpop.f32.mrf.mxu0
      %v467 = vadd.f32 %v254, %v466
      %v468 = vpop.f32.mrf.mxu0
      %v469 = vadd.f32 %v254, %v468
      %470 = vmatmul.bf16.gmra.mxu0 %v389
      %v471 = vpop.f32.mrf.mxu0
      %v472 = vadd.f32 %v254, %v471
      %v473 = vpop.f32.mrf.mxu0
      %v474 = vadd.f32 %v254, %v473
      %475 = vmatmul.bf16.gmra.mxu0 %v392
      %v476 = vpop.f32.mrf.mxu0
      %v477 = vadd.f32 %v254, %v476
      %v478 = vpop.f32.mrf.mxu0
      %v479 = vadd.f32 %v254, %v478
      %480 = vmatmul.bf16.gmra.mxu0 %v395
      %v481 = vpop.f32.mrf.mxu0
      %v482 = vadd.f32 %v254, %v481
      %v483 = vpop.f32.mrf.mxu0
      %v484 = vadd.f32 %v254, %v483
      %485 = vdwg.mxu0
      %v486 = vmax.f32 %v407, 0.0
      %v487 = vmax.f32 %v409, 0.0
      %v488 = vmax.f32 %v412, 0.0
      %v489 = vmax.f32 %v414, 0.0
      %v490 = vmax.f32 %v417, 0.0
      %v491 = vmax.f32 %v419, 0.0
      %v492 = vmax.f32 %v422, 0.0
      %v493 = vmax.f32 %v424, 0.0
      %v494 = vmax.f32 %v427, 0.0
      %v495 = vmax.f32 %v429, 0.0
      %v496 = vmax.f32 %v432, 0.0
      %v497 = vmax.f32 %v434, 0.0
      %v498 = vmax.f32 %v437, 0.0
      %v499 = vmax.f32 %v439, 0.0
      %v500 = vmax.f32 %v442, 0.0
      %v501 = vmax.f32 %v444, 0.0
      %v502 = vmax.f32 %v447, 0.0
      %v503 = vmax.f32 %v449, 0.0
      %v504 = vmax.f32 %v452, 0.0
      %v505 = vmax.f32 %v454, 0.0
      %v506 = vmax.f32 %v457, 0.0
      %v507 = vmax.f32 %v459, 0.0
      %v508 = vmax.f32 %v462, 0.0
      %v509 = vmax.f32 %v464, 0.0
      %v510 = vmax.f32 %v467, 0.0
      %v511 = vmax.f32 %v469, 0.0
      %v512 = vmax.f32 %v472, 0.0
      %v513 = vmax.f32 %v474, 0.0
      %v514 = vmax.f32 %v477, 0.0
      %v515 = vmax.f32 %v479, 0.0
      %v516 = vmax.f32 %v482, 0.0
      %v517 = vmax.f32 %v484, 0.0
      %v518 = vld [vmem:[%s208] sm:$0x1]
      %v520 = vperm.slane %v518, 0
      %v522 = vadd.f32 %v486, %v520
      %v523 = vadd.f32 %v487, %v520
      %v524 = vadd.f32 %v488, %v520
      %v525 = vadd.f32 %v489, %v520
      %v526 = vadd.f32 %v490, %v520
      %v527 = vadd.f32 %v491, %v520
      %v528 = vadd.f32 %v492, %v520
      %v529 = vadd.f32 %v493, %v520
      %v530 = vadd.f32 %v494, %v520
      %v531 = vadd.f32 %v495, %v520
      %v532 = vadd.f32 %v496, %v520
      %v533 = vadd.f32 %v497, %v520
      %v534 = vadd.f32 %v498, %v520
      %v535 = vadd.f32 %v499, %v520
      %v536 = vadd.f32 %v500, %v520
      %v537 = vadd.f32 %v501, %v520
      %v538 = vadd.f32 %v502, %v520
      %v539 = vadd.f32 %v503, %v520
      %v540 = vadd.f32 %v504, %v520
      %v541 = vadd.f32 %v505, %v520
      %v542 = vadd.f32 %v506, %v520
      %v543 = vadd.f32 %v507, %v520
      %v544 = vadd.f32 %v508, %v520
      %v545 = vadd.f32 %v509, %v520
      %v546 = vadd.f32 %v510, %v520
      %v547 = vadd.f32 %v511, %v520
      %v548 = vadd.f32 %v512, %v520
      %v549 = vadd.f32 %v513, %v520
      %v550 = vadd.f32 %v514, %v520
      %v551 = vadd.f32 %v515, %v520
      %v552 = vadd.f32 %v516, %v520
      %v553 = vadd.f32 %v517, %v520
      %v554 = vpack.c.bf16 %v522, %v522
      %v555 = vpack.c.bf16 %v523, %v523
      %v556 = vpack.c.bf16 %v524, %v524
      %v557 = vpack.c.bf16 %v525, %v525
      %v558 = vpack.c.bf16 %v526, %v526
      %v559 = vpack.c.bf16 %v527, %v527
      %v560 = vpack.c.bf16 %v528, %v528
      %v561 = vpack.c.bf16 %v529, %v529
      %v562 = vpack.c.bf16 %v530, %v530
      %v563 = vpack.c.bf16 %v531, %v531
      %v564 = vpack.c.bf16 %v532, %v532
      %v565 = vpack.c.bf16 %v533, %v533
      %v566 = vpack.c.bf16 %v534, %v534
      %v567 = vpack.c.bf16 %v535, %v535
      %v568 = vpack.c.bf16 %v536, %v536
      %v569 = vpack.c.bf16 %v537, %v537
      %v570 = vpack.c.bf16 %v538, %v538
      %v571 = vpack.c.bf16 %v539, %v539
      %v572 = vpack.c.bf16 %v540, %v540
      %v573 = vpack.c.bf16 %v541, %v541
      %v574 = vpack.c.bf16 %v542, %v542
      %v575 = vpack.c.bf16 %v543, %v543
      %v576 = vpack.c.bf16 %v544, %v544
      %v577 = vpack.c.bf16 %v545, %v545
      %v578 = vpack.c.bf16 %v546, %v546
      %v579 = vpack.c.bf16 %v547, %v547
      %v580 = vpack.c.bf16 %v548, %v548
      %v581 = vpack.c.bf16 %v549, %v549
      %v582 = vpack.c.bf16 %v550, %v550
      %v583 = vpack.c.bf16 %v551, %v551
      %v584 = vpack.c.bf16 %v552, %v552
      %v585 = vpack.c.bf16 %v553, %v553
      %586 = vst [vmem:[%s213] sm:$0xf] %v554
      %587 = vst [vmem:[%s213 + $0x4] sm:$0xf] %v555
      %588 = vst [vmem:[%s213 + $0x8] sm:$0xf] %v556
      %589 = vst [vmem:[%s213 + $0xc] sm:$0xf] %v557
      %590 = vst [vmem:[%s213 + $0x10] sm:$0xf] %v558
      %591 = vst [vmem:[%s213 + $0x14] sm:$0xf] %v559
      %592 = vst [vmem:[%s213 + $0x18] sm:$0xf] %v560
      %593 = vst [vmem:[%s213 + $0x1c] sm:$0xf] %v561
      %594 = vst [vmem:[%s213 + $0x20] sm:$0xf] %v562
      %595 = vst [vmem:[%s213 + $0x24] sm:$0xf] %v563
      %596 = vst [vmem:[%s213 + $0x28] sm:$0xf] %v564
      %597 = vst [vmem:[%s213 + $0x2c] sm:$0xf] %v565
      %598 = vst [vmem:[%s213 + $0x30] sm:$0xf] %v566
      %599 = vst [vmem:[%s213 + $0x34] sm:$0xf] %v567
      %600 = vst [vmem:[%s213 + $0x38] sm:$0xf] %v568
      %601 = vst [vmem:[%s213 + $0x3c] sm:$0xf] %v569
      %602 = vst [vmem:[%s213 + $0x40] sm:$0xf] %v570
      %603 = vst [vmem:[%s213 + $0x44] sm:$0xf] %v571
      %604 = vst [vmem:[%s213 + $0x48] sm:$0xf] %v572
      %605 = vst [vmem:[%s213 + $0x4c] sm:$0xf] %v573
      %606 = vst [vmem:[%s213 + $0x50] sm:$0xf] %v574
      %607 = vst [vmem:[%s213 + $0x54] sm:$0xf] %v575
      %608 = vst [vmem:[%s213 + $0x58] sm:$0xf] %v576
      %609 = vst [vmem:[%s213 + $0x5c] sm:$0xf] %v577
      %610 = vst [vmem:[%s213 + $0x60] sm:$0xf] %v578
      %611 = vst [vmem:[%s213 + $0x64] sm:$0xf] %v579
      %612 = vst [vmem:[%s213 + $0x68] sm:$0xf] %v580
      %613 = vst [vmem:[%s213 + $0x6c] sm:$0xf] %v581
      %614 = vst [vmem:[%s213 + $0x70] sm:$0xf] %v582
      %615 = vst [vmem:[%s213 + $0x74] sm:$0xf] %v583
      %616 = vst [vmem:[%s213 + $0x78] sm:$0xf] %v584
      %617 = vst [vmem:[%s213 + $0x7c] sm:$0xf] %v585
      %s618 = smul.u32 32, %s15
      %p619 = scmp.lt.s32.totalorder %s618, 63
      %s620 = scalar_select %p619, %s618, 63
      %s621 = smul.addr %s620, 4
      %s622 = scalar_lea.vmem %s4, %s621
      // Predicated region
      $region37: #{spade_forward.4} parent=35 // pred_check
        %p623 = pneg %p127
      $region38: #{spade_forward.4} parent=35 // pred_check_branch
        %625 = sbr.rel (%p623) target = $region40
      $region39: #{spade_forward.4} parent=35 // pred_region
        %s626 = smul.u32 32, %s15
      $region40: #{spade_forward.4} parent=35 // pred_fallthru
        _
    $region36: #{spade_forward.4} parent=5 // pred_fallthru
      _
    %p627 = scmp.le.s32.totalorder 2, %s10
    // Predicated region
    $region41: #{spade_forward.4} parent=5 // pred_check
      %p628 = pneg %p627
    $region42: #{spade_forward.4} parent=5 // pred_check_branch
      %630 = sbr.rel (%p628) target = $region44
    $region43: #{spade_forward.4} parent=5 // pred_region
      %s631 = ssub.s32 %s10, 2
      // Predicated region
      $region45: #{spade_forward.4} parent=43 // pred_check
        %p632 = pneg %p133
      $region46: #{spade_forward.4} parent=43 // pred_check_branch
        %634 = sbr.rel (%p632) target = $region48
      $region47: #{spade_forward.4} parent=43 // pred_region
        %s635 = smul.u32 32, %s16
        %p636 = scmp.lt.s32.totalorder %s635, 63
        %s637 = scalar_select %p636, %s635, 63
        %s638 = smul.addr %s637, 4
        %s639 = scalar_lea.vmem %s4, %s638
      $region48: #{spade_forward.4} parent=43 // pred_fallthru
        _
    $region44: #{spade_forward.4} parent=5 // pred_fallthru
      _
  $region6: #{spade_forward.4} parent=0 // loop_footer
    %s14 = sadd.s32 1, %s10
  $region7: #{spade_forward.4} parent=0 // loop_footer_branch
    %9 = sbr.rel target = $region3
  $region8: #{spade_forward.4} parent=0 // loop_exit
    _

// kernel: spade_forward.5
$region0: #{spade_forward.5}
  #allocation0 [shape = 'u32[]', space=smem, size = 0x4, offset = 0x4, fixed_abs, tag = 'smem constant byte address 0x4 - core index']
  #allocation1 [shape = 'u32[72,128]{1,0:T(1,128)}', space=vmem, size = 0x9000, scoped, tag = 'internal scratch']
  %s0 = inlined_call_operand.vmem [shape: bf16[512,1152], index: 0, kind: input, shape index: {}]
  %s1 = inlined_call_operand.vmem [shape: bf16[1152,128], index: 1, kind: input, shape index: {}]
  %s2 = inlined_call_operand.vmem [shape: bf16[1152,128], index: 2, kind: input, shape index: {}]
  %s3 = inlined_call_operand.vmem [shape: f32[512,128], index: 3, kind: input, shape index: {}]
  %s4 = inlined_call_operand.vmem [shape: f32[2,1,128], index: 4, kind: input, shape index: {}]
  %s5 = inlined_call_operand.vmem [shape: f32[2,1,128], index: 5, kind: input, shape index: {}]
  %s6 = inlined_call_operand.vmem [shape: f32[512,128], index: 6, kind: output, shape index: {}]
  %s7 = sld [smem:[#allocation0]]
  $region57: #{spade_forward.5} parent=0
    _
  %s9 = ssub.s32 1, %s7
  %s10 = scalar_select 0, %s9, %s7
  loop: start=0, step=1, limit=4
  $region2: #{spade_forward.5} parent=0 // loop_pre_header
    _
  $region3: #{spade_forward.5} parent=0 // loop_header
    %s12 = sphi 0, %s16
    %p13 = scmp.ge.s32.totalorder %s12, 4
    %s22 = sphi 0, %s24
    %s25 = sphi 0, %s22
    %s26 = sphi 0, %s25
    %s42 = sphi 0, %s26
    %s46 = sphi 0, %s46
    %s48 = sphi 0, %s46
    %s49 = sphi 0, %s48
    %s63 = sphi 0, %s49
    %s67 = sphi 0, %s67
    %s69 = sphi 0, %s67
    %s70 = sphi 0, %s69
    %s84 = sphi 0, %s70
    %s90 = sphi 0, %s92
    %s93 = sphi 0, %s90
    %s94 = sphi 0, %s93
    %s110 = sphi 0, %s94
    %s116 = sphi 0, %s118
    %s119 = sphi 0, %s116
    %s120 = sphi 0, %s119
    %s136 = sphi 0, %s120
    %s142 = sphi 0, %s144
    %s145 = sphi 0, %s142
    %s146 = sphi 0, %s145
    %s162 = sphi 0, %s146
    %s168 = sphi 0, %s170
    %s171 = sphi 0, %s168
    %s172 = sphi 0, %s171
    %s188 = sphi 0, %s172
  $region4: #{spade_forward.5} parent=0 // loop_header_branch
    %15 = sbr.rel (%p13) target = $region8
  $region5: #{spade_forward.5} parent=0 // loop_body
    %s17 = ssub.s32 %s12, 1
    %s18 = ssub.s32 %s12, 2
    %s19 = sadd.s32 %s12, 1
    %s20 = ssub.s32 %s12, %s19
    %p21 = scmp.eq.s32.totalorder %s20, 0
    %s23 = sadd.s32 %s22, 1
    %s24 = scalar_select %p21, %s22, %s23
    %p27 = pneg %p21
    %p28 = scmp.eq.s32.totalorder %s12, 1
    %p29 = por %p27, %p28
    %p30 = scmp.ne.s32.totalorder %s22, %s25
    %p31 = scmp.eq.s32.totalorder %s12, 0
    %p32 = por %p30, %p31
    %p33 = scmp.ne.s32.totalorder %s22, %s25
    %p34 = scmp.eq.s32.totalorder %s17, 1
    %p35 = por %p33, %p34
    %p36 = scmp.ne.s32.totalorder %s25, %s26
    %p37 = scmp.eq.s32.totalorder %s17, 0
    %p38 = por %p36, %p37
    %p39 = scmp.ne.s32.totalorder %s25, %s26
    %p40 = scmp.eq.s32.totalorder %s18, 1
    %p41 = por %p39, %p40
    %p43 = scmp.ne.s32.totalorder %s26, %s42
    %p44 = scmp.eq.s32.totalorder %s18, 0
    %p45 = por %p43, %p44
    %s47 = sadd.s32 %s46, 1
    %p50 = scmp.eq.s32.totalorder %s12, 1
    %p51 = scmp.ne.s32.totalorder %s46, %s48
    %p52 = scmp.eq.s32.totalorder %s12, 0
    %p53 = por %p51, %p52
    %p54 = scmp.ne.s32.totalorder %s46, %s48
    %p55 = scmp.eq.s32.totalorder %s17, 1
    %p56 = por %p54, %p55
    %p57 = scmp.ne.s32.totalorder %s48, %s49
    %p58 = scmp.eq.s32.totalorder %s17, 0
    %p59 = por %p57, %p58
    %p60 = scmp.ne.s32.totalorder %s48, %s49
    %p61 = scmp.eq.s32.totalorder %s18, 1
    %p62 = por %p60, %p61
    %p64 = scmp.ne.s32.totalorder %s49, %s63
    %p65 = scmp.eq.s32.totalorder %s18, 0
    %p66 = por %p64, %p65
    %s68 = sadd.s32 %s67, 1
    %p71 = scmp.eq.s32.totalorder %s12, 1
    %p72 = scmp.ne.s32.totalorder %s67, %s69
    %p73 = scmp.eq.s32.totalorder %s12, 0
    %p74 = por %p72, %p73
    %p75 = scmp.ne.s32.totalorder %s67, %s69
    %p76 = scmp.eq.s32.totalorder %s17, 1
    %p77 = por %p75, %p76
    %p78 = scmp.ne.s32.totalorder %s69, %s70
    %p79 = scmp.eq.s32.totalorder %s17, 0
    %p80 = por %p78, %p79
    %p81 = scmp.ne.s32.totalorder %s69, %s70
    %p82 = scmp.eq.s32.totalorder %s18, 1
    %p83 = por %p81, %p82
    %p85 = scmp.ne.s32.totalorder %s70, %s84
    %p86 = scmp.eq.s32.totalorder %s18, 0
    %p87 = por %p85, %p86
    %s88 = ssub.s32 %s12, %s19
    %p89 = scmp.eq.s32.totalorder %s88, 0
    %s91 = sadd.s32 %s90, 1
    %s92 = scalar_select %p89, %s90, %s91
    %p95 = pneg %p89
    %p96 = scmp.eq.s32.totalorder %s12, 1
    %p97 = por %p95, %p96
    %p98 = scmp.ne.s32.totalorder %s90, %s93
    %p99 = scmp.eq.s32.totalorder %s12, 0
    %p100 = por %p98, %p99
    %p101 = scmp.ne.s32.totalorder %s90, %s93
    %p102 = scmp.eq.s32.totalorder %s17, 1
    %p103 = por %p101, %p102
    %p104 = scmp.ne.s32.totalorder %s93, %s94
    %p105 = scmp.eq.s32.totalorder %s17, 0
    %p106 = por %p104, %p105
    %p107 = scmp.ne.s32.totalorder %s93, %s94
    %p108 = scmp.eq.s32.totalorder %s18, 1
    %p109 = por %p107, %p108
    %p111 = scmp.ne.s32.totalorder %s94, %s110
    %p112 = scmp.eq.s32.totalorder %s18, 0
    %p113 = por %p111, %p112
    %s114 = ssub.s32 %s12, %s19
    %p115 = scmp.eq.s32.totalorder %s114, 0
    %s117 = sadd.s32 %s116, 1
    %s118 = scalar_select %p115, %s116, %s117
    %p121 = pneg %p115
    %p122 = scmp.eq.s32.totalorder %s12, 1
    %p123 = por %p121, %p122
    %p124 = scmp.ne.s32.totalorder %s116, %s119
    %p125 = scmp.eq.s32.totalorder %s12, 0
    %p126 = por %p124, %p125
    %p127 = scmp.ne.s32.totalorder %s116, %s119
    %p128 = scmp.eq.s32.totalorder %s17, 1
    %p129 = por %p127, %p128
    %p130 = scmp.ne.s32.totalorder %s119, %s120
    %p131 = scmp.eq.s32.totalorder %s17, 0
    %p132 = por %p130, %p131
    %p133 = scmp.ne.s32.totalorder %s119, %s120
    %p134 = scmp.eq.s32.totalorder %s18, 1
    %p135 = por %p133, %p134
    %p137 = scmp.ne.s32.totalorder %s120, %s136
    %p138 = scmp.eq.s32.totalorder %s18, 0
    %p139 = por %p137, %p138
    %s140 = ssub.s32 %s12, %s19
    %p141 = scmp.eq.s32.totalorder %s140, 0
    %s143 = sadd.s32 %s142, 1
    %s144 = scalar_select %p141, %s142, %s143
    %p147 = pneg %p141
    %p148 = scmp.eq.s32.totalorder %s12, 1
    %p149 = por %p147, %p148
    %p150 = scmp.ne.s32.totalorder %s142, %s145
    %p151 = scmp.eq.s32.totalorder %s12, 0
    %p152 = por %p150, %p151
    %p153 = scmp.ne.s32.totalorder %s142, %s145
    %p154 = scmp.eq.s32.totalorder %s17, 1
    %p155 = por %p153, %p154
    %p156 = scmp.ne.s32.totalorder %s145, %s146
    %p157 = scmp.eq.s32.totalorder %s17, 0
    %p158 = por %p156, %p157
    %p159 = scmp.ne.s32.totalorder %s145, %s146
    %p160 = scmp.eq.s32.totalorder %s18, 1
    %p161 = por %p159, %p160
    %p163 = scmp.ne.s32.totalorder %s146, %s162
    %p164 = scmp.eq.s32.totalorder %s18, 0
    %p165 = por %p163, %p164
    %s166 = ssub.s32 %s12, %s19
    %p167 = scmp.eq.s32.totalorder %s166, 0
    %s169 = sadd.s32 %s168, 1
    %s170 = scalar_select %p167, %s168, %s169
    %p173 = pneg %p167
    %p174 = scmp.eq.s32.totalorder %s12, 1
    %p175 = por %p173, %p174
    %p176 = scmp.ne.s32.totalorder %s168, %s171
    %p177 = scmp.eq.s32.totalorder %s12, 0
    %p178 = por %p176, %p177
    %p179 = scmp.ne.s32.totalorder %s168, %s171
    %p180 = scmp.eq.s32.totalorder %s17, 1
    %p181 = por %p179, %p180
    %p182 = scmp.ne.s32.totalorder %s171, %s172
    %p183 = scmp.eq.s32.totalorder %s17, 0
    %p184 = por %p182, %p183
    %p185 = scmp.ne.s32.totalorder %s171, %s172
    %p186 = scmp.eq.s32.totalorder %s18, 1
    %p187 = por %p185, %p186
    %p189 = scmp.ne.s32.totalorder %s172, %s188
    %p190 = scmp.eq.s32.totalorder %s18, 0
    %p191 = por %p189, %p190
    %p192 = scmp.le.s32.totalorder 1, %s12
    %p193 = scmp.lt.s32.totalorder %s12, 3
    %p194 = pnand %p192, %p193
    %p195 = pneg %p194
    // Predicated region
    $region9: #{spade_forward.5} parent=5 // pred_check
      _
    $region10: #{spade_forward.5} parent=5 // pred_check_branch
      %197 = sbr.rel (%p194) target = $region12
    $region11: #{spade_forward.5} parent=5 // pred_region
      %s198 = ssub.s32 %s12, 1
      // Predicated region
      $region13: #{spade_forward.5} parent=11 // pred_check
        %p199 = pneg %p59
      $region14: #{spade_forward.5} parent=11 // pred_check_branch
        %201 = sbr.rel (%p199) target = $region16
      $region15: #{spade_forward.5} parent=11 // pred_region
        _
      $region16: #{spade_forward.5} parent=11 // pred_fallthru
        _
      // Predicated region
      $region17: #{spade_forward.5} parent=11 // pred_check
        %p202 = pneg %p80
      $region18: #{spade_forward.5} parent=11 // pred_check_branch
        %204 = sbr.rel (%p202) target = $region20
      $region19: #{spade_forward.5} parent=11 // pred_region
        _
      $region20: #{spade_forward.5} parent=11 // pred_fallthru
        _
    $region12: #{spade_forward.5} parent=5 // pred_fallthru
      _
    %p205 = scmp.lt.s32.totalorder %s12, 2
    // Predicated region
    $region21: #{spade_forward.5} parent=5 // pred_check
      %p206 = pneg %p205
    $region22: #{spade_forward.5} parent=5 // pred_check_branch
      %208 = sbr.rel (%p206) target = $region24
    $region23: #{spade_forward.5} parent=5 // pred_region
      // Predicated region
      $region25: #{spade_forward.5} parent=23 // pred_check
        %p209 = pneg %p32
      $region26: #{spade_forward.5} parent=23 // pred_check_branch
        %211 = sbr.rel (%p209) target = $region28
      $region27: #{spade_forward.5} parent=23 // pred_region
        %s212 = smul.u32 32, %s12
        %p213 = scmp.lt.s32.totalorder %s212, 63
        %s214 = scalar_select %p213, %s212, 63
        %s215 = smul.addr %s214, 9
        %s216 = smul.addr %s215, 4
        %s217 = scalar_lea.vmem %s0, %s216
        %s218 = smul.u32 32, %s12
      $region28: #{spade_forward.5} parent=23 // pred_fallthru
        _
      // Predicated region
      $region29: #{spade_forward.5} parent=23 // pred_check
        %p219 = pneg %p100
      $region30: #{spade_forward.5} parent=23 // pred_check_branch
        %221 = sbr.rel (%p219) target = $region32
      $region31: #{spade_forward.5} parent=23 // pred_region
        %s222 = smul.u32 32, %s12
        %p223 = scmp.lt.s32.totalorder %s222, 63
        %s224 = scalar_select %p223, %s222, 63
        %s225 = smul.addr %s224, 8
        %s226 = scalar_lea.vmem %s3, %s225
        %s227 = smul.u32 32, %s12
      $region32: #{spade_forward.5} parent=23 // pred_fallthru
        _
      // Predicated region
      $region33: #{spade_forward.5} parent=23 // pred_check
        %p228 = pneg %p126
      $region34: #{spade_forward.5} parent=23 // pred_check_branch
        %230 = sbr.rel (%p228) target = $region36
      $region35: #{spade_forward.5} parent=23 // pred_region
        %p231 = scmp.lt.s32.totalorder %s12, 1
        %s232 = scalar_select %p231, %s12, 1
        %s233 = scalar_lea.vmem %s4, %s232
      $region36: #{spade_forward.5} parent=23 // pred_fallthru
        _
      // Predicated region
      $region37: #{spade_forward.5} parent=23 // pred_check
        %p234 = pneg %p152
      $region38: #{spade_forward.5} parent=23 // pred_check_branch
        %236 = sbr.rel (%p234) target = $region40
      $region39: #{spade_forward.5} parent=23 // pred_region
        %p237 = scmp.lt.s32.totalorder %s12, 1
        %s238 = scalar_select %p237, %s12, 1
        %s239 = scalar_lea.vmem %s5, %s238
      $region40: #{spade_forward.5} parent=23 // pred_fallthru
        _
    $region24: #{spade_forward.5} parent=5 // pred_fallthru
      _
    %p240 = scmp.le.s32.totalorder 1, %s12
    %p241 = scmp.lt.s32.totalorder %s12, 3
    %p242 = pnand %p240, %p241
    %p243 = pneg %p242
    // Predicated region
    $region41: #{spade_forward.5} parent=5 // pred_check
      _
    $region42: #{spade_forward.5} parent=5 // pred_check_branch
      %245 = sbr.rel (%p242) target = $region44
    $region43: #{spade_forward.5} parent=5 // pred_region
      %s246 = ssub.s32 %s12, 1
      %s247 = smul.u32 32, %s17
      %p248 = scmp.lt.s32.totalorder %s247, 63
      %s249 = scalar_select %p248, %s247, 63
      %s250 = smul.addr %s249, 9
      %s251 = smul.addr %s250, 4
      %s252 = scalar_lea.vmem %s0, %s251
      %p253 = pneg %p38
      %p254 = pneg %p35
      %p255 = pneg %p59
      %p256 = pneg %p56
      %p257 = pneg %p80
      %p258 = pneg %p77
      %s259 = smul.u32 32, %s17
      %p260 = scmp.lt.s32.totalorder %s259, 63
      %s261 = scalar_select %p260, %s259, 63
      %s262 = smul.addr %s261, 8
      %s263 = scalar_lea.vmem %s3, %s262
      %p264 = pneg %p106
      %p265 = pneg %p103
      %p266 = scmp.lt.s32.totalorder %s17, 1
      %s267 = scalar_select %p266, %s17, 1
      %s268 = scalar_lea.vmem %s4, %s267
      %p269 = pneg %p132
      %p270 = pneg %p129
      %p271 = scmp.lt.s32.totalorder %s17, 1
      %s272 = scalar_select %p271, %s17, 1
      %s273 = scalar_lea.vmem %s5, %s272
      %p274 = pneg %p158
      %p275 = pneg %p155
      %p276 = pneg %p184
      %p277 = pneg %p181
      %s278 = smul.u32 32, %s17
      %p279 = scmp.lt.s32.totalorder %s278, 63
      %s280 = scalar_select %p279, %s278, 63
      %s281 = smul.addr %s280, 8
      %s282 = scalar_lea.vmem %s6, %s281
      %s283 = smul.u32 32, %s17
      %p284 = scmp.lt.s32.totalorder %s283, 63
      %s285 = scalar_select %p284, %s283, 63
      %s286 = smul.addr %s285, 9
      %s287 = smul.addr %s286, 4
      %s288 = scalar_lea.vmem %s0, %s287
      %s289 = smul.u32 32, %s17
      %s290 = smul.u32 32, %s17
      %p291 = scmp.lt.s32.totalorder %s290, 63
      %s292 = scalar_select %p291, %s290, 63
      %s293 = smul.addr %s292, 8
      %s294 = scalar_lea.vmem %s3, %s293
      %s295 = smul.u32 32, %s17
      %p296 = scmp.lt.s32.totalorder %s17, 1
      %s297 = scalar_select %p296, %s17, 1
      %s298 = scalar_lea.vmem %s4, %s297
      %p299 = scmp.lt.s32.totalorder %s17, 1
      %s300 = scalar_select %p299, %s17, 1
      %s301 = scalar_lea.vmem %s5, %s300
      %s302 = smul.u32 32, %s17
      %p303 = scmp.lt.s32.totalorder %s302, 63
      %s304 = scalar_select %p303, %s302, 63
      %s305 = smul.addr %s304, 8
      %s306 = scalar_lea.vmem %s6, %s305
      %s307 = smul.u32 32, %s17
      %v308 = vld [vmem:[%s288] sm:$0xff]
      %v309 = vld [vmem:[%s288 + $0x8] sm:$0xff]
      %v310 = vld [vmem:[%s288 + $0x10] sm:$0xff]
      %v311 = vld [vmem:[%s288 + $0x18] sm:$0xff]
      %v312 = vld [vmem:[%s288 + $0x20] sm:$0xf]
      %v313 = vld [vmem:[%s288 + $0x24] sm:$0xff]
      %v314 = vld [vmem:[%s288 + $0x2c] sm:$0xff]
      %v315 = vld [vmem:[%s288 + $0x34] sm:$0xff]
      %v316 = vld [vmem:[%s288 + $0x3c] sm:$0xff]
      %v317 = vld [vmem:[%s288 + $0x44] sm:$0xf]
      %v318 = vld [vmem:[%s288 + $0x48] sm:$0xff]
      %v319 = vld [vmem:[%s288 + $0x50] sm:$0xff]
      %v320 = vld [vmem:[%s288 + $0x58] sm:$0xff]
      %v321 = vld [vmem:[%s288 + $0x60] sm:$0xff]
      %v322 = vld [vmem:[%s288 + $0x68] sm:$0xf]
      %v323 = vld [vmem:[%s288 + $0x6c] sm:$0xff]
      %v324 = vld [vmem:[%s288 + $0x74] sm:$0xff]
      %v325 = vld [vmem:[%s288 + $0x7c] sm:$0xff]
      %v326 = vld [vmem:[%s288 + $0x84] sm:$0xff]
      %v327 = vld [vmem:[%s288 + $0x8c] sm:$0xf]
      %v328 = vld [vmem:[%s288 + $0x90] sm:$0xff]
      %v329 = vld [vmem:[%s288 + $0x98] sm:$0xff]
      %v330 = vld [vmem:[%s288 + $0xa0] sm:$0xff]
      %v331 = vld [vmem:[%s288 + $0xa8] sm:$0xff]
      %v332 = vld [vmem:[%s288 + $0xb0] sm:$0xf]
      %v333 = vld [vmem:[%s288 + $0xb4] sm:$0xff]
      %v334 = vld [vmem:[%s288 + $0xbc] sm:$0xff]
      %v335 = vld [vmem:[%s288 + $0xc4] sm:$0xff]
      %v336 = vld [vmem:[%s288 + $0xcc] sm:$0xff]
      %v337 = vld [vmem:[%s288 + $0xd4] sm:$0xf]
      %v338 = vld [vmem:[%s288 + $0xd8] sm:$0xff]
      %v339 = vld [vmem:[%s288 + $0xe0] sm:$0xff]
      %v340 = vld [vmem:[%s288 + $0xe8] sm:$0xff]
      %v341 = vld [vmem:[%s288 + $0xf0] sm:$0xff]
      %v342 = vld [vmem:[%s288 + $0xf8] sm:$0xf]
      %v343 = vld [vmem:[%s288 + $0xfc] sm:$0xff]
      %v344 = vld [vmem:[%s288 + $0x104] sm:$0xff]
      %v345 = vld [vmem:[%s288 + $0x10c] sm:$0xff]
      %v346 = vld [vmem:[%s288 + $0x114] sm:$0xff]
      %v347 = vld [vmem:[%s288 + $0x11c] sm:$0xf]
      %v348 = vld [vmem:[%s288 + $0x120] sm:$0xff]
      %v349 = vld [vmem:[%s288 + $0x128] sm:$0xff]
      %v350 = vld [vmem:[%s288 + $0x130] sm:$0xff]
      %v351 = vld [vmem:[%s288 + $0x138] sm:$0xff]
      %v352 = vld [vmem:[%s288 + $0x140] sm:$0xf]
      %v353 = vld [vmem:[%s288 + $0x144] sm:$0xff]
      %v354 = vld [vmem:[%s288 + $0x14c] sm:$0xff]
      %v355 = vld [vmem:[%s288 + $0x154] sm:$0xff]
      %v356 = vld [vmem:[%s288 + $0x15c] sm:$0xff]
      %v357 = vld [vmem:[%s288 + $0x164] sm:$0xf]
      %v358 = vld [vmem:[%s288 + $0x168] sm:$0xff]
      %v359 = vld [vmem:[%s288 + $0x170] sm:$0xff]
      %v360 = vld [vmem:[%s288 + $0x178] sm:$0xff]
      %v361 = vld [vmem:[%s288 + $0x180] sm:$0xff]
      %v362 = vld [vmem:[%s288 + $0x188] sm:$0xf]
      %v363 = vld [vmem:[%s288 + $0x18c] sm:$0xff]
      %v364 = vld [vmem:[%s288 + $0x194] sm:$0xff]
      %v365 = vld [vmem:[%s288 + $0x19c] sm:$0xff]
      %v366 = vld [vmem:[%s288 + $0x1a4] sm:$0xff]
      %v367 = vld [vmem:[%s288 + $0x1ac] sm:$0xf]
      %v368 = vld [vmem:[%s288 + $0x1b0] sm:$0xff]
      %v369 = vld [vmem:[%s288 + $0x1b8] sm:$0xff]
      %v370 = vld [vmem:[%s288 + $0x1c0] sm:$0xff]
      %v371 = vld [vmem:[%s288 + $0x1c8] sm:$0xff]
      %v372 = vld [vmem:[%s288 + $0x1d0] sm:$0xf]
      %v373 = vld [vmem:[%s288 + $0x1d4] sm:$0xff]
      %v374 = vld [vmem:[%s288 + $0x1dc] sm:$0xff]
      %v375 = vld [vmem:[%s288 + $0x1e4] sm:$0xff]
      %v376 = vld [vmem:[%s288 + $0x1ec] sm:$0xff]
      %v377 = vld [vmem:[%s288 + $0x1f4] sm:$0xf]
      %v378 = vld [vmem:[%s288 + $0x1f8] sm:$0xff]
      %v379 = vld [vmem:[%s288 + $0x200] sm:$0xff]
      %v380 = vld [vmem:[%s288 + $0x208] sm:$0xff]
      %v381 = vld [vmem:[%s288 + $0x210] sm:$0xff]
      %v382 = vld [vmem:[%s288 + $0x218] sm:$0xf]
      %v383 = vld [vmem:[%s288 + $0x21c] sm:$0xff]
      %v384 = vld [vmem:[%s288 + $0x224] sm:$0xff]
      %v385 = vld [vmem:[%s288 + $0x22c] sm:$0xff]
      %v386 = vld [vmem:[%s288 + $0x234] sm:$0xff]
      %v387 = vld [vmem:[%s288 + $0x23c] sm:$0xf]
      %v388 = vld [vmem:[%s288 + $0x240] sm:$0xff]
      %v389 = vld [vmem:[%s288 + $0x248] sm:$0xff]
      %v390 = vld [vmem:[%s288 + $0x250] sm:$0xff]
      %v391 = vld [vmem:[%s288 + $0x258] sm:$0xff]
      %v392 = vld [vmem:[%s288 + $0x260] sm:$0xf]
      %v393 = vld [vmem:[%s288 + $0x264] sm:$0xff]
      %v394 = vld [vmem:[%s288 + $0x26c] sm:$0xff]
      %v395 = vld [vmem:[%s288 + $0x274] sm:$0xff]
      %v396 = vld [vmem:[%s288 + $0x27c] sm:$0xff]
      %v397 = vld [vmem:[%s288 + $0x284] sm:$0xf]
      %v398 = vld [vmem:[%s288 + $0x288] sm:$0xff]
      %v399 = vld [vmem:[%s288 + $0x290] sm:$0xff]
      %v400 = vld [vmem:[%s288 + $0x298] sm:$0xff]
      %v401 = vld [vmem:[%s288 + $0x2a0] sm:$0xff]
      %v402 = vld [vmem:[%s288 + $0x2a8] sm:$0xf]
      %v403 = vld [vmem:[%s288 + $0x2ac] sm:$0xff]
      %v404 = vld [vmem:[%s288 + $0x2b4] sm:$0xff]
      %v405 = vld [vmem:[%s288 + $0x2bc] sm:$0xff]
      %v406 = vld [vmem:[%s288 + $0x2c4] sm:$0xff]
      %v407 = vld [vmem:[%s288 + $0x2cc] sm:$0xf]
      %v408 = vld [vmem:[%s288 + $0x2d0] sm:$0xff]
      %v409 = vld [vmem:[%s288 + $0x2d8] sm:$0xff]
      %v410 = vld [vmem:[%s288 + $0x2e0] sm:$0xff]
      %v411 = vld [vmem:[%s288 + $0x2e8] sm:$0xff]
      %v412 = vld [vmem:[%s288 + $0x2f0] sm:$0xf]
      %v413 = vld [vmem:[%s288 + $0x2f4] sm:$0xff]
      %v414 = vld [vmem:[%s288 + $0x2fc] sm:$0xff]
      %v415 = vld [vmem:[%s288 + $0x304] sm:$0xff]
      %v416 = vld [vmem:[%s288 + $0x30c] sm:$0xff]
      %v417 = vld [vmem:[%s288 + $0x314] sm:$0xf]
      %v418 = vld [vmem:[%s288 + $0x318] sm:$0xff]
      %v419 = vld [vmem:[%s288 + $0x320] sm:$0xff]
      %v420 = vld [vmem:[%s288 + $0x328] sm:$0xff]
      %v421 = vld [vmem:[%s288 + $0x330] sm:$0xff]
      %v422 = vld [vmem:[%s288 + $0x338] sm:$0xf]
      %v423 = vld [vmem:[%s288 + $0x33c] sm:$0xff]
      %v424 = vld [vmem:[%s288 + $0x344] sm:$0xff]
      %v425 = vld [vmem:[%s288 + $0x34c] sm:$0xff]
      %v426 = vld [vmem:[%s288 + $0x354] sm:$0xff]
      %v427 = vld [vmem:[%s288 + $0x35c] sm:$0xf]
      %v428 = vld [vmem:[%s288 + $0x360] sm:$0xff]
      %v429 = vld [vmem:[%s288 + $0x368] sm:$0xff]
      %v430 = vld [vmem:[%s288 + $0x370] sm:$0xff]
      %v431 = vld [vmem:[%s288 + $0x378] sm:$0xff]
      %v432 = vld [vmem:[%s288 + $0x380] sm:$0xf]
      %v433 = vld [vmem:[%s288 + $0x384] sm:$0xff]
      %v434 = vld [vmem:[%s288 + $0x38c] sm:$0xff]
      %v435 = vld [vmem:[%s288 + $0x394] sm:$0xff]
      %v436 = vld [vmem:[%s288 + $0x39c] sm:$0xff]
      %v437 = vld [vmem:[%s288 + $0x3a4] sm:$0xf]
      %v438 = vld [vmem:[%s288 + $0x3a8] sm:$0xff]
      %v439 = vld [vmem:[%s288 + $0x3b0] sm:$0xff]
      %v440 = vld [vmem:[%s288 + $0x3b8] sm:$0xff]
      %v441 = vld [vmem:[%s288 + $0x3c0] sm:$0xff]
      %v442 = vld [vmem:[%s288 + $0x3c8] sm:$0xf]
      %v443 = vld [vmem:[%s288 + $0x3cc] sm:$0xff]
      %v444 = vld [vmem:[%s288 + $0x3d4] sm:$0xff]
      %v445 = vld [vmem:[%s288 + $0x3dc] sm:$0xff]
      %v446 = vld [vmem:[%s288 + $0x3e4] sm:$0xff]
      %v447 = vld [vmem:[%s288 + $0x3ec] sm:$0xf]
      %v448 = vld [vmem:[%s288 + $0x3f0] sm:$0xff]
      %v449 = vld [vmem:[%s288 + $0x3f8] sm:$0xff]
      %v450 = vld [vmem:[%s288 + $0x400] sm:$0xff]
      %v451 = vld [vmem:[%s288 + $0x408] sm:$0xff]
      %v452 = vld [vmem:[%s288 + $0x410] sm:$0xf]
      %v453 = vld [vmem:[%s288 + $0x414] sm:$0xff]
      %v454 = vld [vmem:[%s288 + $0x41c] sm:$0xff]
      %v455 = vld [vmem:[%s288 + $0x424] sm:$0xff]
      %v456 = vld [vmem:[%s288 + $0x42c] sm:$0xff]
      %v457 = vld [vmem:[%s288 + $0x434] sm:$0xf]
      %v458 = vld [vmem:[%s288 + $0x438] sm:$0xff]
      %v459 = vld [vmem:[%s288 + $0x440] sm:$0xff]
      %v460 = vld [vmem:[%s288 + $0x448] sm:$0xff]
      %v461 = vld [vmem:[%s288 + $0x450] sm:$0xff]
      %v462 = vld [vmem:[%s288 + $0x458] sm:$0xf]
      %v463 = vld [vmem:[%s288 + $0x45c] sm:$0xff]
      %v464 = vld [vmem:[%s288 + $0x464] sm:$0xff]
      %v465 = vld [vmem:[%s288 + $0x46c] sm:$0xff]
      %v466 = vld [vmem:[%s288 + $0x474] sm:$0xff]
      %v467 = vld [vmem:[%s288 + $0x47c] sm:$0xf]
      %v468 = vld [vmem:[%s1] sm:$0xf]
      %v469 = vld [vmem:[%s1 + $0x4] sm:$0xf]
      %v470 = vld [vmem:[%s1 + $0x8] sm:$0xf]
      %v471 = vld [vmem:[%s1 + $0xc] sm:$0xf]
      %v472 = vld [vmem:[%s1 + $0x10] sm:$0xf]
      %v473 = vld [vmem:[%s1 + $0x14] sm:$0xf]
      %v474 = vld [vmem:[%s1 + $0x18] sm:$0xf]
      %v475 = vld [vmem:[%s1 + $0x1c] sm:$0xf]
      %v476 = vld [vmem:[%s1 + $0x20] sm:$0xf]
      %v477 = vld [vmem:[%s1 + $0x24] sm:$0xf]
      %v478 = vld [vmem:[%s1 + $0x28] sm:$0xf]
      %v479 = vld [vmem:[%s1 + $0x2c] sm:$0xf]
      %v480 = vld [vmem:[%s1 + $0x30] sm:$0xf]
      %v481 = vld [vmem:[%s1 + $0x34] sm:$0xf]
      %v482 = vld [vmem:[%s1 + $0x38] sm:$0xf]
      %v483 = vld [vmem:[%s1 + $0x3c] sm:$0xf]
      %v484 = vld [vmem:[%s1 + $0x40] sm:$0xf]
      %v485 = vld [vmem:[%s1 + $0x44] sm:$0xf]
      %v486 = vld [vmem:[%s1 + $0x48] sm:$0xf]
      %v487 = vld [vmem:[%s1 + $0x4c] sm:$0xf]
      %v488 = vld [vmem:[%s1 + $0x50] sm:$0xf]
      %v489 = vld [vmem:[%s1 + $0x54] sm:$0xf]
      %v490 = vld [vmem:[%s1 + $0x58] sm:$0xf]
      %v491 = vld [vmem:[%s1 + $0x5c] sm:$0xf]
      %v492 = vld [vmem:[%s1 + $0x60] sm:$0xf]
      %v493 = vld [vmem:[%s1 + $0x64] sm:$0xf]
      %v494 = vld [vmem:[%s1 + $0x68] sm:$0xf]
      %v495 = vld [vmem:[%s1 + $0x6c] sm:$0xf]
      %v496 = vld [vmem:[%s1 + $0x70] sm:$0xf]
      %v497 = vld [vmem:[%s1 + $0x74] sm:$0xf]
      %v498 = vld [vmem:[%s1 + $0x78] sm:$0xf]
      %v499 = vld [vmem:[%s1 + $0x7c] sm:$0xf]
      %v500 = vld [vmem:[%s1 + $0x80] sm:$0xf]
      %v501 = vld [vmem:[%s1 + $0x84] sm:$0xf]
      %v502 = vld [vmem:[%s1 + $0x88] sm:$0xf]
      %v503 = vld [vmem:[%s1 + $0x8c] sm:$0xf]
      %v504 = vld [vmem:[%s1 + $0x90] sm:$0xf]
      %v505 = vld [vmem:[%s1 + $0x94] sm:$0xf]
      %v506 = vld [vmem:[%s1 + $0x98] sm:$0xf]
      %v507 = vld [vmem:[%s1 + $0x9c] sm:$0xf]
      %v508 = vld [vmem:[%s1 + $0xa0] sm:$0xf]
      %v509 = vld [vmem:[%s1 + $0xa4] sm:$0xf]
      %v510 = vld [vmem:[%s1 + $0xa8] sm:$0xf]
      %v511 = vld [vmem:[%s1 + $0xac] sm:$0xf]
      %v512 = vld [vmem:[%s1 + $0xb0] sm:$0xf]
      %v513 = vld [vmem:[%s1 + $0xb4] sm:$0xf]
      %v514 = vld [vmem:[%s1 + $0xb8] sm:$0xf]
      %v515 = vld [vmem:[%s1 + $0xbc] sm:$0xf]
      %v516 = vld [vmem:[%s1 + $0xc0] sm:$0xf]
      %v517 = vld [vmem:[%s1 + $0xc4] sm:$0xf]
      %v518 = vld [vmem:[%s1 + $0xc8] sm:$0xf]
      %v519 = vld [vmem:[%s1 + $0xcc] sm:$0xf]
      %v520 = vld [vmem:[%s1 + $0xd0] sm:$0xf]
      %v521 = vld [vmem:[%s1 + $0xd4] sm:$0xf]
      %v522 = vld [vmem:[%s1 + $0xd8] sm:$0xf]
      %v523 = vld [vmem:[%s1 + $0xdc] sm:$0xf]
      %v524 = vld [vmem:[%s1 + $0xe0] sm:$0xf]
      %v525 = vld [vmem:[%s1 + $0xe4] sm:$0xf]
      %v526 = vld [vmem:[%s1 + $0xe8] sm:$0xf]
      %v527 = vld [vmem:[%s1 + $0xec] sm:$0xf]
      %v528 = vld [vmem:[%s1 + $0xf0] sm:$0xf]
      %v529 = vld [vmem:[%s1 + $0xf4] sm:$0xf]
      %v530 = vld [vmem:[%s1 + $0xf8] sm:$0xf]
      %v531 = vld [vmem:[%s1 + $0xfc] sm:$0xf]
      %v532 = vld [vmem:[%s1 + $0x100] sm:$0xf]
      %v533 = vld [vmem:[%s1 + $0x104] sm:$0xf]
      %v534 = vld [vmem:[%s1 + $0x108] sm:$0xf]
      %v535 = vld [vmem:[%s1 + $0x10c] sm:$0xf]
      %v536 = vld [vmem:[%s1 + $0x110] sm:$0xf]
      %v537 = vld [vmem:[%s1 + $0x114] sm:$0xf]
      %v538 = vld [vmem:[%s1 + $0x118] sm:$0xf]
      %v539 = vld [vmem:[%s1 + $0x11c] sm:$0xf]
      %v540 = vld [vmem:[%s1 + $0x120] sm:$0xf]
      %v541 = vld [vmem:[%s1 + $0x124] sm:$0xf]
      %v542 = vld [vmem:[%s1 + $0x128] sm:$0xf]
      %v543 = vld [vmem:[%s1 + $0x12c] sm:$0xf]
      %v544 = vld [vmem:[%s1 + $0x130] sm:$0xf]
      %v545 = vld [vmem:[%s1 + $0x134] sm:$0xf]
      %v546 = vld [vmem:[%s1 + $0x138] sm:$0xf]
      %v547 = vld [vmem:[%s1 + $0x13c] sm:$0xf]
      %v548 = vld [vmem:[%s1 + $0x140] sm:$0xf]
      %v549 = vld [vmem:[%s1 + $0x144] sm:$0xf]
      %v550 = vld [vmem:[%s1 + $0x148] sm:$0xf]
      %v551 = vld [vmem:[%s1 + $0x14c] sm:$0xf]
      %v552 = vld [vmem:[%s1 + $0x150] sm:$0xf]
      %v553 = vld [vmem:[%s1 + $0x154] sm:$0xf]
      %v554 = vld [vmem:[%s1 + $0x158] sm:$0xf]
      %v555 = vld [vmem:[%s1 + $0x15c] sm:$0xf]
      %v556 = vld [vmem:[%s1 + $0x160] sm:$0xf]
      %v557 = vld [vmem:[%s1 + $0x164] sm:$0xf]
      %v558 = vld [vmem:[%s1 + $0x168] sm:$0xf]
      %v559 = vld [vmem:[%s1 + $0x16c] sm:$0xf]
      %v560 = vld [vmem:[%s1 + $0x170] sm:$0xf]
      %v561 = vld [vmem:[%s1 + $0x174] sm:$0xf]
      %v562 = vld [vmem:[%s1 + $0x178] sm:$0xf]
      %v563 = vld [vmem:[%s1 + $0x17c] sm:$0xf]
      %v564 = vld [vmem:[%s1 + $0x180] sm:$0xf]
      %v565 = vld [vmem:[%s1 + $0x184] sm:$0xf]
      %v566 = vld [vmem:[%s1 + $0x188] sm:$0xf]
      %v567 = vld [vmem:[%s1 + $0x18c] sm:$0xf]
      %v568 = vld [vmem:[%s1 + $0x190] sm:$0xf]
      %v569 = vld [vmem:[%s1 + $0x194] sm:$0xf]
      %v570 = vld [vmem:[%s1 + $0x198] sm:$0xf]
      %v571 = vld [vmem:[%s1 + $0x19c] sm:$0xf]
      %v572 = vld [vmem:[%s1 + $0x1a0] sm:$0xf]
      %v573 = vld [vmem:[%s1 + $0x1a4] sm:$0xf]
      %v574 = vld [vmem:[%s1 + $0x1a8] sm:$0xf]
      %v575 = vld [vmem:[%s1 + $0x1ac] sm:$0xf]
      %v576 = vld [vmem:[%s1 + $0x1b0] sm:$0xf]
      %v577 = vld [vmem:[%s1 + $0x1b4] sm:$0xf]
      %v578 = vld [vmem:[%s1 + $0x1b8] sm:$0xf]
      %v579 = vld [vmem:[%s1 + $0x1bc] sm:$0xf]
      %v580 = vld [vmem:[%s1 + $0x1c0] sm:$0xf]
      %v581 = vld [vmem:[%s1 + $0x1c4] sm:$0xf]
      %v582 = vld [vmem:[%s1 + $0x1c8] sm:$0xf]
      %v583 = vld [vmem:[%s1 + $0x1cc] sm:$0xf]
      %v584 = vld [vmem:[%s1 + $0x1d0] sm:$0xf]
      %v585 = vld [vmem:[%s1 + $0x1d4] sm:$0xf]
      %v586 = vld [vmem:[%s1 + $0x1d8] sm:$0xf]
      %v587 = vld [vmem:[%s1 + $0x1dc] sm:$0xf]
      %v588 = vld [vmem:[%s1 + $0x1e0] sm:$0xf]
      %v589 = vld [vmem:[%s1 + $0x1e4] sm:$0xf]
      %v590 = vld [vmem:[%s1 + $0x1e8] sm:$0xf]
      %v591 = vld [vmem:[%s1 + $0x1ec] sm:$0xf]
      %v592 = vld [vmem:[%s1 + $0x1f0] sm:$0xf]
      %v593 = vld [vmem:[%s1 + $0x1f4] sm:$0xf]
      %v594 = vld [vmem:[%s1 + $0x1f8] sm:$0xf]
      %v595 = vld [vmem:[%s1 + $0x1fc] sm:$0xf]
      %v596 = vld [vmem:[%s1 + $0x200] sm:$0xf]
      %v597 = vld [vmem:[%s1 + $0x204] sm:$0xf]
      %v598 = vld [vmem:[%s1 + $0x208] sm:$0xf]
      %v599 = vld [vmem:[%s1 + $0x20c] sm:$0xf]
      %v600 = vld [vmem:[%s1 + $0x210] sm:$0xf]
      %v601 = vld [vmem:[%s1 + $0x214] sm:$0xf]
      %v602 = vld [vmem:[%s1 + $0x218] sm:$0xf]
      %v603 = vld [vmem:[%s1 + $0x21c] sm:$0xf]
      %v604 = vld [vmem:[%s1 + $0x220] sm:$0xf]
      %v605 = vld [vmem:[%s1 + $0x224] sm:$0xf]
      %v606 = vld [vmem:[%s1 + $0x228] sm:$0xf]
      %v607 = vld [vmem:[%s1 + $0x22c] sm:$0xf]
      %v608 = vld [vmem:[%s1 + $0x230] sm:$0xf]
      %v609 = vld [vmem:[%s1 + $0x234] sm:$0xf]
      %v610 = vld [vmem:[%s1 + $0x238] sm:$0xf]
      %v611 = vld [vmem:[%s1 + $0x23c] sm:$0xf]
      %v612 = vld [vmem:[%s298] sm:$0x1]
      %v614 = vperm.slane %v612, 0
      %v776 = vunpack.c.l.b16 %v308
      %v777 = vunpack.c.h.b16 %v308
      %v778 = vunpack.c.l.b16 %v309
      %v779 = vunpack.c.h.b16 %v309
      %v780 = vunpack.c.l.b16 %v310
      %v781 = vunpack.c.h.b16 %v310
      %v782 = vunpack.c.l.b16 %v311
      %v783 = vunpack.c.h.b16 %v311
      %v784 = vunpack.c.l.b16 %v312
      %v785 = vunpack.c.l.b16 %v313
      %v786 = vunpack.c.h.b16 %v313
      %v787 = vunpack.c.l.b16 %v314
      %v788 = vunpack.c.h.b16 %v314
      %v789 = vunpack.c.l.b16 %v315
      %v790 = vunpack.c.h.b16 %v315
      %v791 = vunpack.c.l.b16 %v316
      %v792 = vunpack.c.h.b16 %v316
      %v793 = vunpack.c.l.b16 %v317
      %v794 = vunpack.c.l.b16 %v318
      %v795 = vunpack.c.h.b16 %v318
      %v796 = vunpack.c.l.b16 %v319
      %v797 = vunpack.c.h.b16 %v319
      %v798 = vunpack.c.l.b16 %v320
      %v799 = vunpack.c.h.b16 %v320
      %v800 = vunpack.c.l.b16 %v321
      %v801 = vunpack.c.h.b16 %v321
      %v802 = vunpack.c.l.b16 %v322
      %v803 = vunpack.c.l.b16 %v323
      %v804 = vunpack.c.h.b16 %v323
      %v805 = vunpack.c.l.b16 %v324
      %v806 = vunpack.c.h.b16 %v324
      %v807 = vunpack.c.l.b16 %v325
      %v808 = vunpack.c.h.b16 %v325
      %v809 = vunpack.c.l.b16 %v326
      %v810 = vunpack.c.h.b16 %v326
      %v811 = vunpack.c.l.b16 %v327
      %v812 = vunpack.c.l.b16 %v328
      %v813 = vunpack.c.h.b16 %v328
      %v814 = vunpack.c.l.b16 %v329
      %v815 = vunpack.c.h.b16 %v329
      %v816 = vunpack.c.l.b16 %v330
      %v817 = vunpack.c.h.b16 %v330
      %v818 = vunpack.c.l.b16 %v331
      %v819 = vunpack.c.h.b16 %v331
      %v820 = vunpack.c.l.b16 %v332
      %v821 = vunpack.c.l.b16 %v333
      %v822 = vunpack.c.h.b16 %v333
      %v823 = vunpack.c.l.b16 %v334
      %v824 = vunpack.c.h.b16 %v334
      %v825 = vunpack.c.l.b16 %v335
      %v826 = vunpack.c.h.b16 %v335
      %v827 = vunpack.c.l.b16 %v336
      %v828 = vunpack.c.h.b16 %v336
      %v829 = vunpack.c.l.b16 %v337
      %v830 = vunpack.c.l.b16 %v338
      %v831 = vunpack.c.h.b16 %v338
      %v832 = vunpack.c.l.b16 %v339
      %v833 = vunpack.c.h.b16 %v339
      %v834 = vunpack.c.l.b16 %v340
      %v835 = vunpack.c.h.b16 %v340
      %v836 = vunpack.c.l.b16 %v341
      %v837 = vunpack.c.h.b16 %v341
      %v838 = vunpack.c.l.b16 %v342
      %v839 = vunpack.c.l.b16 %v343
      %v840 = vunpack.c.h.b16 %v343
      %v841 = vunpack.c.l.b16 %v344
      %v842 = vunpack.c.h.b16 %v344
      %v843 = vunpack.c.l.b16 %v345
      %v844 = vunpack.c.h.b16 %v345
      %v845 = vunpack.c.l.b16 %v346
      %v846 = vunpack.c.h.b16 %v346
      %v847 = vunpack.c.l.b16 %v347
      %v848 = vunpack.c.l.b16 %v348
      %v849 = vunpack.c.h.b16 %v348
      %v850 = vunpack.c.l.b16 %v349
      %v851 = vunpack.c.h.b16 %v349
      %v852 = vunpack.c.l.b16 %v350
      %v853 = vunpack.c.h.b16 %v350
      %v854 = vunpack.c.l.b16 %v351
      %v855 = vunpack.c.h.b16 %v351
      %v856 = vunpack.c.l.b16 %v352
      %v857 = vunpack.c.l.b16 %v353
      %v858 = vunpack.c.h.b16 %v353
      %v859 = vunpack.c.l.b16 %v354
      %v860 = vunpack.c.h.b16 %v354
      %v861 = vunpack.c.l.b16 %v355
      %v862 = vunpack.c.h.b16 %v355
      %v863 = vunpack.c.l.b16 %v356
      %v864 = vunpack.c.h.b16 %v356
      %v865 = vunpack.c.l.b16 %v357
      %v866 = vunpack.c.l.b16 %v358
      %v867 = vunpack.c.h.b16 %v358
      %v868 = vunpack.c.l.b16 %v359
      %v869 = vunpack.c.h.b16 %v359
      %v870 = vunpack.c.l.b16 %v360
      %v871 = vunpack.c.h.b16 %v360
      %v872 = vunpack.c.l.b16 %v361
      %v873 = vunpack.c.h.b16 %v361
      %v874 = vunpack.c.l.b16 %v362
      %v875 = vunpack.c.l.b16 %v363
      %v876 = vunpack.c.h.b16 %v363
      %v877 = vunpack.c.l.b16 %v364
      %v878 = vunpack.c.h.b16 %v364
      %v879 = vunpack.c.l.b16 %v365
      %v880 = vunpack.c.h.b16 %v365
      %v881 = vunpack.c.l.b16 %v366
      %v882 = vunpack.c.h.b16 %v366
      %v883 = vunpack.c.l.b16 %v367
      %v884 = vunpack.c.l.b16 %v368
      %v885 = vunpack.c.h.b16 %v368
      %v886 = vunpack.c.l.b16 %v369
      %v887 = vunpack.c.h.b16 %v369
      %v888 = vunpack.c.l.b16 %v370
      %v889 = vunpack.c.h.b16 %v370
      %v890 = vunpack.c.l.b16 %v371
      %v891 = vunpack.c.h.b16 %v371
      %v892 = vunpack.c.l.b16 %v372
      %v893 = vunpack.c.l.b16 %v373
      %v894 = vunpack.c.h.b16 %v373
      %v895 = vunpack.c.l.b16 %v374
      %v896 = vunpack.c.h.b16 %v374
      %v897 = vunpack.c.l.b16 %v375
      %v898 = vunpack.c.h.b16 %v375
      %v899 = vunpack.c.l.b16 %v376
      %v900 = vunpack.c.h.b16 %v376
      %v901 = vunpack.c.l.b16 %v377
      %v902 = vunpack.c.l.b16 %v378
      %v903 = vunpack.c.h.b16 %v378
      %v904 = vunpack.c.l.b16 %v379
      %v905 = vunpack.c.h.b16 %v379
      %v906 = vunpack.c.l.b16 %v380
      %v907 = vunpack.c.h.b16 %v380
      %v908 = vunpack.c.l.b16 %v381
      %v909 = vunpack.c.h.b16 %v381
      %v910 = vunpack.c.l.b16 %v382
      %v911 = vunpack.c.l.b16 %v383
      %v912 = vunpack.c.h.b16 %v383
      %v913 = vunpack.c.l.b16 %v384
      %v914 = vunpack.c.h.b16 %v384
      %v915 = vunpack.c.l.b16 %v385
      %v916 = vunpack.c.h.b16 %v385
      %v917 = vunpack.c.l.b16 %v386
      %v918 = vunpack.c.h.b16 %v386
      %v919 = vunpack.c.l.b16 %v387
      %v920 = vunpack.c.l.b16 %v388
      %v921 = vunpack.c.h.b16 %v388
      %v922 = vunpack.c.l.b16 %v389
      %v923 = vunpack.c.h.b16 %v389
      %v924 = vunpack.c.l.b16 %v390
      %v925 = vunpack.c.h.b16 %v390
      %v926 = vunpack.c.l.b16 %v391
      %v927 = vunpack.c.h.b16 %v391
      %v928 = vunpack.c.l.b16 %v392
      %v929 = vunpack.c.l.b16 %v393
      %v930 = vunpack.c.h.b16 %v393
      %v931 = vunpack.c.l.b16 %v394
      %v932 = vunpack.c.h.b16 %v394
      %v933 = vunpack.c.l.b16 %v395
      %v934 = vunpack.c.h.b16 %v395
      %v935 = vunpack.c.l.b16 %v396
      %v936 = vunpack.c.h.b16 %v396
      %v937 = vunpack.c.l.b16 %v397
      %v938 = vunpack.c.l.b16 %v398
      %v939 = vunpack.c.h.b16 %v398
      %v940 = vunpack.c.l.b16 %v399
      %v941 = vunpack.c.h.b16 %v399
      %v942 = vunpack.c.l.b16 %v400
      %v943 = vunpack.c.h.b16 %v400
      %v944 = vunpack.c.l.b16 %v401
      %v945 = vunpack.c.h.b16 %v401
      %v946 = vunpack.c.l.b16 %v402
      %v947 = vunpack.c.l.b16 %v403
      %v948 = vunpack.c.h.b16 %v403
      %v949 = vunpack.c.l.b16 %v404
      %v950 = vunpack.c.h.b16 %v404
      %v951 = vunpack.c.l.b16 %v405
      %v952 = vunpack.c.h.b16 %v405
      %v953 = vunpack.c.l.b16 %v406
      %v954 = vunpack.c.h.b16 %v406
      %v955 = vunpack.c.l.b16 %v407
      %v956 = vunpack.c.l.b16 %v408
      %v957 = vunpack.c.h.b16 %v408
      %v958 = vunpack.c.l.b16 %v409
      %v959 = vunpack.c.h.b16 %v409
      %v960 = vunpack.c.l.b16 %v410
      %v961 = vunpack.c.h.b16 %v410
      %v962 = vunpack.c.l.b16 %v411
      %v963 = vunpack.c.h.b16 %v411
      %v964 = vunpack.c.l.b16 %v412
      %v965 = vunpack.c.l.b16 %v413
      %v966 = vunpack.c.h.b16 %v413
      %v967 = vunpack.c.l.b16 %v414
      %v968 = vunpack.c.h.b16 %v414
      %v969 = vunpack.c.l.b16 %v415
      %v970 = vunpack.c.h.b16 %v415
      %v971 = vunpack.c.l.b16 %v416
      %v972 = vunpack.c.h.b16 %v416
      %v973 = vunpack.c.l.b16 %v417
      %v974 = vunpack.c.l.b16 %v418
      %v975 = vunpack.c.h.b16 %v418
      %v976 = vunpack.c.l.b16 %v419
      %v977 = vunpack.c.h.b16 %v419
      %v978 = vunpack.c.l.b16 %v420
      %v979 = vunpack.c.h.b16 %v420
      %v980 = vunpack.c.l.b16 %v421
      %v981 = vunpack.c.h.b16 %v421
      %v982 = vunpack.c.l.b16 %v422
      %v983 = vunpack.c.l.b16 %v423
      %v984 = vunpack.c.h.b16 %v423
      %v985 = vunpack.c.l.b16 %v424
      %v986 = vunpack.c.h.b16 %v424
      %v987 = vunpack.c.l.b16 %v425
      %v988 = vunpack.c.h.b16 %v425
      %v989 = vunpack.c.l.b16 %v426
      %v990 = vunpack.c.h.b16 %v426
      %v991 = vunpack.c.l.b16 %v427
      %v992 = vunpack.c.l.b16 %v428
      %v993 = vunpack.c.h.b16 %v428
      %v994 = vunpack.c.l.b16 %v429
      %v995 = vunpack.c.h.b16 %v429
      %v996 = vunpack.c.l.b16 %v430
      %v997 = vunpack.c.h.b16 %v430
      %v998 = vunpack.c.l.b16 %v431
      %v999 = vunpack.c.h.b16 %v431
      %v1000 = vunpack.c.l.b16 %v432
      %v1001 = vunpack.c.l.b16 %v433
      %v1002 = vunpack.c.h.b16 %v433
      %v1003 = vunpack.c.l.b16 %v434
      %v1004 = vunpack.c.h.b16 %v434
      %v1005 = vunpack.c.l.b16 %v435
      %v1006 = vunpack.c.h.b16 %v435
      %v1007 = vunpack.c.l.b16 %v436
      %v1008 = vunpack.c.h.b16 %v436
      %v1009 = vunpack.c.l.b16 %v437
      %v1010 = vunpack.c.l.b16 %v438
      %v1011 = vunpack.c.h.b16 %v438
      %v1012 = vunpack.c.l.b16 %v439
      %v1013 = vunpack.c.h.b16 %v439
      %v1014 = vunpack.c.l.b16 %v440
      %v1015 = vunpack.c.h.b16 %v440
      %v1016 = vunpack.c.l.b16 %v441
      %v1017 = vunpack.c.h.b16 %v441
      %v1018 = vunpack.c.l.b16 %v442
      %v1019 = vunpack.c.l.b16 %v443
      %v1020 = vunpack.c.h.b16 %v443
      %v1021 = vunpack.c.l.b16 %v444
      %v1022 = vunpack.c.h.b16 %v444
      %v1023 = vunpack.c.l.b16 %v445
      %v1024 = vunpack.c.h.b16 %v445
      %v1025 = vunpack.c.l.b16 %v446
      %v1026 = vunpack.c.h.b16 %v446
      %v1027 = vunpack.c.l.b16 %v447
      %v1028 = vunpack.c.l.b16 %v448
      %v1029 = vunpack.c.h.b16 %v448
      %v1030 = vunpack.c.l.b16 %v449
      %v1031 = vunpack.c.h.b16 %v449
      %v1032 = vunpack.c.l.b16 %v450
      %v1033 = vunpack.c.h.b16 %v450
      %v1034 = vunpack.c.l.b16 %v451
      %v1035 = vunpack.c.h.b16 %v451
      %v1036 = vunpack.c.l.b16 %v452
      %v1037 = vunpack.c.l.b16 %v453
      %v1038 = vunpack.c.h.b16 %v453
      %v1039 = vunpack.c.l.b16 %v454
      %v1040 = vunpack.c.h.b16 %v454
      %v1041 = vunpack.c.l.b16 %v455
      %v1042 = vunpack.c.h.b16 %v455
      %v1043 = vunpack.c.l.b16 %v456
      %v1044 = vunpack.c.h.b16 %v456
      %v1045 = vunpack.c.l.b16 %v457
      %v1046 = vunpack.c.l.b16 %v458
      %v1047 = vunpack.c.h.b16 %v458
      %v1048 = vunpack.c.l.b16 %v459
      %v1049 = vunpack.c.h.b16 %v459
      %v1050 = vunpack.c.l.b16 %v460
      %v1051 = vunpack.c.h.b16 %v460
      %v1052 = vunpack.c.l.b16 %v461
      %v1053 = vunpack.c.h.b16 %v461
      %v1054 = vunpack.c.l.b16 %v462
      %v1055 = vunpack.c.l.b16 %v463
      %v1056 = vunpack.c.h.b16 %v463
      %v1057 = vunpack.c.l.b16 %v464
      %v1058 = vunpack.c.h.b16 %v464
      %v1059 = vunpack.c.l.b16 %v465
      %v1060 = vunpack.c.h.b16 %v465
      %v1061 = vunpack.c.l.b16 %v466
      %v1062 = vunpack.c.h.b16 %v466
      %v1063 = vunpack.c.l.b16 %v467
      %v1064 = vpack.c.b16 %v785, %v776
      %v1065 = vpack.c.b16 %v786, %v777
      %v1066 = vpack.c.b16 %v787, %v778
      %v1067 = vpack.c.b16 %v788, %v779
      %v1068 = vpack.c.b16 %v789, %v780
      %v1069 = vpack.c.b16 %v790, %v781
      %v1070 = vpack.c.b16 %v791, %v782
      %v1071 = vpack.c.b16 %v792, %v783
      %v1072 = vpack.c.b16 %v793, %v784
      %v1073 = vpack.c.b16 %v803, %v794
      %v1074 = vpack.c.b16 %v804, %v795
      %v1075 = vpack.c.b16 %v805, %v796
      %v1076 = vpack.c.b16 %v806, %v797
      %v1077 = vpack.c.b16 %v807, %v798
      %v1078 = vpack.c.b16 %v808, %v799
      %v1079 = vpack.c.b16 %v809, %v800
      %v1080 = vpack.c.b16 %v810, %v801
      %v1081 = vpack.c.b16 %v811, %v802
      %v1082 = vpack.c.b16 %v821, %v812
      %v1083 = vpack.c.b16 %v822, %v813
      %v1084 = vpack.c.b16 %v823, %v814
      %v1085 = vpack.c.b16 %v824, %v815
      %v1086 = vpack.c.b16 %v825, %v816
      %v1087 = vpack.c.b16 %v826, %v817
      %v1088 = vpack.c.b16 %v827, %v818
      %v1089 = vpack.c.b16 %v828, %v819
      %v1090 = vpack.c.b16 %v829, %v820
      %v1091 = vpack.c.b16 %v839, %v830
      %v1092 = vpack.c.b16 %v840, %v831
      %v1093 = vpack.c.b16 %v841, %v832
      %v1094 = vpack.c.b16 %v842, %v833
      %v1095 = vpack.c.b16 %v843, %v834
      %v1096 = vpack.c.b16 %v844, %v835
      %v1097 = vpack.c.b16 %v845, %v836
      %v1098 = vpack.c.b16 %v846, %v837
      %v1099 = vpack.c.b16 %v847, %v838
      %v1100 = vpack.c.b16 %v857, %v848
      %v1101 = vpack.c.b16 %v858, %v849
      %v1102 = vpack.c.b16 %v859, %v850
      %v1103 = vpack.c.b16 %v860, %v851
      %v1104 = vpack.c.b16 %v861, %v852
      %v1105 = vpack.c.b16 %v862, %v853
      %v1106 = vpack.c.b16 %v863, %v854
      %v1107 = vpack.c.b16 %v864, %v855
      %v1108 = vpack.c.b16 %v865, %v856
      %v1109 = vpack.c.b16 %v875, %v866
      %v1110 = vpack.c.b16 %v876, %v867
      %v1111 = vpack.c.b16 %v877, %v868
      %v1112 = vpack.c.b16 %v878, %v869
      %v1113 = vpack.c.b16 %v879, %v870
      %v1114 = vpack.c.b16 %v880, %v871
      %v1115 = vpack.c.b16 %v881, %v872
      %v1116 = vpack.c.b16 %v882, %v873
      %v1117 = vpack.c.b16 %v883, %v874
      %v1118 = vpack.c.b16 %v893, %v884
      %v1119 = vpack.c.b16 %v894, %v885
      %v1120 = vpack.c.b16 %v895, %v886
      %v1121 = vpack.c.b16 %v896, %v887
      %v1122 = vpack.c.b16 %v897, %v888
      %v1123 = vpack.c.b16 %v898, %v889
      %v1124 = vpack.c.b16 %v899, %v890
      %v1125 = vpack.c.b16 %v900, %v891
      %v1126 = vpack.c.b16 %v901, %v892
      %v1127 = vpack.c.b16 %v911, %v902
      %v1128 = vpack.c.b16 %v912, %v903
      %v1129 = vpack.c.b16 %v913, %v904
      %v1130 = vpack.c.b16 %v914, %v905
      %v1131 = vpack.c.b16 %v915, %v906
      %v1132 = vpack.c.b16 %v916, %v907
      %v1133 = vpack.c.b16 %v917, %v908
      %v1134 = vpack.c.b16 %v918, %v909
      %v1135 = vpack.c.b16 %v919, %v910
      %v1136 = vpack.c.b16 %v929, %v920
      %v1137 = vpack.c.b16 %v930, %v921
      %v1138 = vpack.c.b16 %v931, %v922
      %v1139 = vpack.c.b16 %v932, %v923
      %v1140 = vpack.c.b16 %v933, %v924
      %v1141 = vpack.c.b16 %v934, %v925
      %v1142 = vpack.c.b16 %v935, %v926
      %v1143 = vpack.c.b16 %v936, %v927
      %v1144 = vpack.c.b16 %v937, %v928
      %v1145 = vpack.c.b16 %v947, %v938
      %v1146 = vpack.c.b16 %v948, %v939
      %v1147 = vpack.c.b16 %v949, %v940
      %v1148 = vpack.c.b16 %v950, %v941
      %v1149 = vpack.c.b16 %v951, %v942
      %v1150 = vpack.c.b16 %v952, %v943
      %v1151 = vpack.c.b16 %v953, %v944
      %v1152 = vpack.c.b16 %v954, %v945
      %v1153 = vpack.c.b16 %v955, %v946
      %v1154 = vpack.c.b16 %v965, %v956
      %v1155 = vpack.c.b16 %v966, %v957
      %v1156 = vpack.c.b16 %v967, %v958
      %v1157 = vpack.c.b16 %v968, %v959
      %v1158 = vpack.c.b16 %v969, %v960
      %v1159 = vpack.c.b16 %v970, %v961
      %v1160 = vpack.c.b16 %v971, %v962
      %v1161 = vpack.c.b16 %v972, %v963
      %v1162 = vpack.c.b16 %v973, %v964
      %v1163 = vpack.c.b16 %v983, %v974
      %v1164 = vpack.c.b16 %v984, %v975
      %v1165 = vpack.c.b16 %v985, %v976
      %v1166 = vpack.c.b16 %v986, %v977
      %v1167 = vpack.c.b16 %v987, %v978
      %v1168 = vpack.c.b16 %v988, %v979
      %v1169 = vpack.c.b16 %v989, %v980
      %v1170 = vpack.c.b16 %v990, %v981
      %v1171 = vpack.c.b16 %v991, %v982
      %v1172 = vpack.c.b16 %v1001, %v992
      %v1173 = vpack.c.b16 %v1002, %v993
      %v1174 = vpack.c.b16 %v1003, %v994
      %v1175 = vpack.c.b16 %v1004, %v995
      %v1176 = vpack.c.b16 %v1005, %v996
      %v1177 = vpack.c.b16 %v1006, %v997
      %v1178 = vpack.c.b16 %v1007, %v998
      %v1179 = vpack.c.b16 %v1008, %v999
      %v1180 = vpack.c.b16 %v1009, %v1000
      %v1181 = vpack.c.b16 %v1019, %v1010
      %v1182 = vpack.c.b16 %v1020, %v1011
      %v1183 = vpack.c.b16 %v1021, %v1012
      %v1184 = vpack.c.b16 %v1022, %v1013
      %v1185 = vpack.c.b16 %v1023, %v1014
      %v1186 = vpack.c.b16 %v1024, %v1015
      %v1187 = vpack.c.b16 %v1025, %v1016
      %v1188 = vpack.c.b16 %v1026, %v1017
      %v1189 = vpack.c.b16 %v1027, %v1018
      %v1190 = vpack.c.b16 %v1037, %v1028
      %v1191 = vpack.c.b16 %v1038, %v1029
      %v1192 = vpack.c.b16 %v1039, %v1030
      %v1193 = vpack.c.b16 %v1040, %v1031
      %v1194 = vpack.c.b16 %v1041, %v1032
      %v1195 = vpack.c.b16 %v1042, %v1033
      %v1196 = vpack.c.b16 %v1043, %v1034
      %v1197 = vpack.c.b16 %v1044, %v1035
      %v1198 = vpack.c.b16 %v1045, %v1036
      %v1199 = vpack.c.b16 %v1055, %v1046
      %v1200 = vpack.c.b16 %v1056, %v1047
      %v1201 = vpack.c.b16 %v1057, %v1048
      %v1202 = vpack.c.b16 %v1058, %v1049
      %v1203 = vpack.c.b16 %v1059, %v1050
      %v1204 = vpack.c.b16 %v1060, %v1051
      %v1205 = vpack.c.b16 %v1061, %v1052
      %v1206 = vpack.c.b16 %v1062, %v1053
      %v1207 = vpack.c.b16 %v1063, %v1054
      %v1496 = vunpack.c.l.b16 %v468
      %v1497 = vunpack.c.l.b16 %v469
      %v1498 = vunpack.c.l.b16 %v470
      %v1499 = vunpack.c.l.b16 %v471
      %v1500 = vunpack.c.l.b16 %v472
      %v1501 = vunpack.c.l.b16 %v473
      %v1502 = vunpack.c.l.b16 %v474
      %v1503 = vunpack.c.l.b16 %v475
      %v1504 = vunpack.c.l.b16 %v476
      %v1505 = vunpack.c.l.b16 %v477
      %v1506 = vunpack.c.l.b16 %v478
      %v1507 = vunpack.c.l.b16 %v479
      %v1508 = vunpack.c.l.b16 %v480
      %v1509 = vunpack.c.l.b16 %v481
      %v1510 = vunpack.c.l.b16 %v482
      %v1511 = vunpack.c.l.b16 %v483
      %v1512 = vunpack.c.l.b16 %v484
      %v1513 = vunpack.c.l.b16 %v485
      %v1514 = vunpack.c.l.b16 %v486
      %v1515 = vunpack.c.l.b16 %v487
      %v1516 = vunpack.c.l.b16 %v488
      %v1517 = vunpack.c.l.b16 %v489
      %v1518 = vunpack.c.l.b16 %v490
      %v1519 = vunpack.c.l.b16 %v491
      %v1520 = vunpack.c.l.b16 %v492
      %v1521 = vunpack.c.l.b16 %v493
      %v1522 = vunpack.c.l.b16 %v494
      %v1523 = vunpack.c.l.b16 %v495
      %v1524 = vunpack.c.l.b16 %v496
      %v1525 = vunpack.c.l.b16 %v497
      %v1526 = vunpack.c.l.b16 %v498
      %v1527 = vunpack.c.l.b16 %v499
      %v1528 = vunpack.c.l.b16 %v500
      %v1529 = vunpack.c.l.b16 %v501
      %v1530 = vunpack.c.l.b16 %v502
      %v1531 = vunpack.c.l.b16 %v503
      %v1532 = vunpack.c.l.b16 %v504
      %v1533 = vunpack.c.l.b16 %v505
      %v1534 = vunpack.c.l.b16 %v506
      %v1535 = vunpack.c.l.b16 %v507
      %v1536 = vunpack.c.l.b16 %v508
      %v1537 = vunpack.c.l.b16 %v509
      %v1538 = vunpack.c.l.b16 %v510
      %v1539 = vunpack.c.l.b16 %v511
      %v1540 = vunpack.c.l.b16 %v512
      %v1541 = vunpack.c.l.b16 %v513
      %v1542 = vunpack.c.l.b16 %v514
      %v1543 = vunpack.c.l.b16 %v515
      %v1544 = vunpack.c.l.b16 %v516
      %v1545 = vunpack.c.l.b16 %v517
      %v1546 = vunpack.c.l.b16 %v518
      %v1547 = vunpack.c.l.b16 %v519
      %v1548 = vunpack.c.l.b16 %v520
      %v1549 = vunpack.c.l.b16 %v521
      %v1550 = vunpack.c.l.b16 %v522
      %v1551 = vunpack.c.l.b16 %v523
      %v1552 = vunpack.c.l.b16 %v524
      %v1553 = vunpack.c.l.b16 %v525
      %v1554 = vunpack.c.l.b16 %v526
      %v1555 = vunpack.c.l.b16 %v527
      %v1556 = vunpack.c.l.b16 %v528
      %v1557 = vunpack.c.l.b16 %v529
      %v1558 = vunpack.c.l.b16 %v530
      %v1559 = vunpack.c.l.b16 %v531
      %v1560 = vunpack.c.l.b16 %v532
      %v1561 = vunpack.c.l.b16 %v533
      %v1562 = vunpack.c.l.b16 %v534
      %v1563 = vunpack.c.l.b16 %v535
      %v1564 = vunpack.c.l.b16 %v536
      %v1565 = vunpack.c.l.b16 %v537
      %v1566 = vunpack.c.l.b16 %v538
      %v1567 = vunpack.c.l.b16 %v539
      %v1568 = vunpack.c.l.b16 %v540
      %v1569 = vunpack.c.l.b16 %v541
      %v1570 = vunpack.c.l.b16 %v542
      %v1571 = vunpack.c.l.b16 %v543
      %v1572 = vunpack.c.l.b16 %v544
      %v1573 = vunpack.c.l.b16 %v545
      %v1574 = vunpack.c.l.b16 %v546
      %v1575 = vunpack.c.l.b16 %v547
      %v1576 = vunpack.c.l.b16 %v548
      %v1577 = vunpack.c.l.b16 %v549
      %v1578 = vunpack.c.l.b16 %v550
      %v1579 = vunpack.c.l.b16 %v551
      %v1580 = vunpack.c.l.b16 %v552
      %v1581 = vunpack.c.l.b16 %v553
      %v1582 = vunpack.c.l.b16 %v554
      %v1583 = vunpack.c.l.b16 %v555
      %v1584 = vunpack.c.l.b16 %v556
      %v1585 = vunpack.c.l.b16 %v557
      %v1586 = vunpack.c.l.b16 %v558
      %v1587 = vunpack.c.l.b16 %v559
      %v1588 = vunpack.c.l.b16 %v560
      %v1589 = vunpack.c.l.b16 %v561
      %v1590 = vunpack.c.l.b16 %v562
      %v1591 = vunpack.c.l.b16 %v563
      %v1592 = vunpack.c.l.b16 %v564
      %v1593 = vunpack.c.l.b16 %v565
      %v1594 = vunpack.c.l.b16 %v566
      %v1595 = vunpack.c.l.b16 %v567
      %v1596 = vunpack.c.l.b16 %v568
      %v1597 = vunpack.c.l.b16 %v569
      %v1598 = vunpack.c.l.b16 %v570
      %v1599 = vunpack.c.l.b16 %v571
      %v1600 = vunpack.c.l.b16 %v572
      %v1601 = vunpack.c.l.b16 %v573
      %v1602 = vunpack.c.l.b16 %v574
      %v1603 = vunpack.c.l.b16 %v575
      %v1604 = vunpack.c.l.b16 %v576
      %v1605 = vunpack.c.l.b16 %v577
      %v1606 = vunpack.c.l.b16 %v578
      %v1607 = vunpack.c.l.b16 %v579
      %v1608 = vunpack.c.l.b16 %v580
      %v1609 = vunpack.c.l.b16 %v581
      %v1610 = vunpack.c.l.b16 %v582
      %v1611 = vunpack.c.l.b16 %v583
      %v1612 = vunpack.c.l.b16 %v584
      %v1613 = vunpack.c.l.b16 %v585
      %v1614 = vunpack.c.l.b16 %v586
      %v1615 = vunpack.c.l.b16 %v587
      %v1616 = vunpack.c.l.b16 %v588
      %v1617 = vunpack.c.l.b16 %v589
      %v1618 = vunpack.c.l.b16 %v590
      %v1619 = vunpack.c.l.b16 %v591
      %v1620 = vunpack.c.l.b16 %v592
      %v1621 = vunpack.c.l.b16 %v593
      %v1622 = vunpack.c.l.b16 %v594
      %v1623 = vunpack.c.l.b16 %v595
      %v1624 = vunpack.c.l.b16 %v596
      %v1625 = vunpack.c.l.b16 %v597
      %v1626 = vunpack.c.l.b16 %v598
      %v1627 = vunpack.c.l.b16 %v599
      %v1628 = vunpack.c.l.b16 %v600
      %v1629 = vunpack.c.l.b16 %v601
      %v1630 = vunpack.c.l.b16 %v602
      %v1631 = vunpack.c.l.b16 %v603
      %v1632 = vunpack.c.l.b16 %v604
      %v1633 = vunpack.c.l.b16 %v605
      %v1634 = vunpack.c.l.b16 %v606
      %v1635 = vunpack.c.l.b16 %v607
      %v1636 = vunpack.c.l.b16 %v608
      %v1637 = vunpack.c.l.b16 %v609
      %v1638 = vunpack.c.l.b16 %v610
      %v1639 = vunpack.c.l.b16 %v611
      %v1640 = vpack.c.b16 %v1497, %v1496
      %v1641 = vpack.c.b16 %v1499, %v1498
      %v1642 = vpack.c.b16 %v1501, %v1500
      %v1643 = vpack.c.b16 %v1503, %v1502
      %v1644 = vpack.c.b16 %v1505, %v1504
      %v1645 = vpack.c.b16 %v1507, %v1506
      %v1646 = vpack.c.b16 %v1509, %v1508
      %v1647 = vpack.c.b16 %v1511, %v1510
      %v1648 = vpack.c.b16 %v1513, %v1512
      %v1649 = vpack.c.b16 %v1515, %v1514
      %v1650 = vpack.c.b16 %v1517, %v1516
      %v1651 = vpack.c.b16 %v1519, %v1518
      %v1652 = vpack.c.b16 %v1521, %v1520
      %v1653 = vpack.c.b16 %v1523, %v1522
      %v1654 = vpack.c.b16 %v1525, %v1524
      %v1655 = vpack.c.b16 %v1527, %v1526
      %v1656 = vpack.c.b16 %v1529, %v1528
      %v1657 = vpack.c.b16 %v1531, %v1530
      %v1658 = vpack.c.b16 %v1533, %v1532
      %v1659 = vpack.c.b16 %v1535, %v1534
      %v1660 = vpack.c.b16 %v1537, %v1536
      %v1661 = vpack.c.b16 %v1539, %v1538
      %v1662 = vpack.c.b16 %v1541, %v1540
      %v1663 = vpack.c.b16 %v1543, %v1542
      %v1664 = vpack.c.b16 %v1545, %v1544
      %v1665 = vpack.c.b16 %v1547, %v1546
      %v1666 = vpack.c.b16 %v1549, %v1548
      %v1667 = vpack.c.b16 %v1551, %v1550
      %v1668 = vpack.c.b16 %v1553, %v1552
      %v1669 = vpack.c.b16 %v1555, %v1554
      %v1670 = vpack.c.b16 %v1557, %v1556
      %v1671 = vpack.c.b16 %v1559, %v1558
      %v1672 = vpack.c.b16 %v1561, %v1560
      %v1673 = vpack.c.b16 %v1563, %v1562
      %v1674 = vpack.c.b16 %v1565, %v1564
      %v1675 = vpack.c.b16 %v1567, %v1566
      %v1676 = vpack.c.b16 %v1569, %v1568
      %v1677 = vpack.c.b16 %v1571, %v1570
      %v1678 = vpack.c.b16 %v1573, %v1572
      %v1679 = vpack.c.b16 %v1575, %v1574
      %v1680 = vpack.c.b16 %v1577, %v1576
      %v1681 = vpack.c.b16 %v1579, %v1578
      %v1682 = vpack.c.b16 %v1581, %v1580
      %v1683 = vpack.c.b16 %v1583, %v1582
      %v1684 = vpack.c.b16 %v1585, %v1584
      %v1685 = vpack.c.b16 %v1587, %v1586
      %v1686 = vpack.c.b16 %v1589, %v1588
      %v1687 = vpack.c.b16 %v1591, %v1590
      %v1688 = vpack.c.b16 %v1593, %v1592
      %v1689 = vpack.c.b16 %v1595, %v1594
      %v1690 = vpack.c.b16 %v1597, %v1596
      %v1691 = vpack.c.b16 %v1599, %v1598
      %v1692 = vpack.c.b16 %v1601, %v1600
      %v1693 = vpack.c.b16 %v1603, %v1602
      %v1694 = vpack.c.b16 %v1605, %v1604
      %v1695 = vpack.c.b16 %v1607, %v1606
      %v1696 = vpack.c.b16 %v1609, %v1608
      %v1697 = vpack.c.b16 %v1611, %v1610
      %v1698 = vpack.c.b16 %v1613, %v1612
      %v1699 = vpack.c.b16 %v1615, %v1614
      %v1700 = vpack.c.b16 %v1617, %v1616
      %v1701 = vpack.c.b16 %v1619, %v1618
      %v1702 = vpack.c.b16 %v1621, %v1620
      %v1703 = vpack.c.b16 %v1623, %v1622
      %v1704 = vpack.c.b16 %v1625, %v1624
      %v1705 = vpack.c.b16 %v1627, %v1626
      %v1706 = vpack.c.b16 %v1629, %v1628
      %v1707 = vpack.c.b16 %v1631, %v1630
      %v1708 = vpack.c.b16 %v1633, %v1632
      %v1709 = vpack.c.b16 %v1635, %v1634
      %v1710 = vpack.c.b16 %v1637, %v1636
      %v1711 = vpack.c.b16 %v1639, %v1638
      %1784 = vmatpush.bf16.msra.mxu0 %v1647
      %1785 = vmatpush.bf16.msra.mxu0 %v1646
      %1786 = vmatpush.bf16.msra.mxu0 %v1645
      %1787 = vmatpush.bf16.msra.mxu0 %v1644
      %1788 = vmatpush.bf16.msra.mxu0 %v1643
      %1789 = vmatpush.bf16.msra.mxu0 %v1642
      %1790 = vmatpush.bf16.msra.mxu0 %v1641
      %1791 = vmatpush.bf16.msra.mxu0 %v1640
      %1792 = vmatmul.bf16.gmra.mxu0 %v1064
      %v1793 = vpop.f32.mrf.mxu0
      %v1794 = vadd.f32 %v614, %v1793
      %v1795 = vpop.f32.mrf.mxu0
      %v1796 = vadd.f32 %v614, %v1795
      %1797 = vmatmul.bf16.gmra.mxu0 %v1073
      %v1798 = vpop.f32.mrf.mxu0
      %v1799 = vadd.f32 %v614, %v1798
      %v1800 = vpop.f32.mrf.mxu0
      %v1801 = vadd.f32 %v614, %v1800
      %1802 = vmatmul.bf16.gmra.mxu0 %v1082
      %v1803 = vpop.f32.mrf.mxu0
      %v1804 = vadd.f32 %v614, %v1803
      %v1805 = vpop.f32.mrf.mxu0
      %v1806 = vadd.f32 %v614, %v1805
      %1807 = vmatmul.bf16.gmra.mxu0 %v1091
      %v1808 = vpop.f32.mrf.mxu0
      %v1809 = vadd.f32 %v614, %v1808
      %v1810 = vpop.f32.mrf.mxu0
      %v1811 = vadd.f32 %v614, %v1810
      %1812 = vmatmul.bf16.gmra.mxu0 %v1100
      %v1813 = vpop.f32.mrf.mxu0
      %v1814 = vadd.f32 %v614, %v1813
      %v1815 = vpop.f32.mrf.mxu0
      %v1816 = vadd.f32 %v614, %v1815
      %1817 = vmatmul.bf16.gmra.mxu0 %v1109
      %v1818 = vpop.f32.mrf.mxu0
      %v1819 = vadd.f32 %v614, %v1818
      %v1820 = vpop.f32.mrf.mxu0
      %v1821 = vadd.f32 %v614, %v1820
      %1822 = vmatmul.bf16.gmra.mxu0 %v1118
      %v1823 = vpop.f32.mrf.mxu0
      %v1824 = vadd.f32 %v614, %v1823
      %v1825 = vpop.f32.mrf.mxu0
      %v1826 = vadd.f32 %v614, %v1825
      %1827 = vmatmul.bf16.gmra.mxu0 %v1127
      %v1828 = vpop.f32.mrf.mxu0
      %v1829 = vadd.f32 %v614, %v1828
      %v1830 = vpop.f32.mrf.mxu0
      %v1831 = vadd.f32 %v614, %v1830
      %1832 = vmatmul.bf16.gmra.mxu0 %v1136
      %v1833 = vpop.f32.mrf.mxu0
      %v1834 = vadd.f32 %v614, %v1833
      %v1835 = vpop.f32.mrf.mxu0
      %v1836 = vadd.f32 %v614, %v1835
      %1837 = vmatmul.bf16.gmra.mxu0 %v1145
      %v1838 = vpop.f32.mrf.mxu0
      %v1839 = vadd.f32 %v614, %v1838
      %v1840 = vpop.f32.mrf.mxu0
      %v1841 = vadd.f32 %v614, %v1840
      %1842 = vmatmul.bf16.gmra.mxu0 %v1154
      %v1843 = vpop.f32.mrf.mxu0
      %v1844 = vadd.f32 %v614, %v1843
      %v1845 = vpop.f32.mrf.mxu0
      %v1846 = vadd.f32 %v614, %v1845
      %1847 = vmatmul.bf16.gmra.mxu0 %v1163
      %v1848 = vpop.f32.mrf.mxu0
      %v1849 = vadd.f32 %v614, %v1848
      %v1850 = vpop.f32.mrf.mxu0
      %v1851 = vadd.f32 %v614, %v1850
      %1852 = vmatmul.bf16.gmra.mxu0 %v1172
      %v1853 = vpop.f32.mrf.mxu0
      %v1854 = vadd.f32 %v614, %v1853
      %v1855 = vpop.f32.mrf.mxu0
      %v1856 = vadd.f32 %v614, %v1855
      %1857 = vmatmul.bf16.gmra.mxu0 %v1181
      %v1858 = vpop.f32.mrf.mxu0
      %v1859 = vadd.f32 %v614, %v1858
      %v1860 = vpop.f32.mrf.mxu0
      %v1861 = vadd.f32 %v614, %v1860
      %1862 = vmatmul.bf16.gmra.mxu0 %v1190
      %v1863 = vpop.f32.mrf.mxu0
      %v1864 = vadd.f32 %v614, %v1863
      %v1865 = vpop.f32.mrf.mxu0
      %v1866 = vadd.f32 %v614, %v1865
      %1867 = vmatmul.bf16.gmra.mxu0 %v1199
      %v1868 = vpop.f32.mrf.mxu0
      %v1869 = vadd.f32 %v614, %v1868
      %v1870 = vpop.f32.mrf.mxu0
      %v1871 = vadd.f32 %v614, %v1870
      %1872 = vdwg.mxu0
      %1873 = vmatpush.bf16.msra.mxu0 %v1655
      %1874 = vmatpush.bf16.msra.mxu0 %v1654
      %1875 = vmatpush.bf16.msra.mxu0 %v1653
      %1876 = vmatpush.bf16.msra.mxu0 %v1652
      %1877 = vmatpush.bf16.msra.mxu0 %v1651
      %1878 = vmatpush.bf16.msra.mxu0 %v1650
      %1879 = vmatpush.bf16.msra.mxu0 %v1649
      %1880 = vmatpush.bf16.msra.mxu0 %v1648
      %1881 = vmatmul.bf16.gmra.mxu0 %v1065
      %v1882 = vpop.f32.mrf.mxu0
      %v1883 = vadd.f32 %v1794, %v1882
      %v1884 = vpop.f32.mrf.mxu0
      %v1885 = vadd.f32 %v1796, %v1884
      %1886 = vmatmul.bf16.gmra.mxu0 %v1074
      %v1887 = vpop.f32.mrf.mxu0
      %v1888 = vadd.f32 %v1799, %v1887
      %v1889 = vpop.f32.mrf.mxu0
      %v1890 = vadd.f32 %v1801, %v1889
      %1891 = vmatmul.bf16.gmra.mxu0 %v1083
      %v1892 = vpop.f32.mrf.mxu0
      %v1893 = vadd.f32 %v1804, %v1892
      %v1894 = vpop.f32.mrf.mxu0
      %v1895 = vadd.f32 %v1806, %v1894
      %1896 = vmatmul.bf16.gmra.mxu0 %v1092
      %v1897 = vpop.f32.mrf.mxu0
      %v1898 = vadd.f32 %v1809, %v1897
      %v1899 = vpop.f32.mrf.mxu0
      %v1900 = vadd.f32 %v1811, %v1899
      %1901 = vmatmul.bf16.gmra.mxu0 %v1101
      %v1902 = vpop.f32.mrf.mxu0
      %v1903 = vadd.f32 %v1814, %v1902
      %v1904 = vpop.f32.mrf.mxu0
      %v1905 = vadd.f32 %v1816, %v1904
      %1906 = vmatmul.bf16.gmra.mxu0 %v1110
      %v1907 = vpop.f32.mrf.mxu0
      %v1908 = vadd.f32 %v1819, %v1907
      %v1909 = vpop.f32.mrf.mxu0
      %v1910 = vadd.f32 %v1821, %v1909
      %1911 = vmatmul.bf16.gmra.mxu0 %v1119
      %v1912 = vpop.f32.mrf.mxu0
      %v1913 = vadd.f32 %v1824, %v1912
      %v1914 = vpop.f32.mrf.mxu0
      %v1915 = vadd.f32 %v1826, %v1914
      %1916 = vmatmul.bf16.gmra.mxu0 %v1128
      %v1917 = vpop.f32.mrf.mxu0
      %v1918 = vadd.f32 %v1829, %v1917
      %v1919 = vpop.f32.mrf.mxu0
      %v1920 = vadd.f32 %v1831, %v1919
      %1921 = vmatmul.bf16.gmra.mxu0 %v1137
      %v1922 = vpop.f32.mrf.mxu0
      %v1923 = vadd.f32 %v1834, %v1922
      %v1924 = vpop.f32.mrf.mxu0
      %v1925 = vadd.f32 %v1836, %v1924
      %1926 = vmatmul.bf16.gmra.mxu0 %v1146
      %v1927 = vpop.f32.mrf.mxu0
      %v1928 = vadd.f32 %v1839, %v1927
      %v1929 = vpop.f32.mrf.mxu0
      %v1930 = vadd.f32 %v1841, %v1929
      %1931 = vmatmul.bf16.gmra.mxu0 %v1155
      %v1932 = vpop.f32.mrf.mxu0
      %v1933 = vadd.f32 %v1844, %v1932
      %v1934 = vpop.f32.mrf.mxu0
      %v1935 = vadd.f32 %v1846, %v1934
      %1936 = vmatmul.bf16.gmra.mxu0 %v1164
      %v1937 = vpop.f32.mrf.mxu0
      %v1938 = vadd.f32 %v1849, %v1937
      %v1939 = vpop.f32.mrf.mxu0
      %v1940 = vadd.f32 %v1851, %v1939
      %1941 = vmatmul.bf16.gmra.mxu0 %v1173
      %v1942 = vpop.f32.mrf.mxu0
      %v1943 = vadd.f32 %v1854, %v1942
      %v1944 = vpop.f32.mrf.mxu0
      %v1945 = vadd.f32 %v1856, %v1944
      %1946 = vmatmul.bf16.gmra.mxu0 %v1182
      %v1947 = vpop.f32.mrf.mxu0
      %v1948 = vadd.f32 %v1859, %v1947
      %v1949 = vpop.f32.mrf.mxu0
      %v1950 = vadd.f32 %v1861, %v1949
      %1951 = vmatmul.bf16.gmra.mxu0 %v1191
      %v1952 = vpop.f32.mrf.mxu0
      %v1953 = vadd.f32 %v1864, %v1952
      %v1954 = vpop.f32.mrf.mxu0
      %v1955 = vadd.f32 %v1866, %v1954
      %1956 = vmatmul.bf16.gmra.mxu0 %v1200
      %v1957 = vpop.f32.mrf.mxu0
      %v1958 = vadd.f32 %v1869, %v1957
      %v1959 = vpop.f32.mrf.mxu0
      %v1960 = vadd.f32 %v1871, %v1959
      %1961 = vdwg.mxu0
      %1962 = vmatpush.bf16.msra.mxu0 %v1663
      %1963 = vmatpush.bf16.msra.mxu0 %v1662
      %1964 = vmatpush.bf16.msra.mxu0 %v1661
      %1965 = vmatpush.bf16.msra.mxu0 %v1660
      %1966 = vmatpush.bf16.msra.mxu0 %v1659
      %1967 = vmatpush.bf16.msra.mxu0 %v1658
      %1968 = vmatpush.bf16.msra.mxu0 %v1657
      %1969 = vmatpush.bf16.msra.mxu0 %v1656
      %1970 = vmatmul.bf16.gmra.mxu0 %v1066
      %v1971 = vpop.f32.mrf.mxu0
      %v1972 = vadd.f32 %v1883, %v1971
      %v1973 = vpop.f32.mrf.mxu0
      %v1974 = vadd.f32 %v1885, %v1973
      %1975 = vmatmul.bf16.gmra.mxu0 %v1075
      %v1976 = vpop.f32.mrf.mxu0
      %v1977 = vadd.f32 %v1888, %v1976
      %v1978 = vpop.f32.mrf.mxu0
      %v1979 = vadd.f32 %v1890, %v1978
      %1980 = vmatmul.bf16.gmra.mxu0 %v1084
      %v1981 = vpop.f32.mrf.mxu0
      %v1982 = vadd.f32 %v1893, %v1981
      %v1983 = vpop.f32.mrf.mxu0
      %v1984 = vadd.f32 %v1895, %v1983
      %1985 = vmatmul.bf16.gmra.mxu0 %v1093
      %v1986 = vpop.f32.mrf.mxu0
      %v1987 = vadd.f32 %v1898, %v1986
      %v1988 = vpop.f32.mrf.mxu0
      %v1989 = vadd.f32 %v1900, %v1988
      %1990 = vmatmul.bf16.gmra.mxu0 %v1102
      %v1991 = vpop.f32.mrf.mxu0
      %v1992 = vadd.f32 %v1903, %v1991
      %v1993 = vpop.f32.mrf.mxu0
      %v1994 = vadd.f32 %v1905, %v1993
      %1995 = vmatmul.bf16.gmra.mxu0 %v1111
      %v1996 = vpop.f32.mrf.mxu0
      %v1997 = vadd.f32 %v1908, %v1996
      %v1998 = vpop.f32.mrf.mxu0
      %v1999 = vadd.f32 %v1910, %v1998
      %2000 = vmatmul.bf16.gmra.mxu0 %v1120
      %v2001 = vpop.f32.mrf.mxu0
      %v2002 = vadd.f32 %v1913, %v2001
      %v2003 = vpop.f32.mrf.mxu0
      %v2004 = vadd.f32 %v1915, %v2003
      %2005 = vmatmul.bf16.gmra.mxu0 %v1129
      %v2006 = vpop.f32.mrf.mxu0
      %v2007 = vadd.f32 %v1918, %v2006
      %v2008 = vpop.f32.mrf.mxu0
      %v2009 = vadd.f32 %v1920, %v2008
      %2010 = vmatmul.bf16.gmra.mxu0 %v1138
      %v2011 = vpop.f32.mrf.mxu0
      %v2012 = vadd.f32 %v1923, %v2011
      %v2013 = vpop.f32.mrf.mxu0
      %v2014 = vadd.f32 %v1925, %v2013
      %2015 = vmatmul.bf16.gmra.mxu0 %v1147
      %v2016 = vpop.f32.mrf.mxu0
      %v2017 = vadd.f32 %v1928, %v2016
      %v2018 = vpop.f32.mrf.mxu0
      %v2019 = vadd.f32 %v1930, %v2018
      %2020 = vmatmul.bf16.gmra.mxu0 %v1156
      %v2021 = vpop.f32.mrf.mxu0
      %v2022 = vadd.f32 %v1933, %v2021
      %v2023 = vpop.f32.mrf.mxu0
      %v2024 = vadd.f32 %v1935, %v2023
      %2025 = vmatmul.bf16.gmra.mxu0 %v1165
      %v2026 = vpop.f32.mrf.mxu0
      %v2027 = vadd.f32 %v1938, %v2026
      %v2028 = vpop.f32.mrf.mxu0
      %v2029 = vadd.f32 %v1940, %v2028
      %2030 = vmatmul.bf16.gmra.mxu0 %v1174
      %v2031 = vpop.f32.mrf.mxu0
      %v2032 = vadd.f32 %v1943, %v2031
      %v2033 = vpop.f32.mrf.mxu0
      %v2034 = vadd.f32 %v1945, %v2033
      %2035 = vmatmul.bf16.gmra.mxu0 %v1183
      %v2036 = vpop.f32.mrf.mxu0
      %v2037 = vadd.f32 %v1948, %v2036
      %v2038 = vpop.f32.mrf.mxu0
      %v2039 = vadd.f32 %v1950, %v2038
      %2040 = vmatmul.bf16.gmra.mxu0 %v1192
      %v2041 = vpop.f32.mrf.mxu0
      %v2042 = vadd.f32 %v1953, %v2041
      %v2043 = vpop.f32.mrf.mxu0
      %v2044 = vadd.f32 %v1955, %v2043
      %2045 = vmatmul.bf16.gmra.mxu0 %v1201
      %v2046 = vpop.f32.mrf.mxu0
      %v2047 = vadd.f32 %v1958, %v2046
      %v2048 = vpop.f32.mrf.mxu0
      %v2049 = vadd.f32 %v1960, %v2048
      %2050 = vdwg.mxu0
      %2051 = vmatpush.bf16.msra.mxu0 %v1671
      %2052 = vmatpush.bf16.msra.mxu0 %v1670
      %2053 = vmatpush.bf16.msra.mxu0 %v1669
      %2054 = vmatpush.bf16.msra.mxu0 %v1668
      %2055 = vmatpush.bf16.msra.mxu0 %v1667
      %2056 = vmatpush.bf16.msra.mxu0 %v1666
      %2057 = vmatpush.bf16.msra.mxu0 %v1665
      %2058 = vmatpush.bf16.msra.mxu0 %v1664
      %2059 = vmatmul.bf16.gmra.mxu0 %v1067
      %v2060 = vpop.f32.mrf.mxu0
      %v2061 = vadd.f32 %v1972, %v2060
      %v2062 = vpop.f32.mrf.mxu0
      %v2063 = vadd.f32 %v1974, %v2062
      %2064 = vmatmul.bf16.gmra.mxu0 %v1076
      %v2065 = vpop.f32.mrf.mxu0
      %v2066 = vadd.f32 %v1977, %v2065
      %v2067 = vpop.f32.mrf.mxu0
      %v2068 = vadd.f32 %v1979, %v2067
      %2069 = vmatmul.bf16.gmra.mxu0 %v1085
      %v2070 = vpop.f32.mrf.mxu0
      %v2071 = vadd.f32 %v1982, %v2070
      %v2072 = vpop.f32.mrf.mxu0
      %v2073 = vadd.f32 %v1984, %v2072
      %2074 = vmatmul.bf16.gmra.mxu0 %v1094
      %v2075 = vpop.f32.mrf.mxu0
      %v2076 = vadd.f32 %v1987, %v2075
      %v2077 = vpop.f32.mrf.mxu0
      %v2078 = vadd.f32 %v1989, %v2077
      %2079 = vmatmul.bf16.gmra.mxu0 %v1103
      %v2080 = vpop.f32.mrf.mxu0
      %v2081 = vadd.f32 %v1992, %v2080
      %v2082 = vpop.f32.mrf.mxu0
      %v2083 = vadd.f32 %v1994, %v2082
      %2084 = vmatmul.bf16.gmra.mxu0 %v1112
      %v2085 = vpop.f32.mrf.mxu0
      %v2086 = vadd.f32 %v1997, %v2085
      %v2087 = vpop.f32.mrf.mxu0
      %v2088 = vadd.f32 %v1999, %v2087
      %2089 = vmatmul.bf16.gmra.mxu0 %v1121
      %v2090 = vpop.f32.mrf.mxu0
      %v2091 = vadd.f32 %v2002, %v2090
      %v2092 = vpop.f32.mrf.mxu0
      %v2093 = vadd.f32 %v2004, %v2092
      %2094 = vmatmul.bf16.gmra.mxu0 %v1130
      %v2095 = vpop.f32.mrf.mxu0
      %v2096 = vadd.f32 %v2007, %v2095
      %v2097 = vpop.f32.mrf.mxu0
      %v2098 = vadd.f32 %v2009, %v2097
      %2099 = vmatmul.bf16.gmra.mxu0 %v1139
      %v2100 = vpop.f32.mrf.mxu0
      %v2101 = vadd.f32 %v2012, %v2100
      %v2102 = vpop.f32.mrf.mxu0
      %v2103 = vadd.f32 %v2014, %v2102
      %2104 = vmatmul.bf16.gmra.mxu0 %v1148
      %v2105 = vpop.f32.mrf.mxu0
      %v2106 = vadd.f32 %v2017, %v2105
      %v2107 = vpop.f32.mrf.mxu0
      %v2108 = vadd.f32 %v2019, %v2107
      %2109 = vmatmul.bf16.gmra.mxu0 %v1157
      %v2110 = vpop.f32.mrf.mxu0
      %v2111 = vadd.f32 %v2022, %v2110
      %v2112 = vpop.f32.mrf.mxu0
      %v2113 = vadd.f32 %v2024, %v2112
      %2114 = vmatmul.bf16.gmra.mxu0 %v1166
      %v2115 = vpop.f32.mrf.mxu0
      %v2116 = vadd.f32 %v2027, %v2115
      %v2117 = vpop.f32.mrf.mxu0
      %v2118 = vadd.f32 %v2029, %v2117
      %2119 = vmatmul.bf16.gmra.mxu0 %v1175
      %v2120 = vpop.f32.mrf.mxu0
      %v2121 = vadd.f32 %v2032, %v2120
      %v2122 = vpop.f32.mrf.mxu0
      %v2123 = vadd.f32 %v2034, %v2122
      %2124 = vmatmul.bf16.gmra.mxu0 %v1184
      %v2125 = vpop.f32.mrf.mxu0
      %v2126 = vadd.f32 %v2037, %v2125
      %v2127 = vpop.f32.mrf.mxu0
      %v2128 = vadd.f32 %v2039, %v2127
      %2129 = vmatmul.bf16.gmra.mxu0 %v1193
      %v2130 = vpop.f32.mrf.mxu0
      %v2131 = vadd.f32 %v2042, %v2130
      %v2132 = vpop.f32.mrf.mxu0
      %v2133 = vadd.f32 %v2044, %v2132
      %2134 = vmatmul.bf16.gmra.mxu0 %v1202
      %v2135 = vpop.f32.mrf.mxu0
      %v2136 = vadd.f32 %v2047, %v2135
      %v2137 = vpop.f32.mrf.mxu0
      %v2138 = vadd.f32 %v2049, %v2137
      %2139 = vdwg.mxu0
      %2140 = vmatpush.bf16.msra.mxu0 %v1679
      %2141 = vmatpush.bf16.msra.mxu0 %v1678
      %2142 = vmatpush.bf16.msra.mxu0 %v1677
      %2143 = vmatpush.bf16.msra.mxu0 %v1676
      %2144 = vmatpush.bf16.msra.mxu0 %v1675
      %2145 = vmatpush.bf16.msra.mxu0 %v1674
      %2146 = vmatpush.bf16.msra.mxu0 %v1673
      %2147 = vmatpush.bf16.msra.mxu0 %v1672
      %2148 = vmatmul.bf16.gmra.mxu0 %v1068
      %v2149 = vpop.f32.mrf.mxu0
      %v2150 = vadd.f32 %v2061, %v2149
      %v2151 = vpop.f32.mrf.mxu0
      %v2152 = vadd.f32 %v2063, %v2151
      %2153 = vmatmul.bf16.gmra.mxu0 %v1077
      %v2154 = vpop.f32.mrf.mxu0
      %v2155 = vadd.f32 %v2066, %v2154
      %v2156 = vpop.f32.mrf.mxu0
      %v2157 = vadd.f32 %v2068, %v2156
      %2158 = vmatmul.bf16.gmra.mxu0 %v1086
      %v2159 = vpop.f32.mrf.mxu0
      %v2160 = vadd.f32 %v2071, %v2159
      %v2161 = vpop.f32.mrf.mxu0
      %v2162 = vadd.f32 %v2073, %v2161
      %2163 = vmatmul.bf16.gmra.mxu0 %v1095
      %v2164 = vpop.f32.mrf.mxu0
      %v2165 = vadd.f32 %v2076, %v2164
      %v2166 = vpop.f32.mrf.mxu0
      %v2167 = vadd.f32 %v2078, %v2166
      %2168 = vmatmul.bf16.gmra.mxu0 %v1104
      %v2169 = vpop.f32.mrf.mxu0
      %v2170 = vadd.f32 %v2081, %v2169
      %v2171 = vpop.f32.mrf.mxu0
      %v2172 = vadd.f32 %v2083, %v2171
      %2173 = vmatmul.bf16.gmra.mxu0 %v1113
      %v2174 = vpop.f32.mrf.mxu0
      %v2175 = vadd.f32 %v2086, %v2174
      %v2176 = vpop.f32.mrf.mxu0
      %v2177 = vadd.f32 %v2088, %v2176
      %2178 = vmatmul.bf16.gmra.mxu0 %v1122
      %v2179 = vpop.f32.mrf.mxu0
      %v2180 = vadd.f32 %v2091, %v2179
      %v2181 = vpop.f32.mrf.mxu0
      %v2182 = vadd.f32 %v2093, %v2181
      %2183 = vmatmul.bf16.gmra.mxu0 %v1131
      %v2184 = vpop.f32.mrf.mxu0
      %v2185 = vadd.f32 %v2096, %v2184
      %v2186 = vpop.f32.mrf.mxu0
      %v2187 = vadd.f32 %v2098, %v2186
      %2188 = vmatmul.bf16.gmra.mxu0 %v1140
      %v2189 = vpop.f32.mrf.mxu0
      %v2190 = vadd.f32 %v2101, %v2189
      %v2191 = vpop.f32.mrf.mxu0
      %v2192 = vadd.f32 %v2103, %v2191
      %2193 = vmatmul.bf16.gmra.mxu0 %v1149
      %v2194 = vpop.f32.mrf.mxu0
      %v2195 = vadd.f32 %v2106, %v2194
      %v2196 = vpop.f32.mrf.mxu0
      %v2197 = vadd.f32 %v2108, %v2196
      %2198 = vmatmul.bf16.gmra.mxu0 %v1158
      %v2199 = vpop.f32.mrf.mxu0
      %v2200 = vadd.f32 %v2111, %v2199
      %v2201 = vpop.f32.mrf.mxu0
      %v2202 = vadd.f32 %v2113, %v2201
      %2203 = vmatmul.bf16.gmra.mxu0 %v1167
      %v2204 = vpop.f32.mrf.mxu0
      %v2205 = vadd.f32 %v2116, %v2204
      %v2206 = vpop.f32.mrf.mxu0
      %v2207 = vadd.f32 %v2118, %v2206
      %2208 = vmatmul.bf16.gmra.mxu0 %v1176
      %v2209 = vpop.f32.mrf.mxu0
      %v2210 = vadd.f32 %v2121, %v2209
      %v2211 = vpop.f32.mrf.mxu0
      %v2212 = vadd.f32 %v2123, %v2211
      %2213 = vmatmul.bf16.gmra.mxu0 %v1185
      %v2214 = vpop.f32.mrf.mxu0
      %v2215 = vadd.f32 %v2126, %v2214
      %v2216 = vpop.f32.mrf.mxu0
      %v2217 = vadd.f32 %v2128, %v2216
      %2218 = vmatmul.bf16.gmra.mxu0 %v1194
      %v2219 = vpop.f32.mrf.mxu0
      %v2220 = vadd.f32 %v2131, %v2219
      %v2221 = vpop.f32.mrf.mxu0
      %v2222 = vadd.f32 %v2133, %v2221
      %2223 = vmatmul.bf16.gmra.mxu0 %v1203
      %v2224 = vpop.f32.mrf.mxu0
      %v2225 = vadd.f32 %v2136, %v2224
      %v2226 = vpop.f32.mrf.mxu0
      %v2227 = vadd.f32 %v2138, %v2226
      %2228 = vdwg.mxu0
      %2229 = vmatpush.bf16.msra.mxu0 %v1687
      %2230 = vmatpush.bf16.msra.mxu0 %v1686
      %2231 = vmatpush.bf16.msra.mxu0 %v1685
      %2232 = vmatpush.bf16.msra.mxu0 %v1684
      %2233 = vmatpush.bf16.msra.mxu0 %v1683
      %2234 = vmatpush.bf16.msra.mxu0 %v1682
      %2235 = vmatpush.bf16.msra.mxu0 %v1681
      %2236 = vmatpush.bf16.msra.mxu0 %v1680
      %2237 = vmatmul.bf16.gmra.mxu0 %v1069
      %v2238 = vpop.f32.mrf.mxu0
      %v2239 = vadd.f32 %v2150, %v2238
      %v2240 = vpop.f32.mrf.mxu0
      %v2241 = vadd.f32 %v2152, %v2240
      %2242 = vmatmul.bf16.gmra.mxu0 %v1078
      %v2243 = vpop.f32.mrf.mxu0
      %v2244 = vadd.f32 %v2155, %v2243
      %v2245 = vpop.f32.mrf.mxu0
      %v2246 = vadd.f32 %v2157, %v2245
      %2247 = vmatmul.bf16.gmra.mxu0 %v1087
      %v2248 = vpop.f32.mrf.mxu0
      %v2249 = vadd.f32 %v2160, %v2248
      %v2250 = vpop.f32.mrf.mxu0
      %v2251 = vadd.f32 %v2162, %v2250
      %2252 = vmatmul.bf16.gmra.mxu0 %v1096
      %v2253 = vpop.f32.mrf.mxu0
      %v2254 = vadd.f32 %v2165, %v2253
      %v2255 = vpop.f32.mrf.mxu0
      %v2256 = vadd.f32 %v2167, %v2255
      %2257 = vmatmul.bf16.gmra.mxu0 %v1105
      %v2258 = vpop.f32.mrf.mxu0
      %v2259 = vadd.f32 %v2170, %v2258
      %v2260 = vpop.f32.mrf.mxu0
      %v2261 = vadd.f32 %v2172, %v2260
      %2262 = vmatmul.bf16.gmra.mxu0 %v1114
      %v2263 = vpop.f32.mrf.mxu0
      %v2264 = vadd.f32 %v2175, %v2263
      %v2265 = vpop.f32.mrf.mxu0
      %v2266 = vadd.f32 %v2177, %v2265
      %2267 = vmatmul.bf16.gmra.mxu0 %v1123
      %v2268 = vpop.f32.mrf.mxu0
      %v2269 = vadd.f32 %v2180, %v2268
      %v2270 = vpop.f32.mrf.mxu0
      %v2271 = vadd.f32 %v2182, %v2270
      %2272 = vmatmul.bf16.gmra.mxu0 %v1132
      %v2273 = vpop.f32.mrf.mxu0
      %v2274 = vadd.f32 %v2185, %v2273
      %v2275 = vpop.f32.mrf.mxu0
      %v2276 = vadd.f32 %v2187, %v2275
      %2277 = vmatmul.bf16.gmra.mxu0 %v1141
      %v2278 = vpop.f32.mrf.mxu0
      %v2279 = vadd.f32 %v2190, %v2278
      %v2280 = vpop.f32.mrf.mxu0
      %v2281 = vadd.f32 %v2192, %v2280
      %2282 = vmatmul.bf16.gmra.mxu0 %v1150
      %v2283 = vpop.f32.mrf.mxu0
      %v2284 = vadd.f32 %v2195, %v2283
      %v2285 = vpop.f32.mrf.mxu0
      %v2286 = vadd.f32 %v2197, %v2285
      %2287 = vmatmul.bf16.gmra.mxu0 %v1159
      %v2288 = vpop.f32.mrf.mxu0
      %v2289 = vadd.f32 %v2200, %v2288
      %v2290 = vpop.f32.mrf.mxu0
      %v2291 = vadd.f32 %v2202, %v2290
      %2292 = vmatmul.bf16.gmra.mxu0 %v1168
      %v2293 = vpop.f32.mrf.mxu0
      %v2294 = vadd.f32 %v2205, %v2293
      %v2295 = vpop.f32.mrf.mxu0
      %v2296 = vadd.f32 %v2207, %v2295
      %2297 = vmatmul.bf16.gmra.mxu0 %v1177
      %v2298 = vpop.f32.mrf.mxu0
      %v2299 = vadd.f32 %v2210, %v2298
      %v2300 = vpop.f32.mrf.mxu0
      %v2301 = vadd.f32 %v2212, %v2300
      %2302 = vmatmul.bf16.gmra.mxu0 %v1186
      %v2303 = vpop.f32.mrf.mxu0
      %v2304 = vadd.f32 %v2215, %v2303
      %v2305 = vpop.f32.mrf.mxu0
      %v2306 = vadd.f32 %v2217, %v2305
      %2307 = vmatmul.bf16.gmra.mxu0 %v1195
      %v2308 = vpop.f32.mrf.mxu0
      %v2309 = vadd.f32 %v2220, %v2308
      %v2310 = vpop.f32.mrf.mxu0
      %v2311 = vadd.f32 %v2222, %v2310
      %2312 = vmatmul.bf16.gmra.mxu0 %v1204
      %v2313 = vpop.f32.mrf.mxu0
      %v2314 = vadd.f32 %v2225, %v2313
      %v2315 = vpop.f32.mrf.mxu0
      %v2316 = vadd.f32 %v2227, %v2315
      %2317 = vdwg.mxu0
      %2318 = vmatpush.bf16.msra.mxu0 %v1695
      %2319 = vmatpush.bf16.msra.mxu0 %v1694
      %2320 = vmatpush.bf16.msra.mxu0 %v1693
      %2321 = vmatpush.bf16.msra.mxu0 %v1692
      %2322 = vmatpush.bf16.msra.mxu0 %v1691
      %2323 = vmatpush.bf16.msra.mxu0 %v1690
      %2324 = vmatpush.bf16.msra.mxu0 %v1689
      %2325 = vmatpush.bf16.msra.mxu0 %v1688
      %2326 = vmatmul.bf16.gmra.mxu0 %v1070
      %v2327 = vpop.f32.mrf.mxu0
      %v2328 = vadd.f32 %v2239, %v2327
      %v2329 = vpop.f32.mrf.mxu0
      %v2330 = vadd.f32 %v2241, %v2329
      %2331 = vmatmul.bf16.gmra.mxu0 %v1079
      %v2332 = vpop.f32.mrf.mxu0
      %v2333 = vadd.f32 %v2244, %v2332
      %v2334 = vpop.f32.mrf.mxu0
      %v2335 = vadd.f32 %v2246, %v2334
      %2336 = vmatmul.bf16.gmra.mxu0 %v1088
      %v2337 = vpop.f32.mrf.mxu0
      %v2338 = vadd.f32 %v2249, %v2337
      %v2339 = vpop.f32.mrf.mxu0
      %v2340 = vadd.f32 %v2251, %v2339
      %2341 = vmatmul.bf16.gmra.mxu0 %v1097
      %v2342 = vpop.f32.mrf.mxu0
      %v2343 = vadd.f32 %v2254, %v2342
      %v2344 = vpop.f32.mrf.mxu0
      %v2345 = vadd.f32 %v2256, %v2344
      %2346 = vmatmul.bf16.gmra.mxu0 %v1106
      %v2347 = vpop.f32.mrf.mxu0
      %v2348 = vadd.f32 %v2259, %v2347
      %v2349 = vpop.f32.mrf.mxu0
      %v2350 = vadd.f32 %v2261, %v2349
      %2351 = vmatmul.bf16.gmra.mxu0 %v1115
      %v2352 = vpop.f32.mrf.mxu0
      %v2353 = vadd.f32 %v2264, %v2352
      %v2354 = vpop.f32.mrf.mxu0
      %v2355 = vadd.f32 %v2266, %v2354
      %2356 = vmatmul.bf16.gmra.mxu0 %v1124
      %v2357 = vpop.f32.mrf.mxu0
      %v2358 = vadd.f32 %v2269, %v2357
      %v2359 = vpop.f32.mrf.mxu0
      %v2360 = vadd.f32 %v2271, %v2359
      %2361 = vmatmul.bf16.gmra.mxu0 %v1133
      %v2362 = vpop.f32.mrf.mxu0
      %v2363 = vadd.f32 %v2274, %v2362
      %v2364 = vpop.f32.mrf.mxu0
      %v2365 = vadd.f32 %v2276, %v2364
      %2366 = vmatmul.bf16.gmra.mxu0 %v1142
      %v2367 = vpop.f32.mrf.mxu0
      %v2368 = vadd.f32 %v2279, %v2367
      %v2369 = vpop.f32.mrf.mxu0
      %v2370 = vadd.f32 %v2281, %v2369
      %2371 = vmatmul.bf16.gmra.mxu0 %v1151
      %v2372 = vpop.f32.mrf.mxu0
      %v2373 = vadd.f32 %v2284, %v2372
      %v2374 = vpop.f32.mrf.mxu0
      %v2375 = vadd.f32 %v2286, %v2374
      %2376 = vmatmul.bf16.gmra.mxu0 %v1160
      %v2377 = vpop.f32.mrf.mxu0
      %v2378 = vadd.f32 %v2289, %v2377
      %v2379 = vpop.f32.mrf.mxu0
      %v2380 = vadd.f32 %v2291, %v2379
      %2381 = vmatmul.bf16.gmra.mxu0 %v1169
      %v2382 = vpop.f32.mrf.mxu0
      %v2383 = vadd.f32 %v2294, %v2382
      %v2384 = vpop.f32.mrf.mxu0
      %v2385 = vadd.f32 %v2296, %v2384
      %2386 = vmatmul.bf16.gmra.mxu0 %v1178
      %v2387 = vpop.f32.mrf.mxu0
      %v2388 = vadd.f32 %v2299, %v2387
      %v2389 = vpop.f32.mrf.mxu0
      %v2390 = vadd.f32 %v2301, %v2389
      %2391 = vmatmul.bf16.gmra.mxu0 %v1187
      %v2392 = vpop.f32.mrf.mxu0
      %v2393 = vadd.f32 %v2304, %v2392
      %v2394 = vpop.f32.mrf.mxu0
      %v2395 = vadd.f32 %v2306, %v2394
      %2396 = vmatmul.bf16.gmra.mxu0 %v1196
      %v2397 = vpop.f32.mrf.mxu0
      %v2398 = vadd.f32 %v2309, %v2397
      %v2399 = vpop.f32.mrf.mxu0
      %v2400 = vadd.f32 %v2311, %v2399
      %2401 = vmatmul.bf16.gmra.mxu0 %v1205
      %v2402 = vpop.f32.mrf.mxu0
      %v2403 = vadd.f32 %v2314, %v2402
      %v2404 = vpop.f32.mrf.mxu0
      %v2405 = vadd.f32 %v2316, %v2404
      %2406 = vdwg.mxu0
      %2407 = vmatpush.bf16.msra.mxu0 %v1703
      %2408 = vmatpush.bf16.msra.mxu0 %v1702
      %2409 = vmatpush.bf16.msra.mxu0 %v1701
      %2410 = vmatpush.bf16.msra.mxu0 %v1700
      %2411 = vmatpush.bf16.msra.mxu0 %v1699
      %2412 = vmatpush.bf16.msra.mxu0 %v1698
      %2413 = vmatpush.bf16.msra.mxu0 %v1697
      %2414 = vmatpush.bf16.msra.mxu0 %v1696
      %2415 = vmatmul.bf16.gmra.mxu0 %v1071
      %v2416 = vpop.f32.mrf.mxu0
      %v2417 = vadd.f32 %v2328, %v2416
      %v2418 = vpop.f32.mrf.mxu0
      %v2419 = vadd.f32 %v2330, %v2418
      %2420 = vmatmul.bf16.gmra.mxu0 %v1080
      %v2421 = vpop.f32.mrf.mxu0
      %v2422 = vadd.f32 %v2333, %v2421
      %v2423 = vpop.f32.mrf.mxu0
      %v2424 = vadd.f32 %v2335, %v2423
      %2425 = vmatmul.bf16.gmra.mxu0 %v1089
      %v2426 = vpop.f32.mrf.mxu0
      %v2427 = vadd.f32 %v2338, %v2426
      %v2428 = vpop.f32.mrf.mxu0
      %v2429 = vadd.f32 %v2340, %v2428
      %2430 = vmatmul.bf16.gmra.mxu0 %v1098
      %v2431 = vpop.f32.mrf.mxu0
      %v2432 = vadd.f32 %v2343, %v2431
      %v2433 = vpop.f32.mrf.mxu0
      %v2434 = vadd.f32 %v2345, %v2433
      %2435 = vmatmul.bf16.gmra.mxu0 %v1107
      %v2436 = vpop.f32.mrf.mxu0
      %v2437 = vadd.f32 %v2348, %v2436
      %v2438 = vpop.f32.mrf.mxu0
      %v2439 = vadd.f32 %v2350, %v2438
      %2440 = vmatmul.bf16.gmra.mxu0 %v1116
      %v2441 = vpop.f32.mrf.mxu0
      %v2442 = vadd.f32 %v2353, %v2441
      %v2443 = vpop.f32.mrf.mxu0
      %v2444 = vadd.f32 %v2355, %v2443
      %2445 = vmatmul.bf16.gmra.mxu0 %v1125
      %v2446 = vpop.f32.mrf.mxu0
      %v2447 = vadd.f32 %v2358, %v2446
      %v2448 = vpop.f32.mrf.mxu0
      %v2449 = vadd.f32 %v2360, %v2448
      %2450 = vmatmul.bf16.gmra.mxu0 %v1134
      %v2451 = vpop.f32.mrf.mxu0
      %v2452 = vadd.f32 %v2363, %v2451
      %v2453 = vpop.f32.mrf.mxu0
      %v2454 = vadd.f32 %v2365, %v2453
      %2455 = vmatmul.bf16.gmra.mxu0 %v1143
      %v2456 = vpop.f32.mrf.mxu0
      %v2457 = vadd.f32 %v2368, %v2456
      %v2458 = vpop.f32.mrf.mxu0
      %v2459 = vadd.f32 %v2370, %v2458
      %2460 = vmatmul.bf16.gmra.mxu0 %v1152
      %v2461 = vpop.f32.mrf.mxu0
      %v2462 = vadd.f32 %v2373, %v2461
      %v2463 = vpop.f32.mrf.mxu0
      %v2464 = vadd.f32 %v2375, %v2463
      %2465 = vmatmul.bf16.gmra.mxu0 %v1161
      %v2466 = vpop.f32.mrf.mxu0
      %v2467 = vadd.f32 %v2378, %v2466
      %v2468 = vpop.f32.mrf.mxu0
      %v2469 = vadd.f32 %v2380, %v2468
      %2470 = vmatmul.bf16.gmra.mxu0 %v1170
      %v2471 = vpop.f32.mrf.mxu0
      %v2472 = vadd.f32 %v2383, %v2471
      %v2473 = vpop.f32.mrf.mxu0
      %v2474 = vadd.f32 %v2385, %v2473
      %2475 = vmatmul.bf16.gmra.mxu0 %v1179
      %v2476 = vpop.f32.mrf.mxu0
      %v2477 = vadd.f32 %v2388, %v2476
      %v2478 = vpop.f32.mrf.mxu0
      %v2479 = vadd.f32 %v2390, %v2478
      %2480 = vmatmul.bf16.gmra.mxu0 %v1188
      %v2481 = vpop.f32.mrf.mxu0
      %v2482 = vadd.f32 %v2393, %v2481
      %v2483 = vpop.f32.mrf.mxu0
      %v2484 = vadd.f32 %v2395, %v2483
      %2485 = vmatmul.bf16.gmra.mxu0 %v1197
      %v2486 = vpop.f32.mrf.mxu0
      %v2487 = vadd.f32 %v2398, %v2486
      %v2488 = vpop.f32.mrf.mxu0
      %v2489 = vadd.f32 %v2400, %v2488
      %2490 = vmatmul.bf16.gmra.mxu0 %v1206
      %v2491 = vpop.f32.mrf.mxu0
      %v2492 = vadd.f32 %v2403, %v2491
      %v2493 = vpop.f32.mrf.mxu0
      %v2494 = vadd.f32 %v2405, %v2493
      %2495 = vdwg.mxu0
      %2496 = vmatpush.bf16.msra.mxu0 %v1711
      %2497 = vmatpush.bf16.msra.mxu0 %v1710
      %2498 = vmatpush.bf16.msra.mxu0 %v1709
      %2499 = vmatpush.bf16.msra.mxu0 %v1708
      %2500 = vmatpush.bf16.msra.mxu0 %v1707
      %2501 = vmatpush.bf16.msra.mxu0 %v1706
      %2502 = vmatpush.bf16.msra.mxu0 %v1705
      %2503 = vmatpush.bf16.msra.mxu0 %v1704
      %2504 = vmatmul.bf16.gmra.mxu0 %v1072
      %v2505 = vpop.f32.mrf.mxu0
      %v2506 = vadd.f32 %v2417, %v2505
      %v2507 = vpop.f32.mrf.mxu0
      %v2508 = vadd.f32 %v2419, %v2507
      %2509 = vmatmul.bf16.gmra.mxu0 %v1081
      %v2510 = vpop.f32.mrf.mxu0
      %v2511 = vadd.f32 %v2422, %v2510
      %v2512 = vpop.f32.mrf.mxu0
      %v2513 = vadd.f32 %v2424, %v2512
      %2514 = vmatmul.bf16.gmra.mxu0 %v1090
      %v2515 = vpop.f32.mrf.mxu0
      %v2516 = vadd.f32 %v2427, %v2515
      %v2517 = vpop.f32.mrf.mxu0
      %v2518 = vadd.f32 %v2429, %v2517
      %2519 = vmatmul.bf16.gmra.mxu0 %v1099
      %v2520 = vpop.f32.mrf.mxu0
      %v2521 = vadd.f32 %v2432, %v2520
      %v2522 = vpop.f32.mrf.mxu0
      %v2523 = vadd.f32 %v2434, %v2522
      %2524 = vmatmul.bf16.gmra.mxu0 %v1108
      %v2525 = vpop.f32.mrf.mxu0
      %v2526 = vadd.f32 %v2437, %v2525
      %v2527 = vpop.f32.mrf.mxu0
      %v2528 = vadd.f32 %v2439, %v2527
      %2529 = vmatmul.bf16.gmra.mxu0 %v1117
      %v2530 = vpop.f32.mrf.mxu0
      %v2531 = vadd.f32 %v2442, %v2530
      %v2532 = vpop.f32.mrf.mxu0
      %v2533 = vadd.f32 %v2444, %v2532
      %2534 = vmatmul.bf16.gmra.mxu0 %v1126
      %v2535 = vpop.f32.mrf.mxu0
      %v2536 = vadd.f32 %v2447, %v2535
      %v2537 = vpop.f32.mrf.mxu0
      %v2538 = vadd.f32 %v2449, %v2537
      %2539 = vmatmul.bf16.gmra.mxu0 %v1135
      %v2540 = vpop.f32.mrf.mxu0
      %v2541 = vadd.f32 %v2452, %v2540
      %v2542 = vpop.f32.mrf.mxu0
      %v2543 = vadd.f32 %v2454, %v2542
      %2544 = vmatmul.bf16.gmra.mxu0 %v1144
      %v2545 = vpop.f32.mrf.mxu0
      %v2546 = vadd.f32 %v2457, %v2545
      %v2547 = vpop.f32.mrf.mxu0
      %v2548 = vadd.f32 %v2459, %v2547
      %2549 = vmatmul.bf16.gmra.mxu0 %v1153
      %v2550 = vpop.f32.mrf.mxu0
      %v2551 = vadd.f32 %v2462, %v2550
      %v2552 = vpop.f32.mrf.mxu0
      %v2553 = vadd.f32 %v2464, %v2552
      %2554 = vmatmul.bf16.gmra.mxu0 %v1162
      %v2555 = vpop.f32.mrf.mxu0
      %v2556 = vadd.f32 %v2467, %v2555
      %v2557 = vpop.f32.mrf.mxu0
      %v2558 = vadd.f32 %v2469, %v2557
      %2559 = vmatmul.bf16.gmra.mxu0 %v1171
      %v2560 = vpop.f32.mrf.mxu0
      %v2561 = vadd.f32 %v2472, %v2560
      %v2562 = vpop.f32.mrf.mxu0
      %v2563 = vadd.f32 %v2474, %v2562
      %2564 = vmatmul.bf16.gmra.mxu0 %v1180
      %v2565 = vpop.f32.mrf.mxu0
      %v2566 = vadd.f32 %v2477, %v2565
      %v2567 = vpop.f32.mrf.mxu0
      %v2568 = vadd.f32 %v2479, %v2567
      %2569 = vmatmul.bf16.gmra.mxu0 %v1189
      %v2570 = vpop.f32.mrf.mxu0
      %v2571 = vadd.f32 %v2482, %v2570
      %v2572 = vpop.f32.mrf.mxu0
      %v2573 = vadd.f32 %v2484, %v2572
      %2574 = vmatmul.bf16.gmra.mxu0 %v1198
      %v2575 = vpop.f32.mrf.mxu0
      %v2576 = vadd.f32 %v2487, %v2575
      %v2577 = vpop.f32.mrf.mxu0
      %v2578 = vadd.f32 %v2489, %v2577
      %2579 = vmatmul.bf16.gmra.mxu0 %v1207
      %v2580 = vpop.f32.mrf.mxu0
      %v2581 = vadd.f32 %v2492, %v2580
      %v2582 = vpop.f32.mrf.mxu0
      %v2583 = vadd.f32 %v2494, %v2582
      %2584 = vdwg.mxu0
      %v2585 = vld [vmem:[%s2] sm:$0xf]
      %v2586 = vld [vmem:[%s2 + $0x4] sm:$0xf]
      %v2587 = vld [vmem:[%s2 + $0x8] sm:$0xf]
      %v2588 = vld [vmem:[%s2 + $0xc] sm:$0xf]
      %v2589 = vld [vmem:[%s2 + $0x10] sm:$0xf]
      %v2590 = vld [vmem:[%s2 + $0x14] sm:$0xf]
      %v2591 = vld [vmem:[%s2 + $0x18] sm:$0xf]
      %v2592 = vld [vmem:[%s2 + $0x1c] sm:$0xf]
      %v2593 = vld [vmem:[%s2 + $0x20] sm:$0xf]
      %v2594 = vld [vmem:[%s2 + $0x24] sm:$0xf]
      %v2595 = vld [vmem:[%s2 + $0x28] sm:$0xf]
      %v2596 = vld [vmem:[%s2 + $0x2c] sm:$0xf]
      %v2597 = vld [vmem:[%s2 + $0x30] sm:$0xf]
      %v2598 = vld [vmem:[%s2 + $0x34] sm:$0xf]
      %v2599 = vld [vmem:[%s2 + $0x38] sm:$0xf]
      %v2600 = vld [vmem:[%s2 + $0x3c] sm:$0xf]
      %v2601 = vld [vmem:[%s2 + $0x40] sm:$0xf]
      %v2602 = vld [vmem:[%s2 + $0x44] sm:$0xf]
      %v2603 = vld [vmem:[%s2 + $0x48] sm:$0xf]
      %v2604 = vld [vmem:[%s2 + $0x4c] sm:$0xf]
      %v2605 = vld [vmem:[%s2 + $0x50] sm:$0xf]
      %v2606 = vld [vmem:[%s2 + $0x54] sm:$0xf]
      %v2607 = vld [vmem:[%s2 + $0x58] sm:$0xf]
      %v2608 = vld [vmem:[%s2 + $0x5c] sm:$0xf]
      %v2609 = vld [vmem:[%s2 + $0x60] sm:$0xf]
      %v2610 = vld [vmem:[%s2 + $0x64] sm:$0xf]
      %v2611 = vld [vmem:[%s2 + $0x68] sm:$0xf]
      %v2612 = vld [vmem:[%s2 + $0x6c] sm:$0xf]
      %v2613 = vld [vmem:[%s2 + $0x70] sm:$0xf]
      %v2614 = vld [vmem:[%s2 + $0x74] sm:$0xf]
      %v2615 = vld [vmem:[%s2 + $0x78] sm:$0xf]
      %v2616 = vld [vmem:[%s2 + $0x7c] sm:$0xf]
      %v2617 = vld [vmem:[%s2 + $0x80] sm:$0xf]
      %v2618 = vld [vmem:[%s2 + $0x84] sm:$0xf]
      %v2619 = vld [vmem:[%s2 + $0x88] sm:$0xf]
      %v2620 = vld [vmem:[%s2 + $0x8c] sm:$0xf]
      %v2621 = vld [vmem:[%s2 + $0x90] sm:$0xf]
      %v2622 = vld [vmem:[%s2 + $0x94] sm:$0xf]
      %v2623 = vld [vmem:[%s2 + $0x98] sm:$0xf]
      %v2624 = vld [vmem:[%s2 + $0x9c] sm:$0xf]
      %v2625 = vld [vmem:[%s2 + $0xa0] sm:$0xf]
      %v2626 = vld [vmem:[%s2 + $0xa4] sm:$0xf]
      %v2627 = vld [vmem:[%s2 + $0xa8] sm:$0xf]
      %v2628 = vld [vmem:[%s2 + $0xac] sm:$0xf]
      %v2629 = vld [vmem:[%s2 + $0xb0] sm:$0xf]
      %v2630 = vld [vmem:[%s2 + $0xb4] sm:$0xf]
      %v2631 = vld [vmem:[%s2 + $0xb8] sm:$0xf]
      %v2632 = vld [vmem:[%s2 + $0xbc] sm:$0xf]
      %v2633 = vld [vmem:[%s2 + $0xc0] sm:$0xf]
      %v2634 = vld [vmem:[%s2 + $0xc4] sm:$0xf]
      %v2635 = vld [vmem:[%s2 + $0xc8] sm:$0xf]
      %v2636 = vld [vmem:[%s2 + $0xcc] sm:$0xf]
      %v2637 = vld [vmem:[%s2 + $0xd0] sm:$0xf]
      %v2638 = vld [vmem:[%s2 + $0xd4] sm:$0xf]
      %v2639 = vld [vmem:[%s2 + $0xd8] sm:$0xf]
      %v2640 = vld [vmem:[%s2 + $0xdc] sm:$0xf]
      %v2641 = vld [vmem:[%s2 + $0xe0] sm:$0xf]
      %v2642 = vld [vmem:[%s2 + $0xe4] sm:$0xf]
      %v2643 = vld [vmem:[%s2 + $0xe8] sm:$0xf]
      %v2644 = vld [vmem:[%s2 + $0xec] sm:$0xf]
      %v2645 = vld [vmem:[%s2 + $0xf0] sm:$0xf]
      %v2646 = vld [vmem:[%s2 + $0xf4] sm:$0xf]
      %v2647 = vld [vmem:[%s2 + $0xf8] sm:$0xf]
      %v2648 = vld [vmem:[%s2 + $0xfc] sm:$0xf]
      %v2649 = vld [vmem:[%s2 + $0x100] sm:$0xf]
      %v2650 = vld [vmem:[%s2 + $0x104] sm:$0xf]
      %v2651 = vld [vmem:[%s2 + $0x108] sm:$0xf]
      %v2652 = vld [vmem:[%s2 + $0x10c] sm:$0xf]
      %v2653 = vld [vmem:[%s2 + $0x110] sm:$0xf]
      %v2654 = vld [vmem:[%s2 + $0x114] sm:$0xf]
      %v2655 = vld [vmem:[%s2 + $0x118] sm:$0xf]
      %v2656 = vld [vmem:[%s2 + $0x11c] sm:$0xf]
      %v2657 = vld [vmem:[%s2 + $0x120] sm:$0xf]
      %v2658 = vld [vmem:[%s2 + $0x124] sm:$0xf]
      %v2659 = vld [vmem:[%s2 + $0x128] sm:$0xf]
      %v2660 = vld [vmem:[%s2 + $0x12c] sm:$0xf]
      %v2661 = vld [vmem:[%s2 + $0x130] sm:$0xf]
      %v2662 = vld [vmem:[%s2 + $0x134] sm:$0xf]
      %v2663 = vld [vmem:[%s2 + $0x138] sm:$0xf]
      %v2664 = vld [vmem:[%s2 + $0x13c] sm:$0xf]
      %v2665 = vld [vmem:[%s2 + $0x140] sm:$0xf]
      %v2666 = vld [vmem:[%s2 + $0x144] sm:$0xf]
      %v2667 = vld [vmem:[%s2 + $0x148] sm:$0xf]
      %v2668 = vld [vmem:[%s2 + $0x14c] sm:$0xf]
      %v2669 = vld [vmem:[%s2 + $0x150] sm:$0xf]
      %v2670 = vld [vmem:[%s2 + $0x154] sm:$0xf]
      %v2671 = vld [vmem:[%s2 + $0x158] sm:$0xf]
      %v2672 = vld [vmem:[%s2 + $0x15c] sm:$0xf]
      %v2673 = vld [vmem:[%s2 + $0x160] sm:$0xf]
      %v2674 = vld [vmem:[%s2 + $0x164] sm:$0xf]
      %v2675 = vld [vmem:[%s2 + $0x168] sm:$0xf]
      %v2676 = vld [vmem:[%s2 + $0x16c] sm:$0xf]
      %v2677 = vld [vmem:[%s2 + $0x170] sm:$0xf]
      %v2678 = vld [vmem:[%s2 + $0x174] sm:$0xf]
      %v2679 = vld [vmem:[%s2 + $0x178] sm:$0xf]
      %v2680 = vld [vmem:[%s2 + $0x17c] sm:$0xf]
      %v2681 = vld [vmem:[%s2 + $0x180] sm:$0xf]
      %v2682 = vld [vmem:[%s2 + $0x184] sm:$0xf]
      %v2683 = vld [vmem:[%s2 + $0x188] sm:$0xf]
      %v2684 = vld [vmem:[%s2 + $0x18c] sm:$0xf]
      %v2685 = vld [vmem:[%s2 + $0x190] sm:$0xf]
      %v2686 = vld [vmem:[%s2 + $0x194] sm:$0xf]
      %v2687 = vld [vmem:[%s2 + $0x198] sm:$0xf]
      %v2688 = vld [vmem:[%s2 + $0x19c] sm:$0xf]
      %v2689 = vld [vmem:[%s2 + $0x1a0] sm:$0xf]
      %v2690 = vld [vmem:[%s2 + $0x1a4] sm:$0xf]
      %v2691 = vld [vmem:[%s2 + $0x1a8] sm:$0xf]
      %v2692 = vld [vmem:[%s2 + $0x1ac] sm:$0xf]
      %v2693 = vld [vmem:[%s2 + $0x1b0] sm:$0xf]
      %v2694 = vld [vmem:[%s2 + $0x1b4] sm:$0xf]
      %v2695 = vld [vmem:[%s2 + $0x1b8] sm:$0xf]
      %v2696 = vld [vmem:[%s2 + $0x1bc] sm:$0xf]
      %v2697 = vld [vmem:[%s2 + $0x1c0] sm:$0xf]
      %v2698 = vld [vmem:[%s2 + $0x1c4] sm:$0xf]
      %v2699 = vld [vmem:[%s2 + $0x1c8] sm:$0xf]
      %v2700 = vld [vmem:[%s2 + $0x1cc] sm:$0xf]
      %v2701 = vld [vmem:[%s2 + $0x1d0] sm:$0xf]
      %v2702 = vld [vmem:[%s2 + $0x1d4] sm:$0xf]
      %v2703 = vld [vmem:[%s2 + $0x1d8] sm:$0xf]
      %v2704 = vld [vmem:[%s2 + $0x1dc] sm:$0xf]
      %v2705 = vld [vmem:[%s2 + $0x1e0] sm:$0xf]
      %v2706 = vld [vmem:[%s2 + $0x1e4] sm:$0xf]
      %v2707 = vld [vmem:[%s2 + $0x1e8] sm:$0xf]
      %v2708 = vld [vmem:[%s2 + $0x1ec] sm:$0xf]
      %v2709 = vld [vmem:[%s2 + $0x1f0] sm:$0xf]
      %v2710 = vld [vmem:[%s2 + $0x1f4] sm:$0xf]
      %v2711 = vld [vmem:[%s2 + $0x1f8] sm:$0xf]
      %v2712 = vld [vmem:[%s2 + $0x1fc] sm:$0xf]
      %v2713 = vld [vmem:[%s2 + $0x200] sm:$0xf]
      %v2714 = vld [vmem:[%s2 + $0x204] sm:$0xf]
      %v2715 = vld [vmem:[%s2 + $0x208] sm:$0xf]
      %v2716 = vld [vmem:[%s2 + $0x20c] sm:$0xf]
      %v2717 = vld [vmem:[%s2 + $0x210] sm:$0xf]
      %v2718 = vld [vmem:[%s2 + $0x214] sm:$0xf]
      %v2719 = vld [vmem:[%s2 + $0x218] sm:$0xf]
      %v2720 = vld [vmem:[%s2 + $0x21c] sm:$0xf]
      %v2721 = vld [vmem:[%s2 + $0x220] sm:$0xf]
      %v2722 = vld [vmem:[%s2 + $0x224] sm:$0xf]
      %v2723 = vld [vmem:[%s2 + $0x228] sm:$0xf]
      %v2724 = vld [vmem:[%s2 + $0x22c] sm:$0xf]
      %v2725 = vld [vmem:[%s2 + $0x230] sm:$0xf]
      %v2726 = vld [vmem:[%s2 + $0x234] sm:$0xf]
      %v2727 = vld [vmem:[%s2 + $0x238] sm:$0xf]
      %v2728 = vld [vmem:[%s2 + $0x23c] sm:$0xf]
      %v2729 = vld [vmem:[%s301] sm:$0x1]
      %v2731 = vperm.slane %v2729, 0
      %v2877 = vunpack.c.l.b16 %v2585
      %v2878 = vunpack.c.l.b16 %v2586
      %v2879 = vunpack.c.l.b16 %v2587
      %v2880 = vunpack.c.l.b16 %v2588
      %v2881 = vunpack.c.l.b16 %v2589
      %v2882 = vunpack.c.l.b16 %v2590
      %v2883 = vunpack.c.l.b16 %v2591
      %v2884 = vunpack.c.l.b16 %v2592
      %v2885 = vunpack.c.l.b16 %v2593
      %v2886 = vunpack.c.l.b16 %v2594
      %v2887 = vunpack.c.l.b16 %v2595
      %v2888 = vunpack.c.l.b16 %v2596
      %v2889 = vunpack.c.l.b16 %v2597
      %v2890 = vunpack.c.l.b16 %v2598
      %v2891 = vunpack.c.l.b16 %v2599
      %v2892 = vunpack.c.l.b16 %v2600
      %v2893 = vunpack.c.l.b16 %v2601
      %v2894 = vunpack.c.l.b16 %v2602
      %v2895 = vunpack.c.l.b16 %v2603
      %v2896 = vunpack.c.l.b16 %v2604
      %v2897 = vunpack.c.l.b16 %v2605
      %v2898 = vunpack.c.l.b16 %v2606
      %v2899 = vunpack.c.l.b16 %v2607
      %v2900 = vunpack.c.l.b16 %v2608
      %v2901 = vunpack.c.l.b16 %v2609
      %v2902 = vunpack.c.l.b16 %v2610
      %v2903 = vunpack.c.l.b16 %v2611
      %v2904 = vunpack.c.l.b16 %v2612
      %v2905 = vunpack.c.l.b16 %v2613
      %v2906 = vunpack.c.l.b16 %v2614
      %v2907 = vunpack.c.l.b16 %v2615
      %v2908 = vunpack.c.l.b16 %v2616
      %v2909 = vunpack.c.l.b16 %v2617
      %v2910 = vunpack.c.l.b16 %v2618
      %v2911 = vunpack.c.l.b16 %v2619
      %v2912 = vunpack.c.l.b16 %v2620
      %v2913 = vunpack.c.l.b16 %v2621
      %v2914 = vunpack.c.l.b16 %v2622
      %v2915 = vunpack.c.l.b16 %v2623
      %v2916 = vunpack.c.l.b16 %v2624
      %v2917 = vunpack.c.l.b16 %v2625
      %v2918 = vunpack.c.l.b16 %v2626
      %v2919 = vunpack.c.l.b16 %v2627
      %v2920 = vunpack.c.l.b16 %v2628
      %v2921 = vunpack.c.l.b16 %v2629
      %v2922 = vunpack.c.l.b16 %v2630
      %v2923 = vunpack.c.l.b16 %v2631
      %v2924 = vunpack.c.l.b16 %v2632
      %v2925 = vunpack.c.l.b16 %v2633
      %v2926 = vunpack.c.l.b16 %v2634
      %v2927 = vunpack.c.l.b16 %v2635
      %v2928 = vunpack.c.l.b16 %v2636
      %v2929 = vunpack.c.l.b16 %v2637
      %v2930 = vunpack.c.l.b16 %v2638
      %v2931 = vunpack.c.l.b16 %v2639
      %v2932 = vunpack.c.l.b16 %v2640
      %v2933 = vunpack.c.l.b16 %v2641
      %v2934 = vunpack.c.l.b16 %v2642
      %v2935 = vunpack.c.l.b16 %v2643
      %v2936 = vunpack.c.l.b16 %v2644
      %v2937 = vunpack.c.l.b16 %v2645
      %v2938 = vunpack.c.l.b16 %v2646
      %v2939 = vunpack.c.l.b16 %v2647
      %v2940 = vunpack.c.l.b16 %v2648
      %v2941 = vunpack.c.l.b16 %v2649
      %v2942 = vunpack.c.l.b16 %v2650
      %v2943 = vunpack.c.l.b16 %v2651
      %v2944 = vunpack.c.l.b16 %v2652
      %v2945 = vunpack.c.l.b16 %v2653
      %v2946 = vunpack.c.l.b16 %v2654
      %v2947 = vunpack.c.l.b16 %v2655
      %v2948 = vunpack.c.l.b16 %v2656
      %v2949 = vunpack.c.l.b16 %v2657
      %v2950 = vunpack.c.l.b16 %v2658
      %v2951 = vunpack.c.l.b16 %v2659
      %v2952 = vunpack.c.l.b16 %v2660
      %v2953 = vunpack.c.l.b16 %v2661
      %v2954 = vunpack.c.l.b16 %v2662
      %v2955 = vunpack.c.l.b16 %v2663
      %v2956 = vunpack.c.l.b16 %v2664
      %v2957 = vunpack.c.l.b16 %v2665
      %v2958 = vunpack.c.l.b16 %v2666
      %v2959 = vunpack.c.l.b16 %v2667
      %v2960 = vunpack.c.l.b16 %v2668
      %v2961 = vunpack.c.l.b16 %v2669
      %v2962 = vunpack.c.l.b16 %v2670
      %v2963 = vunpack.c.l.b16 %v2671
      %v2964 = vunpack.c.l.b16 %v2672
      %v2965 = vunpack.c.l.b16 %v2673
      %v2966 = vunpack.c.l.b16 %v2674
      %v2967 = vunpack.c.l.b16 %v2675
      %v2968 = vunpack.c.l.b16 %v2676
      %v2969 = vunpack.c.l.b16 %v2677
      %v2970 = vunpack.c.l.b16 %v2678
      %v2971 = vunpack.c.l.b16 %v2679
      %v2972 = vunpack.c.l.b16 %v2680
      %v2973 = vunpack.c.l.b16 %v2681
      %v2974 = vunpack.c.l.b16 %v2682
      %v2975 = vunpack.c.l.b16 %v2683
      %v2976 = vunpack.c.l.b16 %v2684
      %v2977 = vunpack.c.l.b16 %v2685
      %v2978 = vunpack.c.l.b16 %v2686
      %v2979 = vunpack.c.l.b16 %v2687
      %v2980 = vunpack.c.l.b16 %v2688
      %v2981 = vunpack.c.l.b16 %v2689
      %v2982 = vunpack.c.l.b16 %v2690
      %v2983 = vunpack.c.l.b16 %v2691
      %v2984 = vunpack.c.l.b16 %v2692
      %v2985 = vunpack.c.l.b16 %v2693
      %v2986 = vunpack.c.l.b16 %v2694
      %v2987 = vunpack.c.l.b16 %v2695
      %v2988 = vunpack.c.l.b16 %v2696
      %v2989 = vunpack.c.l.b16 %v2697
      %v2990 = vunpack.c.l.b16 %v2698
      %v2991 = vunpack.c.l.b16 %v2699
      %v2992 = vunpack.c.l.b16 %v2700
      %v2993 = vunpack.c.l.b16 %v2701
      %v2994 = vunpack.c.l.b16 %v2702
      %v2995 = vunpack.c.l.b16 %v2703
      %v2996 = vunpack.c.l.b16 %v2704
      %v2997 = vunpack.c.l.b16 %v2705
      %v2998 = vunpack.c.l.b16 %v2706
      %v2999 = vunpack.c.l.b16 %v2707
      %v3000 = vunpack.c.l.b16 %v2708
      %v3001 = vunpack.c.l.b16 %v2709
      %v3002 = vunpack.c.l.b16 %v2710
      %v3003 = vunpack.c.l.b16 %v2711
      %v3004 = vunpack.c.l.b16 %v2712
      %v3005 = vunpack.c.l.b16 %v2713
      %v3006 = vunpack.c.l.b16 %v2714
      %v3007 = vunpack.c.l.b16 %v2715
      %v3008 = vunpack.c.l.b16 %v2716
      %v3009 = vunpack.c.l.b16 %v2717
      %v3010 = vunpack.c.l.b16 %v2718
      %v3011 = vunpack.c.l.b16 %v2719
      %v3012 = vunpack.c.l.b16 %v2720
      %v3013 = vunpack.c.l.b16 %v2721
      %v3014 = vunpack.c.l.b16 %v2722
      %v3015 = vunpack.c.l.b16 %v2723
      %v3016 = vunpack.c.l.b16 %v2724
      %v3017 = vunpack.c.l.b16 %v2725
      %v3018 = vunpack.c.l.b16 %v2726
      %v3019 = vunpack.c.l.b16 %v2727
      %v3020 = vunpack.c.l.b16 %v2728
      %v3021 = vpack.c.b16 %v2878, %v2877
      %v3022 = vpack.c.b16 %v2880, %v2879
      %v3023 = vpack.c.b16 %v2882, %v2881
      %v3024 = vpack.c.b16 %v2884, %v2883
      %v3025 = vpack.c.b16 %v2886, %v2885
      %v3026 = vpack.c.b16 %v2888, %v2887
      %v3027 = vpack.c.b16 %v2890, %v2889
      %v3028 = vpack.c.b16 %v2892, %v2891
      %v3029 = vpack.c.b16 %v2894, %v2893
      %v3030 = vpack.c.b16 %v2896, %v2895
      %v3031 = vpack.c.b16 %v2898, %v2897
      %v3032 = vpack.c.b16 %v2900, %v2899
      %v3033 = vpack.c.b16 %v2902, %v2901
      %v3034 = vpack.c.b16 %v2904, %v2903
      %v3035 = vpack.c.b16 %v2906, %v2905
      %v3036 = vpack.c.b16 %v2908, %v2907
      %v3037 = vpack.c.b16 %v2910, %v2909
      %v3038 = vpack.c.b16 %v2912, %v2911
      %v3039 = vpack.c.b16 %v2914, %v2913
      %v3040 = vpack.c.b16 %v2916, %v2915
      %v3041 = vpack.c.b16 %v2918, %v2917
      %v3042 = vpack.c.b16 %v2920, %v2919
      %v3043 = vpack.c.b16 %v2922, %v2921
      %v3044 = vpack.c.b16 %v2924, %v2923
      %v3045 = vpack.c.b16 %v2926, %v2925
      %v3046 = vpack.c.b16 %v2928, %v2927
      %v3047 = vpack.c.b16 %v2930, %v2929
      %v3048 = vpack.c.b16 %v2932, %v2931
      %v3049 = vpack.c.b16 %v2934, %v2933
      %v3050 = vpack.c.b16 %v2936, %v2935
      %v3051 = vpack.c.b16 %v2938, %v2937
      %v3052 = vpack.c.b16 %v2940, %v2939
      %v3053 = vpack.c.b16 %v2942, %v2941
      %v3054 = vpack.c.b16 %v2944, %v2943
      %v3055 = vpack.c.b16 %v2946, %v2945
      %v3056 = vpack.c.b16 %v2948, %v2947
      %v3057 = vpack.c.b16 %v2950, %v2949
      %v3058 = vpack.c.b16 %v2952, %v2951
      %v3059 = vpack.c.b16 %v2954, %v2953
      %v3060 = vpack.c.b16 %v2956, %v2955
      %v3061 = vpack.c.b16 %v2958, %v2957
      %v3062 = vpack.c.b16 %v2960, %v2959
      %v3063 = vpack.c.b16 %v2962, %v2961
      %v3064 = vpack.c.b16 %v2964, %v2963
      %v3065 = vpack.c.b16 %v2966, %v2965
      %v3066 = vpack.c.b16 %v2968, %v2967
      %v3067 = vpack.c.b16 %v2970, %v2969
      %v3068 = vpack.c.b16 %v2972, %v2971
      %v3069 = vpack.c.b16 %v2974, %v2973
      %v3070 = vpack.c.b16 %v2976, %v2975
      %v3071 = vpack.c.b16 %v2978, %v2977
      %v3072 = vpack.c.b16 %v2980, %v2979
      %v3073 = vpack.c.b16 %v2982, %v2981
      %v3074 = vpack.c.b16 %v2984, %v2983
      %v3075 = vpack.c.b16 %v2986, %v2985
      %v3076 = vpack.c.b16 %v2988, %v2987
      %v3077 = vpack.c.b16 %v2990, %v2989
      %v3078 = vpack.c.b16 %v2992, %v2991
      %v3079 = vpack.c.b16 %v2994, %v2993
      %v3080 = vpack.c.b16 %v2996, %v2995
      %v3081 = vpack.c.b16 %v2998, %v2997
      %v3082 = vpack.c.b16 %v3000, %v2999
      %v3083 = vpack.c.b16 %v3002, %v3001
      %v3084 = vpack.c.b16 %v3004, %v3003
      %v3085 = vpack.c.b16 %v3006, %v3005
      %v3086 = vpack.c.b16 %v3008, %v3007
      %v3087 = vpack.c.b16 %v3010, %v3009
      %v3088 = vpack.c.b16 %v3012, %v3011
      %v3089 = vpack.c.b16 %v3014, %v3013
      %v3090 = vpack.c.b16 %v3016, %v3015
      %v3091 = vpack.c.b16 %v3018, %v3017
      %v3092 = vpack.c.b16 %v3020, %v3019
      %3165 = vmatpush.bf16.msra.mxu0 %v3028
      %3166 = vmatpush.bf16.msra.mxu0 %v3027
      %3167 = vmatpush.bf16.msra.mxu0 %v3026
      %3168 = vmatpush.bf16.msra.mxu0 %v3025
      %3169 = vmatpush.bf16.msra.mxu0 %v3024
      %3170 = vmatpush.bf16.msra.mxu0 %v3023
      %3171 = vmatpush.bf16.msra.mxu0 %v3022
      %3172 = vmatpush.bf16.msra.mxu0 %v3021
      %3173 = vmatmul.bf16.gmra.mxu0 %v1064
      %v3174 = vpop.f32.mrf.mxu0
      %v3175 = vadd.f32 %v2731, %v3174
      %v3176 = vpop.f32.mrf.mxu0
      %v3177 = vadd.f32 %v2731, %v3176
      %3178 = vmatmul.bf16.gmra.mxu0 %v1073
      %v3179 = vpop.f32.mrf.mxu0
      %v3180 = vadd.f32 %v2731, %v3179
      %v3181 = vpop.f32.mrf.mxu0
      %v3182 = vadd.f32 %v2731, %v3181
      %3183 = vmatmul.bf16.gmra.mxu0 %v1082
      %v3184 = vpop.f32.mrf.mxu0
      %v3185 = vadd.f32 %v2731, %v3184
      %v3186 = vpop.f32.mrf.mxu0
      %v3187 = vadd.f32 %v2731, %v3186
      %3188 = vmatmul.bf16.gmra.mxu0 %v1091
      %v3189 = vpop.f32.mrf.mxu0
      %v3190 = vadd.f32 %v2731, %v3189
      %v3191 = vpop.f32.mrf.mxu0
      %v3192 = vadd.f32 %v2731, %v3191
      %3193 = vmatmul.bf16.gmra.mxu0 %v1100
      %v3194 = vpop.f32.mrf.mxu0
      %v3195 = vadd.f32 %v2731, %v3194
      %v3196 = vpop.f32.mrf.mxu0
      %v3197 = vadd.f32 %v2731, %v3196
      %3198 = vmatmul.bf16.gmra.mxu0 %v1109
      %v3199 = vpop.f32.mrf.mxu0
      %v3200 = vadd.f32 %v2731, %v3199
      %v3201 = vpop.f32.mrf.mxu0
      %v3202 = vadd.f32 %v2731, %v3201
      %3203 = vmatmul.bf16.gmra.mxu0 %v1118
      %v3204 = vpop.f32.mrf.mxu0
      %v3205 = vadd.f32 %v2731, %v3204
      %v3206 = vpop.f32.mrf.mxu0
      %v3207 = vadd.f32 %v2731, %v3206
      %3208 = vmatmul.bf16.gmra.mxu0 %v1127
      %v3209 = vpop.f32.mrf.mxu0
      %v3210 = vadd.f32 %v2731, %v3209
      %v3211 = vpop.f32.mrf.mxu0
      %v3212 = vadd.f32 %v2731, %v3211
      %3213 = vmatmul.bf16.gmra.mxu0 %v1136
      %v3214 = vpop.f32.mrf.mxu0
      %v3215 = vadd.f32 %v2731, %v3214
      %v3216 = vpop.f32.mrf.mxu0
      %v3217 = vadd.f32 %v2731, %v3216
      %3218 = vmatmul.bf16.gmra.mxu0 %v1145
      %v3219 = vpop.f32.mrf.mxu0
      %v3220 = vadd.f32 %v2731, %v3219
      %v3221 = vpop.f32.mrf.mxu0
      %v3222 = vadd.f32 %v2731, %v3221
      %3223 = vmatmul.bf16.gmra.mxu0 %v1154
      %v3224 = vpop.f32.mrf.mxu0
      %v3225 = vadd.f32 %v2731, %v3224
      %v3226 = vpop.f32.mrf.mxu0
      %v3227 = vadd.f32 %v2731, %v3226
      %3228 = vmatmul.bf16.gmra.mxu0 %v1163
      %v3229 = vpop.f32.mrf.mxu0
      %v3230 = vadd.f32 %v2731, %v3229
      %v3231 = vpop.f32.mrf.mxu0
      %v3232 = vadd.f32 %v2731, %v3231
      %3233 = vmatmul.bf16.gmra.mxu0 %v1172
      %v3234 = vpop.f32.mrf.mxu0
      %v3235 = vadd.f32 %v2731, %v3234
      %v3236 = vpop.f32.mrf.mxu0
      %v3237 = vadd.f32 %v2731, %v3236
      %3238 = vmatmul.bf16.gmra.mxu0 %v1181
      %v3239 = vpop.f32.mrf.mxu0
      %v3240 = vadd.f32 %v2731, %v3239
      %v3241 = vpop.f32.mrf.mxu0
      %v3242 = vadd.f32 %v2731, %v3241
      %3243 = vmatmul.bf16.gmra.mxu0 %v1190
      %v3244 = vpop.f32.mrf.mxu0
      %v3245 = vadd.f32 %v2731, %v3244
      %v3246 = vpop.f32.mrf.mxu0
      %v3247 = vadd.f32 %v2731, %v3246
      %3248 = vmatmul.bf16.gmra.mxu0 %v1199
      %v3249 = vpop.f32.mrf.mxu0
      %v3250 = vadd.f32 %v2731, %v3249
      %v3251 = vpop.f32.mrf.mxu0
      %v3252 = vadd.f32 %v2731, %v3251
      %3253 = vdwg.mxu0
      %3254 = vmatpush.bf16.msra.mxu0 %v3036
      %3255 = vmatpush.bf16.msra.mxu0 %v3035
      %3256 = vmatpush.bf16.msra.mxu0 %v3034
      %3257 = vmatpush.bf16.msra.mxu0 %v3033
      %3258 = vmatpush.bf16.msra.mxu0 %v3032
      %3259 = vmatpush.bf16.msra.mxu0 %v3031
      %3260 = vmatpush.bf16.msra.mxu0 %v3030
      %3261 = vmatpush.bf16.msra.mxu0 %v3029
      %3262 = vmatmul.bf16.gmra.mxu0 %v1065
      %v3263 = vpop.f32.mrf.mxu0
      %v3264 = vadd.f32 %v3175, %v3263
      %v3265 = vpop.f32.mrf.mxu0
      %v3266 = vadd.f32 %v3177, %v3265
      %3267 = vmatmul.bf16.gmra.mxu0 %v1074
      %v3268 = vpop.f32.mrf.mxu0
      %v3269 = vadd.f32 %v3180, %v3268
      %v3270 = vpop.f32.mrf.mxu0
      %v3271 = vadd.f32 %v3182, %v3270
      %3272 = vmatmul.bf16.gmra.mxu0 %v1083
      %v3273 = vpop.f32.mrf.mxu0
      %v3274 = vadd.f32 %v3185, %v3273
      %v3275 = vpop.f32.mrf.mxu0
      %v3276 = vadd.f32 %v3187, %v3275
      %3277 = vmatmul.bf16.gmra.mxu0 %v1092
      %v3278 = vpop.f32.mrf.mxu0
      %v3279 = vadd.f32 %v3190, %v3278
      %v3280 = vpop.f32.mrf.mxu0
      %v3281 = vadd.f32 %v3192, %v3280
      %3282 = vmatmul.bf16.gmra.mxu0 %v1101
      %v3283 = vpop.f32.mrf.mxu0
      %v3284 = vadd.f32 %v3195, %v3283
      %v3285 = vpop.f32.mrf.mxu0
      %v3286 = vadd.f32 %v3197, %v3285
      %3287 = vmatmul.bf16.gmra.mxu0 %v1110
      %v3288 = vpop.f32.mrf.mxu0
      %v3289 = vadd.f32 %v3200, %v3288
      %v3290 = vpop.f32.mrf.mxu0
      %v3291 = vadd.f32 %v3202, %v3290
      %3292 = vmatmul.bf16.gmra.mxu0 %v1119
      %v3293 = vpop.f32.mrf.mxu0
      %v3294 = vadd.f32 %v3205, %v3293
      %v3295 = vpop.f32.mrf.mxu0
      %v3296 = vadd.f32 %v3207, %v3295
      %3297 = vmatmul.bf16.gmra.mxu0 %v1128
      %v3298 = vpop.f32.mrf.mxu0
      %v3299 = vadd.f32 %v3210, %v3298
      %v3300 = vpop.f32.mrf.mxu0
      %v3301 = vadd.f32 %v3212, %v3300
      %3302 = vmatmul.bf16.gmra.mxu0 %v1137
      %v3303 = vpop.f32.mrf.mxu0
      %v3304 = vadd.f32 %v3215, %v3303
      %v3305 = vpop.f32.mrf.mxu0
      %v3306 = vadd.f32 %v3217, %v3305
      %3307 = vmatmul.bf16.gmra.mxu0 %v1146
      %v3308 = vpop.f32.mrf.mxu0
      %v3309 = vadd.f32 %v3220, %v3308
      %v3310 = vpop.f32.mrf.mxu0
      %v3311 = vadd.f32 %v3222, %v3310
      %3312 = vmatmul.bf16.gmra.mxu0 %v1155
      %v3313 = vpop.f32.mrf.mxu0
      %v3314 = vadd.f32 %v3225, %v3313
      %v3315 = vpop.f32.mrf.mxu0
      %v3316 = vadd.f32 %v3227, %v3315
      %3317 = vmatmul.bf16.gmra.mxu0 %v1164
      %v3318 = vpop.f32.mrf.mxu0
      %v3319 = vadd.f32 %v3230, %v3318
      %v3320 = vpop.f32.mrf.mxu0
      %v3321 = vadd.f32 %v3232, %v3320
      %3322 = vmatmul.bf16.gmra.mxu0 %v1173
      %v3323 = vpop.f32.mrf.mxu0
      %v3324 = vadd.f32 %v3235, %v3323
      %v3325 = vpop.f32.mrf.mxu0
      %v3326 = vadd.f32 %v3237, %v3325
      %3327 = vmatmul.bf16.gmra.mxu0 %v1182
      %v3328 = vpop.f32.mrf.mxu0
      %v3329 = vadd.f32 %v3240, %v3328
      %v3330 = vpop.f32.mrf.mxu0
      %v3331 = vadd.f32 %v3242, %v3330
      %3332 = vmatmul.bf16.gmra.mxu0 %v1191
      %v3333 = vpop.f32.mrf.mxu0
      %v3334 = vadd.f32 %v3245, %v3333
      %v3335 = vpop.f32.mrf.mxu0
      %v3336 = vadd.f32 %v3247, %v3335
      %3337 = vmatmul.bf16.gmra.mxu0 %v1200
      %v3338 = vpop.f32.mrf.mxu0
      %v3339 = vadd.f32 %v3250, %v3338
      %v3340 = vpop.f32.mrf.mxu0
      %v3341 = vadd.f32 %v3252, %v3340
      %3342 = vdwg.mxu0
      %3343 = vmatpush.bf16.msra.mxu0 %v3044
      %3344 = vmatpush.bf16.msra.mxu0 %v3043
      %3345 = vmatpush.bf16.msra.mxu0 %v3042
      %3346 = vmatpush.bf16.msra.mxu0 %v3041
      %3347 = vmatpush.bf16.msra.mxu0 %v3040
      %3348 = vmatpush.bf16.msra.mxu0 %v3039
      %3349 = vmatpush.bf16.msra.mxu0 %v3038
      %3350 = vmatpush.bf16.msra.mxu0 %v3037
      %3351 = vmatmul.bf16.gmra.mxu0 %v1066
      %v3352 = vpop.f32.mrf.mxu0
      %v3353 = vadd.f32 %v3264, %v3352
      %v3354 = vpop.f32.mrf.mxu0
      %v3355 = vadd.f32 %v3266, %v3354
      %3356 = vmatmul.bf16.gmra.mxu0 %v1075
      %v3357 = vpop.f32.mrf.mxu0
      %v3358 = vadd.f32 %v3269, %v3357
      %v3359 = vpop.f32.mrf.mxu0
      %v3360 = vadd.f32 %v3271, %v3359
      %3361 = vmatmul.bf16.gmra.mxu0 %v1084
      %v3362 = vpop.f32.mrf.mxu0
      %v3363 = vadd.f32 %v3274, %v3362
      %v3364 = vpop.f32.mrf.mxu0
      %v3365 = vadd.f32 %v3276, %v3364
      %3366 = vmatmul.bf16.gmra.mxu0 %v1093
      %v3367 = vpop.f32.mrf.mxu0
      %v3368 = vadd.f32 %v3279, %v3367
      %v3369 = vpop.f32.mrf.mxu0
      %v3370 = vadd.f32 %v3281, %v3369
      %3371 = vmatmul.bf16.gmra.mxu0 %v1102
      %v3372 = vpop.f32.mrf.mxu0
      %v3373 = vadd.f32 %v3284, %v3372
      %v3374 = vpop.f32.mrf.mxu0
      %v3375 = vadd.f32 %v3286, %v3374
      %3376 = vmatmul.bf16.gmra.mxu0 %v1111
      %v3377 = vpop.f32.mrf.mxu0
      %v3378 = vadd.f32 %v3289, %v3377
      %v3379 = vpop.f32.mrf.mxu0
      %v3380 = vadd.f32 %v3291, %v3379
      %3381 = vmatmul.bf16.gmra.mxu0 %v1120
      %v3382 = vpop.f32.mrf.mxu0
      %v3383 = vadd.f32 %v3294, %v3382
      %v3384 = vpop.f32.mrf.mxu0
      %v3385 = vadd.f32 %v3296, %v3384
      %3386 = vmatmul.bf16.gmra.mxu0 %v1129
      %v3387 = vpop.f32.mrf.mxu0
      %v3388 = vadd.f32 %v3299, %v3387
      %v3389 = vpop.f32.mrf.mxu0
      %v3390 = vadd.f32 %v3301, %v3389
      %3391 = vmatmul.bf16.gmra.mxu0 %v1138
      %v3392 = vpop.f32.mrf.mxu0
      %v3393 = vadd.f32 %v3304, %v3392
      %v3394 = vpop.f32.mrf.mxu0
      %v3395 = vadd.f32 %v3306, %v3394
      %3396 = vmatmul.bf16.gmra.mxu0 %v1147
      %v3397 = vpop.f32.mrf.mxu0
      %v3398 = vadd.f32 %v3309, %v3397
      %v3399 = vpop.f32.mrf.mxu0
      %v3400 = vadd.f32 %v3311, %v3399
      %3401 = vmatmul.bf16.gmra.mxu0 %v1156
      %v3402 = vpop.f32.mrf.mxu0
      %v3403 = vadd.f32 %v3314, %v3402
      %v3404 = vpop.f32.mrf.mxu0
      %v3405 = vadd.f32 %v3316, %v3404
      %3406 = vmatmul.bf16.gmra.mxu0 %v1165
      %v3407 = vpop.f32.mrf.mxu0
      %v3408 = vadd.f32 %v3319, %v3407
      %v3409 = vpop.f32.mrf.mxu0
      %v3410 = vadd.f32 %v3321, %v3409
      %3411 = vmatmul.bf16.gmra.mxu0 %v1174
      %v3412 = vpop.f32.mrf.mxu0
      %v3413 = vadd.f32 %v3324, %v3412
      %v3414 = vpop.f32.mrf.mxu0
      %v3415 = vadd.f32 %v3326, %v3414
      %3416 = vmatmul.bf16.gmra.mxu0 %v1183
      %v3417 = vpop.f32.mrf.mxu0
      %v3418 = vadd.f32 %v3329, %v3417
      %v3419 = vpop.f32.mrf.mxu0
      %v3420 = vadd.f32 %v3331, %v3419
      %3421 = vmatmul.bf16.gmra.mxu0 %v1192
      %v3422 = vpop.f32.mrf.mxu0
      %v3423 = vadd.f32 %v3334, %v3422
      %v3424 = vpop.f32.mrf.mxu0
      %v3425 = vadd.f32 %v3336, %v3424
      %3426 = vmatmul.bf16.gmra.mxu0 %v1201
      %v3427 = vpop.f32.mrf.mxu0
      %v3428 = vadd.f32 %v3339, %v3427
      %v3429 = vpop.f32.mrf.mxu0
      %v3430 = vadd.f32 %v3341, %v3429
      %3431 = vdwg.mxu0
      %3432 = vmatpush.bf16.msra.mxu0 %v3052
      %3433 = vmatpush.bf16.msra.mxu0 %v3051
      %3434 = vmatpush.bf16.msra.mxu0 %v3050
      %3435 = vmatpush.bf16.msra.mxu0 %v3049
      %3436 = vmatpush.bf16.msra.mxu0 %v3048
      %3437 = vmatpush.bf16.msra.mxu0 %v3047
      %3438 = vmatpush.bf16.msra.mxu0 %v3046
      %3439 = vmatpush.bf16.msra.mxu0 %v3045
      %3440 = vmatmul.bf16.gmra.mxu0 %v1067
      %v3441 = vpop.f32.mrf.mxu0
      %v3442 = vadd.f32 %v3353, %v3441
      %v3443 = vpop.f32.mrf.mxu0
      %v3444 = vadd.f32 %v3355, %v3443
      %3445 = vmatmul.bf16.gmra.mxu0 %v1076
      %v3446 = vpop.f32.mrf.mxu0
      %v3447 = vadd.f32 %v3358, %v3446
      %v3448 = vpop.f32.mrf.mxu0
      %v3449 = vadd.f32 %v3360, %v3448
      %3450 = vmatmul.bf16.gmra.mxu0 %v1085
      %v3451 = vpop.f32.mrf.mxu0
      %v3452 = vadd.f32 %v3363, %v3451
      %v3453 = vpop.f32.mrf.mxu0
      %v3454 = vadd.f32 %v3365, %v3453
      %3455 = vmatmul.bf16.gmra.mxu0 %v1094
      %v3456 = vpop.f32.mrf.mxu0
      %v3457 = vadd.f32 %v3368, %v3456
      %v3458 = vpop.f32.mrf.mxu0
      %v3459 = vadd.f32 %v3370, %v3458
      %3460 = vmatmul.bf16.gmra.mxu0 %v1103
      %v3461 = vpop.f32.mrf.mxu0
      %v3462 = vadd.f32 %v3373, %v3461
      %v3463 = vpop.f32.mrf.mxu0
      %v3464 = vadd.f32 %v3375, %v3463
      %3465 = vmatmul.bf16.gmra.mxu0 %v1112
      %v3466 = vpop.f32.mrf.mxu0
      %v3467 = vadd.f32 %v3378, %v3466
      %v3468 = vpop.f32.mrf.mxu0
      %v3469 = vadd.f32 %v3380, %v3468
      %3470 = vmatmul.bf16.gmra.mxu0 %v1121
      %v3471 = vpop.f32.mrf.mxu0
      %v3472 = vadd.f32 %v3383, %v3471
      %v3473 = vpop.f32.mrf.mxu0
      %v3474 = vadd.f32 %v3385, %v3473
      %3475 = vmatmul.bf16.gmra.mxu0 %v1130
      %v3476 = vpop.f32.mrf.mxu0
      %v3477 = vadd.f32 %v3388, %v3476
      %v3478 = vpop.f32.mrf.mxu0
      %v3479 = vadd.f32 %v3390, %v3478
      %3480 = vmatmul.bf16.gmra.mxu0 %v1139
      %v3481 = vpop.f32.mrf.mxu0
      %v3482 = vadd.f32 %v3393, %v3481
      %v3483 = vpop.f32.mrf.mxu0
      %v3484 = vadd.f32 %v3395, %v3483
      %3485 = vmatmul.bf16.gmra.mxu0 %v1148
      %v3486 = vpop.f32.mrf.mxu0
      %v3487 = vadd.f32 %v3398, %v3486
      %v3488 = vpop.f32.mrf.mxu0
      %v3489 = vadd.f32 %v3400, %v3488
      %3490 = vmatmul.bf16.gmra.mxu0 %v1157
      %v3491 = vpop.f32.mrf.mxu0
      %v3492 = vadd.f32 %v3403, %v3491
      %v3493 = vpop.f32.mrf.mxu0
      %v3494 = vadd.f32 %v3405, %v3493
      %3495 = vmatmul.bf16.gmra.mxu0 %v1166
      %v3496 = vpop.f32.mrf.mxu0
      %v3497 = vadd.f32 %v3408, %v3496
      %v3498 = vpop.f32.mrf.mxu0
      %v3499 = vadd.f32 %v3410, %v3498
      %3500 = vmatmul.bf16.gmra.mxu0 %v1175
      %v3501 = vpop.f32.mrf.mxu0
      %v3502 = vadd.f32 %v3413, %v3501
      %v3503 = vpop.f32.mrf.mxu0
      %v3504 = vadd.f32 %v3415, %v3503
      %3505 = vmatmul.bf16.gmra.mxu0 %v1184
      %v3506 = vpop.f32.mrf.mxu0
      %v3507 = vadd.f32 %v3418, %v3506
      %v3508 = vpop.f32.mrf.mxu0
      %v3509 = vadd.f32 %v3420, %v3508
      %3510 = vmatmul.bf16.gmra.mxu0 %v1193
      %v3511 = vpop.f32.mrf.mxu0
      %v3512 = vadd.f32 %v3423, %v3511
      %v3513 = vpop.f32.mrf.mxu0
      %v3514 = vadd.f32 %v3425, %v3513
      %3515 = vmatmul.bf16.gmra.mxu0 %v1202
      %v3516 = vpop.f32.mrf.mxu0
      %v3517 = vadd.f32 %v3428, %v3516
      %v3518 = vpop.f32.mrf.mxu0
      %v3519 = vadd.f32 %v3430, %v3518
      %3520 = vdwg.mxu0
      %3521 = vmatpush.bf16.msra.mxu0 %v3060
      %3522 = vmatpush.bf16.msra.mxu0 %v3059
      %3523 = vmatpush.bf16.msra.mxu0 %v3058
      %3524 = vmatpush.bf16.msra.mxu0 %v3057
      %3525 = vmatpush.bf16.msra.mxu0 %v3056
      %3526 = vmatpush.bf16.msra.mxu0 %v3055
      %3527 = vmatpush.bf16.msra.mxu0 %v3054
      %3528 = vmatpush.bf16.msra.mxu0 %v3053
      %3529 = vmatmul.bf16.gmra.mxu0 %v1068
      %v3530 = vpop.f32.mrf.mxu0
      %v3531 = vadd.f32 %v3442, %v3530
      %v3532 = vpop.f32.mrf.mxu0
      %v3533 = vadd.f32 %v3444, %v3532
      %3534 = vmatmul.bf16.gmra.mxu0 %v1077
      %v3535 = vpop.f32.mrf.mxu0
      %v3536 = vadd.f32 %v3447, %v3535
      %v3537 = vpop.f32.mrf.mxu0
      %v3538 = vadd.f32 %v3449, %v3537
      %3539 = vmatmul.bf16.gmra.mxu0 %v1086
      %v3540 = vpop.f32.mrf.mxu0
      %v3541 = vadd.f32 %v3452, %v3540
      %v3542 = vpop.f32.mrf.mxu0
      %v3543 = vadd.f32 %v3454, %v3542
      %3544 = vmatmul.bf16.gmra.mxu0 %v1095
      %v3545 = vpop.f32.mrf.mxu0
      %v3546 = vadd.f32 %v3457, %v3545
      %v3547 = vpop.f32.mrf.mxu0
      %v3548 = vadd.f32 %v3459, %v3547
      %3549 = vmatmul.bf16.gmra.mxu0 %v1104
      %v3550 = vpop.f32.mrf.mxu0
      %v3551 = vadd.f32 %v3462, %v3550
      %v3552 = vpop.f32.mrf.mxu0
      %v3553 = vadd.f32 %v3464, %v3552
      %3554 = vmatmul.bf16.gmra.mxu0 %v1113
      %v3555 = vpop.f32.mrf.mxu0
      %v3556 = vadd.f32 %v3467, %v3555
      %v3557 = vpop.f32.mrf.mxu0
      %v3558 = vadd.f32 %v3469, %v3557
      %3559 = vmatmul.bf16.gmra.mxu0 %v1122
      %v3560 = vpop.f32.mrf.mxu0
      %v3561 = vadd.f32 %v3472, %v3560
      %v3562 = vpop.f32.mrf.mxu0
      %v3563 = vadd.f32 %v3474, %v3562
      %3564 = vmatmul.bf16.gmra.mxu0 %v1131
      %v3565 = vpop.f32.mrf.mxu0
      %v3566 = vadd.f32 %v3477, %v3565
      %v3567 = vpop.f32.mrf.mxu0
      %v3568 = vadd.f32 %v3479, %v3567
      %3569 = vmatmul.bf16.gmra.mxu0 %v1140
      %v3570 = vpop.f32.mrf.mxu0
      %v3571 = vadd.f32 %v3482, %v3570
      %v3572 = vpop.f32.mrf.mxu0
      %v3573 = vadd.f32 %v3484, %v3572
      %3574 = vmatmul.bf16.gmra.mxu0 %v1149
      %v3575 = vpop.f32.mrf.mxu0
      %v3576 = vadd.f32 %v3487, %v3575
      %v3577 = vpop.f32.mrf.mxu0
      %v3578 = vadd.f32 %v3489, %v3577
      %3579 = vmatmul.bf16.gmra.mxu0 %v1158
      %v3580 = vpop.f32.mrf.mxu0
      %v3581 = vadd.f32 %v3492, %v3580
      %v3582 = vpop.f32.mrf.mxu0
      %v3583 = vadd.f32 %v3494, %v3582
      %3584 = vmatmul.bf16.gmra.mxu0 %v1167
      %v3585 = vpop.f32.mrf.mxu0
      %v3586 = vadd.f32 %v3497, %v3585
      %v3587 = vpop.f32.mrf.mxu0
      %v3588 = vadd.f32 %v3499, %v3587
      %3589 = vmatmul.bf16.gmra.mxu0 %v1176
      %v3590 = vpop.f32.mrf.mxu0
      %v3591 = vadd.f32 %v3502, %v3590
      %v3592 = vpop.f32.mrf.mxu0
      %v3593 = vadd.f32 %v3504, %v3592
      %3594 = vmatmul.bf16.gmra.mxu0 %v1185
      %v3595 = vpop.f32.mrf.mxu0
      %v3596 = vadd.f32 %v3507, %v3595
      %v3597 = vpop.f32.mrf.mxu0
      %v3598 = vadd.f32 %v3509, %v3597
      %3599 = vmatmul.bf16.gmra.mxu0 %v1194
      %v3600 = vpop.f32.mrf.mxu0
      %v3601 = vadd.f32 %v3512, %v3600
      %v3602 = vpop.f32.mrf.mxu0
      %v3603 = vadd.f32 %v3514, %v3602
      %3604 = vmatmul.bf16.gmra.mxu0 %v1203
      %v3605 = vpop.f32.mrf.mxu0
      %v3606 = vadd.f32 %v3517, %v3605
      %v3607 = vpop.f32.mrf.mxu0
      %v3608 = vadd.f32 %v3519, %v3607
      %3609 = vdwg.mxu0
      %3610 = vmatpush.bf16.msra.mxu0 %v3068
      %3611 = vmatpush.bf16.msra.mxu0 %v3067
      %3612 = vmatpush.bf16.msra.mxu0 %v3066
      %3613 = vmatpush.bf16.msra.mxu0 %v3065
      %3614 = vmatpush.bf16.msra.mxu0 %v3064
      %3615 = vmatpush.bf16.msra.mxu0 %v3063
      %3616 = vmatpush.bf16.msra.mxu0 %v3062
      %3617 = vmatpush.bf16.msra.mxu0 %v3061
      %3618 = vmatmul.bf16.gmra.mxu0 %v1069
      %v3619 = vpop.f32.mrf.mxu0
      %v3620 = vadd.f32 %v3531, %v3619
      %v3621 = vpop.f32.mrf.mxu0
      %v3622 = vadd.f32 %v3533, %v3621
      %3623 = vmatmul.bf16.gmra.mxu0 %v1078
      %v3624 = vpop.f32.mrf.mxu0
      %v3625 = vadd.f32 %v3536, %v3624
      %v3626 = vpop.f32.mrf.mxu0
      %v3627 = vadd.f32 %v3538, %v3626
      %3628 = vmatmul.bf16.gmra.mxu0 %v1087
      %v3629 = vpop.f32.mrf.mxu0
      %v3630 = vadd.f32 %v3541, %v3629
      %v3631 = vpop.f32.mrf.mxu0
      %v3632 = vadd.f32 %v3543, %v3631
      %3633 = vmatmul.bf16.gmra.mxu0 %v1096
      %v3634 = vpop.f32.mrf.mxu0
      %v3635 = vadd.f32 %v3546, %v3634
      %v3636 = vpop.f32.mrf.mxu0
      %v3637 = vadd.f32 %v3548, %v3636
      %3638 = vmatmul.bf16.gmra.mxu0 %v1105
      %v3639 = vpop.f32.mrf.mxu0
      %v3640 = vadd.f32 %v3551, %v3639
      %v3641 = vpop.f32.mrf.mxu0
      %v3642 = vadd.f32 %v3553, %v3641
      %3643 = vmatmul.bf16.gmra.mxu0 %v1114
      %v3644 = vpop.f32.mrf.mxu0
      %v3645 = vadd.f32 %v3556, %v3644
      %v3646 = vpop.f32.mrf.mxu0
      %v3647 = vadd.f32 %v3558, %v3646
      %3648 = vmatmul.bf16.gmra.mxu0 %v1123
      %v3649 = vpop.f32.mrf.mxu0
      %v3650 = vadd.f32 %v3561, %v3649
      %v3651 = vpop.f32.mrf.mxu0
      %v3652 = vadd.f32 %v3563, %v3651
      %3653 = vmatmul.bf16.gmra.mxu0 %v1132
      %v3654 = vpop.f32.mrf.mxu0
      %v3655 = vadd.f32 %v3566, %v3654
      %v3656 = vpop.f32.mrf.mxu0
      %v3657 = vadd.f32 %v3568, %v3656
      %3658 = vmatmul.bf16.gmra.mxu0 %v1141
      %v3659 = vpop.f32.mrf.mxu0
      %v3660 = vadd.f32 %v3571, %v3659
      %v3661 = vpop.f32.mrf.mxu0
      %v3662 = vadd.f32 %v3573, %v3661
      %3663 = vmatmul.bf16.gmra.mxu0 %v1150
      %v3664 = vpop.f32.mrf.mxu0
      %v3665 = vadd.f32 %v3576, %v3664
      %v3666 = vpop.f32.mrf.mxu0
      %v3667 = vadd.f32 %v3578, %v3666
      %3668 = vmatmul.bf16.gmra.mxu0 %v1159
      %v3669 = vpop.f32.mrf.mxu0
      %v3670 = vadd.f32 %v3581, %v3669
      %v3671 = vpop.f32.mrf.mxu0
      %v3672 = vadd.f32 %v3583, %v3671
      %3673 = vmatmul.bf16.gmra.mxu0 %v1168
      %v3674 = vpop.f32.mrf.mxu0
      %v3675 = vadd.f32 %v3586, %v3674
      %v3676 = vpop.f32.mrf.mxu0
      %v3677 = vadd.f32 %v3588, %v3676
      %3678 = vmatmul.bf16.gmra.mxu0 %v1177
      %v3679 = vpop.f32.mrf.mxu0
      %v3680 = vadd.f32 %v3591, %v3679
      %v3681 = vpop.f32.mrf.mxu0
      %v3682 = vadd.f32 %v3593, %v3681
      %3683 = vmatmul.bf16.gmra.mxu0 %v1186
      %v3684 = vpop.f32.mrf.mxu0
      %v3685 = vadd.f32 %v3596, %v3684
      %v3686 = vpop.f32.mrf.mxu0
      %v3687 = vadd.f32 %v3598, %v3686
      %3688 = vmatmul.bf16.gmra.mxu0 %v1195
      %v3689 = vpop.f32.mrf.mxu0
      %v3690 = vadd.f32 %v3601, %v3689
      %v3691 = vpop.f32.mrf.mxu0
      %v3692 = vadd.f32 %v3603, %v3691
      %3693 = vmatmul.bf16.gmra.mxu0 %v1204
      %v3694 = vpop.f32.mrf.mxu0
      %v3695 = vadd.f32 %v3606, %v3694
      %v3696 = vpop.f32.mrf.mxu0
      %v3697 = vadd.f32 %v3608, %v3696
      %3698 = vdwg.mxu0
      %3699 = vmatpush.bf16.msra.mxu0 %v3076
      %3700 = vmatpush.bf16.msra.mxu0 %v3075
      %3701 = vmatpush.bf16.msra.mxu0 %v3074
      %3702 = vmatpush.bf16.msra.mxu0 %v3073
      %3703 = vmatpush.bf16.msra.mxu0 %v3072
      %3704 = vmatpush.bf16.msra.mxu0 %v3071
      %3705 = vmatpush.bf16.msra.mxu0 %v3070
      %3706 = vmatpush.bf16.msra.mxu0 %v3069
      %3707 = vmatmul.bf16.gmra.mxu0 %v1070
      %v3708 = vpop.f32.mrf.mxu0
      %v3709 = vadd.f32 %v3620, %v3708
      %v3710 = vpop.f32.mrf.mxu0
      %v3711 = vadd.f32 %v3622, %v3710
      %3712 = vmatmul.bf16.gmra.mxu0 %v1079
      %v3713 = vpop.f32.mrf.mxu0
      %v3714 = vadd.f32 %v3625, %v3713
      %v3715 = vpop.f32.mrf.mxu0
      %v3716 = vadd.f32 %v3627, %v3715
      %3717 = vmatmul.bf16.gmra.mxu0 %v1088
      %v3718 = vpop.f32.mrf.mxu0
      %v3719 = vadd.f32 %v3630, %v3718
      %v3720 = vpop.f32.mrf.mxu0
      %v3721 = vadd.f32 %v3632, %v3720
      %3722 = vmatmul.bf16.gmra.mxu0 %v1097
      %v3723 = vpop.f32.mrf.mxu0
      %v3724 = vadd.f32 %v3635, %v3723
      %v3725 = vpop.f32.mrf.mxu0
      %v3726 = vadd.f32 %v3637, %v3725
      %3727 = vmatmul.bf16.gmra.mxu0 %v1106
      %v3728 = vpop.f32.mrf.mxu0
      %v3729 = vadd.f32 %v3640, %v3728
      %v3730 = vpop.f32.mrf.mxu0
      %v3731 = vadd.f32 %v3642, %v3730
      %3732 = vmatmul.bf16.gmra.mxu0 %v1115
      %v3733 = vpop.f32.mrf.mxu0
      %v3734 = vadd.f32 %v3645, %v3733
      %v3735 = vpop.f32.mrf.mxu0
      %v3736 = vadd.f32 %v3647, %v3735
      %3737 = vmatmul.bf16.gmra.mxu0 %v1124
      %v3738 = vpop.f32.mrf.mxu0
      %v3739 = vadd.f32 %v3650, %v3738
      %v3740 = vpop.f32.mrf.mxu0
      %v3741 = vadd.f32 %v3652, %v3740
      %3742 = vmatmul.bf16.gmra.mxu0 %v1133
      %v3743 = vpop.f32.mrf.mxu0
      %v3744 = vadd.f32 %v3655, %v3743
      %v3745 = vpop.f32.mrf.mxu0
      %v3746 = vadd.f32 %v3657, %v3745
      %3747 = vmatmul.bf16.gmra.mxu0 %v1142
      %v3748 = vpop.f32.mrf.mxu0
      %v3749 = vadd.f32 %v3660, %v3748
      %v3750 = vpop.f32.mrf.mxu0
      %v3751 = vadd.f32 %v3662, %v3750
      %3752 = vmatmul.bf16.gmra.mxu0 %v1151
      %v3753 = vpop.f32.mrf.mxu0
      %v3754 = vadd.f32 %v3665, %v3753
      %v3755 = vpop.f32.mrf.mxu0
      %v3756 = vadd.f32 %v3667, %v3755
      %3757 = vmatmul.bf16.gmra.mxu0 %v1160
      %v3758 = vpop.f32.mrf.mxu0
      %v3759 = vadd.f32 %v3670, %v3758
      %v3760 = vpop.f32.mrf.mxu0
      %v3761 = vadd.f32 %v3672, %v3760
      %3762 = vmatmul.bf16.gmra.mxu0 %v1169
      %v3763 = vpop.f32.mrf.mxu0
      %v3764 = vadd.f32 %v3675, %v3763
      %v3765 = vpop.f32.mrf.mxu0
      %v3766 = vadd.f32 %v3677, %v3765
      %3767 = vmatmul.bf16.gmra.mxu0 %v1178
      %v3768 = vpop.f32.mrf.mxu0
      %v3769 = vadd.f32 %v3680, %v3768
      %v3770 = vpop.f32.mrf.mxu0
      %v3771 = vadd.f32 %v3682, %v3770
      %3772 = vmatmul.bf16.gmra.mxu0 %v1187
      %v3773 = vpop.f32.mrf.mxu0
      %v3774 = vadd.f32 %v3685, %v3773
      %v3775 = vpop.f32.mrf.mxu0
      %v3776 = vadd.f32 %v3687, %v3775
      %3777 = vmatmul.bf16.gmra.mxu0 %v1196
      %v3778 = vpop.f32.mrf.mxu0
      %v3779 = vadd.f32 %v3690, %v3778
      %v3780 = vpop.f32.mrf.mxu0
      %v3781 = vadd.f32 %v3692, %v3780
      %3782 = vmatmul.bf16.gmra.mxu0 %v1205
      %v3783 = vpop.f32.mrf.mxu0
      %v3784 = vadd.f32 %v3695, %v3783
      %v3785 = vpop.f32.mrf.mxu0
      %v3786 = vadd.f32 %v3697, %v3785
      %3787 = vdwg.mxu0
      %3788 = vmatpush.bf16.msra.mxu0 %v3084
      %3789 = vmatpush.bf16.msra.mxu0 %v3083
      %3790 = vmatpush.bf16.msra.mxu0 %v3082
      %3791 = vmatpush.bf16.msra.mxu0 %v3081
      %3792 = vmatpush.bf16.msra.mxu0 %v3080
      %3793 = vmatpush.bf16.msra.mxu0 %v3079
      %3794 = vmatpush.bf16.msra.mxu0 %v3078
      %3795 = vmatpush.bf16.msra.mxu0 %v3077
      %3796 = vmatmul.bf16.gmra.mxu0 %v1071
      %v3797 = vpop.f32.mrf.mxu0
      %v3798 = vadd.f32 %v3709, %v3797
      %v3799 = vpop.f32.mrf.mxu0
      %v3800 = vadd.f32 %v3711, %v3799
      %3801 = vmatmul.bf16.gmra.mxu0 %v1080
      %v3802 = vpop.f32.mrf.mxu0
      %v3803 = vadd.f32 %v3714, %v3802
      %v3804 = vpop.f32.mrf.mxu0
      %v3805 = vadd.f32 %v3716, %v3804
      %3806 = vmatmul.bf16.gmra.mxu0 %v1089
      %v3807 = vpop.f32.mrf.mxu0
      %v3808 = vadd.f32 %v3719, %v3807
      %v3809 = vpop.f32.mrf.mxu0
      %v3810 = vadd.f32 %v3721, %v3809
      %3811 = vmatmul.bf16.gmra.mxu0 %v1098
      %v3812 = vpop.f32.mrf.mxu0
      %v3813 = vadd.f32 %v3724, %v3812
      %v3814 = vpop.f32.mrf.mxu0
      %v3815 = vadd.f32 %v3726, %v3814
      %3816 = vmatmul.bf16.gmra.mxu0 %v1107
      %v3817 = vpop.f32.mrf.mxu0
      %v3818 = vadd.f32 %v3729, %v3817
      %v3819 = vpop.f32.mrf.mxu0
      %v3820 = vadd.f32 %v3731, %v3819
      %3821 = vmatmul.bf16.gmra.mxu0 %v1116
      %v3822 = vpop.f32.mrf.mxu0
      %v3823 = vadd.f32 %v3734, %v3822
      %v3824 = vpop.f32.mrf.mxu0
      %v3825 = vadd.f32 %v3736, %v3824
      %3826 = vmatmul.bf16.gmra.mxu0 %v1125
      %v3827 = vpop.f32.mrf.mxu0
      %v3828 = vadd.f32 %v3739, %v3827
      %v3829 = vpop.f32.mrf.mxu0
      %v3830 = vadd.f32 %v3741, %v3829
      %3831 = vmatmul.bf16.gmra.mxu0 %v1134
      %v3832 = vpop.f32.mrf.mxu0
      %v3833 = vadd.f32 %v3744, %v3832
      %v3834 = vpop.f32.mrf.mxu0
      %v3835 = vadd.f32 %v3746, %v3834
      %3836 = vmatmul.bf16.gmra.mxu0 %v1143
      %v3837 = vpop.f32.mrf.mxu0
      %v3838 = vadd.f32 %v3749, %v3837
      %v3839 = vpop.f32.mrf.mxu0
      %v3840 = vadd.f32 %v3751, %v3839
      %3841 = vmatmul.bf16.gmra.mxu0 %v1152
      %v3842 = vpop.f32.mrf.mxu0
      %v3843 = vadd.f32 %v3754, %v3842
      %v3844 = vpop.f32.mrf.mxu0
      %v3845 = vadd.f32 %v3756, %v3844
      %3846 = vmatmul.bf16.gmra.mxu0 %v1161
      %v3847 = vpop.f32.mrf.mxu0
      %v3848 = vadd.f32 %v3759, %v3847
      %v3849 = vpop.f32.mrf.mxu0
      %v3850 = vadd.f32 %v3761, %v3849
      %3851 = vmatmul.bf16.gmra.mxu0 %v1170
      %v3852 = vpop.f32.mrf.mxu0
      %v3853 = vadd.f32 %v3764, %v3852
      %v3854 = vpop.f32.mrf.mxu0
      %v3855 = vadd.f32 %v3766, %v3854
      %3856 = vmatmul.bf16.gmra.mxu0 %v1179
      %v3857 = vpop.f32.mrf.mxu0
      %v3858 = vadd.f32 %v3769, %v3857
      %v3859 = vpop.f32.mrf.mxu0
      %v3860 = vadd.f32 %v3771, %v3859
      %3861 = vmatmul.bf16.gmra.mxu0 %v1188
      %v3862 = vpop.f32.mrf.mxu0
      %v3863 = vadd.f32 %v3774, %v3862
      %v3864 = vpop.f32.mrf.mxu0
      %v3865 = vadd.f32 %v3776, %v3864
      %3866 = vmatmul.bf16.gmra.mxu0 %v1197
      %v3867 = vpop.f32.mrf.mxu0
      %v3868 = vadd.f32 %v3779, %v3867
      %v3869 = vpop.f32.mrf.mxu0
      %v3870 = vadd.f32 %v3781, %v3869
      %3871 = vmatmul.bf16.gmra.mxu0 %v1206
      %v3872 = vpop.f32.mrf.mxu0
      %v3873 = vadd.f32 %v3784, %v3872
      %v3874 = vpop.f32.mrf.mxu0
      %v3875 = vadd.f32 %v3786, %v3874
      %3876 = vdwg.mxu0
      %3877 = vmatpush.bf16.msra.mxu0 %v3092
      %3878 = vmatpush.bf16.msra.mxu0 %v3091
      %3879 = vmatpush.bf16.msra.mxu0 %v3090
      %3880 = vmatpush.bf16.msra.mxu0 %v3089
      %3881 = vmatpush.bf16.msra.mxu0 %v3088
      %3882 = vmatpush.bf16.msra.mxu0 %v3087
      %3883 = vmatpush.bf16.msra.mxu0 %v3086
      %3884 = vmatpush.bf16.msra.mxu0 %v3085
      %3885 = vmatmul.bf16.gmra.mxu0 %v1072
      %v3886 = vpop.f32.mrf.mxu0
      %v3887 = vadd.f32 %v3798, %v3886
      %v3888 = vpop.f32.mrf.mxu0
      %v3889 = vadd.f32 %v3800, %v3888
      %3890 = vmatmul.bf16.gmra.mxu0 %v1081
      %v3891 = vpop.f32.mrf.mxu0
      %v3892 = vadd.f32 %v3803, %v3891
      %v3893 = vpop.f32.mrf.mxu0
      %v3894 = vadd.f32 %v3805, %v3893
      %3895 = vmatmul.bf16.gmra.mxu0 %v1090
      %v3896 = vpop.f32.mrf.mxu0
      %v3897 = vadd.f32 %v3808, %v3896
      %v3898 = vpop.f32.mrf.mxu0
      %v3899 = vadd.f32 %v3810, %v3898
      %3900 = vmatmul.bf16.gmra.mxu0 %v1099
      %v3901 = vpop.f32.mrf.mxu0
      %v3902 = vadd.f32 %v3813, %v3901
      %v3903 = vpop.f32.mrf.mxu0
      %v3904 = vadd.f32 %v3815, %v3903
      %3905 = vmatmul.bf16.gmra.mxu0 %v1108
      %v3906 = vpop.f32.mrf.mxu0
      %v3907 = vadd.f32 %v3818, %v3906
      %v3908 = vpop.f32.mrf.mxu0
      %v3909 = vadd.f32 %v3820, %v3908
      %3910 = vmatmul.bf16.gmra.mxu0 %v1117
      %v3911 = vpop.f32.mrf.mxu0
      %v3912 = vadd.f32 %v3823, %v3911
      %v3913 = vpop.f32.mrf.mxu0
      %v3914 = vadd.f32 %v3825, %v3913
      %3915 = vmatmul.bf16.gmra.mxu0 %v1126
      %v3916 = vpop.f32.mrf.mxu0
      %v3917 = vadd.f32 %v3828, %v3916
      %v3918 = vpop.f32.mrf.mxu0
      %v3919 = vadd.f32 %v3830, %v3918
      %3920 = vmatmul.bf16.gmra.mxu0 %v1135
      %v3921 = vpop.f32.mrf.mxu0
      %v3922 = vadd.f32 %v3833, %v3921
      %v3923 = vpop.f32.mrf.mxu0
      %v3924 = vadd.f32 %v3835, %v3923
      %3925 = vmatmul.bf16.gmra.mxu0 %v1144
      %v3926 = vpop.f32.mrf.mxu0
      %v3927 = vadd.f32 %v3838, %v3926
      %v3928 = vpop.f32.mrf.mxu0
      %v3929 = vadd.f32 %v3840, %v3928
      %3930 = vmatmul.bf16.gmra.mxu0 %v1153
      %v3931 = vpop.f32.mrf.mxu0
      %v3932 = vadd.f32 %v3843, %v3931
      %v3933 = vpop.f32.mrf.mxu0
      %v3934 = vadd.f32 %v3845, %v3933
      %3935 = vmatmul.bf16.gmra.mxu0 %v1162
      %v3936 = vpop.f32.mrf.mxu0
      %v3937 = vadd.f32 %v3848, %v3936
      %v3938 = vpop.f32.mrf.mxu0
      %v3939 = vadd.f32 %v3850, %v3938
      %3940 = vmatmul.bf16.gmra.mxu0 %v1171
      %v3941 = vpop.f32.mrf.mxu0
      %v3942 = vadd.f32 %v3853, %v3941
      %v3943 = vpop.f32.mrf.mxu0
      %v3944 = vadd.f32 %v3855, %v3943
      %3945 = vmatmul.bf16.gmra.mxu0 %v1180
      %v3946 = vpop.f32.mrf.mxu0
      %v3947 = vadd.f32 %v3858, %v3946
      %v3948 = vpop.f32.mrf.mxu0
      %v3949 = vadd.f32 %v3860, %v3948
      %3950 = vmatmul.bf16.gmra.mxu0 %v1189
      %v3951 = vpop.f32.mrf.mxu0
      %v3952 = vadd.f32 %v3863, %v3951
      %v3953 = vpop.f32.mrf.mxu0
      %v3954 = vadd.f32 %v3865, %v3953
      %3955 = vmatmul.bf16.gmra.mxu0 %v1198
      %v3956 = vpop.f32.mrf.mxu0
      %v3957 = vadd.f32 %v3868, %v3956
      %v3958 = vpop.f32.mrf.mxu0
      %v3959 = vadd.f32 %v3870, %v3958
      %3960 = vmatmul.bf16.gmra.mxu0 %v1207
      %v3961 = vpop.f32.mrf.mxu0
      %v3962 = vadd.f32 %v3873, %v3961
      %v3963 = vpop.f32.mrf.mxu0
      %v3964 = vadd.f32 %v3875, %v3963
      %3965 = vdwg.mxu0
      %v3966 = vld [vmem:[%s294] sm:$0xff]
      %v3967 = vld [vmem:[%s294 + $0x8] sm:$0xff]
      %v3968 = vld [vmem:[%s294 + $0x10] sm:$0xff]
      %v3969 = vld [vmem:[%s294 + $0x18] sm:$0xff]
      %v3970 = vld [vmem:[%s294 + $0x20] sm:$0xff]
      %v3971 = vld [vmem:[%s294 + $0x28] sm:$0xff]
      %v3972 = vld [vmem:[%s294 + $0x30] sm:$0xff]
      %v3973 = vld [vmem:[%s294 + $0x38] sm:$0xff]
      %v3974 = vld [vmem:[%s294 + $0x40] sm:$0xff]
      %v3975 = vld [vmem:[%s294 + $0x48] sm:$0xff]
      %v3976 = vld [vmem:[%s294 + $0x50] sm:$0xff]
      %v3977 = vld [vmem:[%s294 + $0x58] sm:$0xff]
      %v3978 = vld [vmem:[%s294 + $0x60] sm:$0xff]
      %v3979 = vld [vmem:[%s294 + $0x68] sm:$0xff]
      %v3980 = vld [vmem:[%s294 + $0x70] sm:$0xff]
      %v3981 = vld [vmem:[%s294 + $0x78] sm:$0xff]
      %v3982 = vld [vmem:[%s294 + $0x80] sm:$0xff]
      %v3983 = vld [vmem:[%s294 + $0x88] sm:$0xff]
      %v3984 = vld [vmem:[%s294 + $0x90] sm:$0xff]
      %v3985 = vld [vmem:[%s294 + $0x98] sm:$0xff]
      %v3986 = vld [vmem:[%s294 + $0xa0] sm:$0xff]
      %v3987 = vld [vmem:[%s294 + $0xa8] sm:$0xff]
      %v3988 = vld [vmem:[%s294 + $0xb0] sm:$0xff]
      %v3989 = vld [vmem:[%s294 + $0xb8] sm:$0xff]
      %v3990 = vld [vmem:[%s294 + $0xc0] sm:$0xff]
      %v3991 = vld [vmem:[%s294 + $0xc8] sm:$0xff]
      %v3992 = vld [vmem:[%s294 + $0xd0] sm:$0xff]
      %v3993 = vld [vmem:[%s294 + $0xd8] sm:$0xff]
      %v3994 = vld [vmem:[%s294 + $0xe0] sm:$0xff]
      %v3995 = vld [vmem:[%s294 + $0xe8] sm:$0xff]
      %v3996 = vld [vmem:[%s294 + $0xf0] sm:$0xff]
      %v3997 = vld [vmem:[%s294 + $0xf8] sm:$0xff]
      %v3998 = vadd.f32 %v2506, 1.0
      %v3999 = vadd.f32 %v2508, 1.0
      %v4000 = vadd.f32 %v2511, 1.0
      %v4001 = vadd.f32 %v2513, 1.0
      %v4002 = vadd.f32 %v2516, 1.0
      %v4003 = vadd.f32 %v2518, 1.0
      %v4004 = vadd.f32 %v2521, 1.0
      %v4005 = vadd.f32 %v2523, 1.0
      %v4006 = vadd.f32 %v2526, 1.0
      %v4007 = vadd.f32 %v2528, 1.0
      %v4008 = vadd.f32 %v2531, 1.0
      %v4009 = vadd.f32 %v2533, 1.0
      %v4010 = vadd.f32 %v2536, 1.0
      %v4011 = vadd.f32 %v2538, 1.0
      %v4012 = vadd.f32 %v2541, 1.0
      %v4013 = vadd.f32 %v2543, 1.0
      %v4014 = vadd.f32 %v2546, 1.0
      %v4015 = vadd.f32 %v2548, 1.0
      %v4016 = vadd.f32 %v2551, 1.0
      %v4017 = vadd.f32 %v2553, 1.0
      %v4018 = vadd.f32 %v2556, 1.0
      %v4019 = vadd.f32 %v2558, 1.0
      %v4020 = vadd.f32 %v2561, 1.0
      %v4021 = vadd.f32 %v2563, 1.0
      %v4022 = vadd.f32 %v2566, 1.0
      %v4023 = vadd.f32 %v2568, 1.0
      %v4024 = vadd.f32 %v2571, 1.0
      %v4025 = vadd.f32 %v2573, 1.0
      %v4026 = vadd.f32 %v2576, 1.0
      %v4027 = vadd.f32 %v2578, 1.0
      %v4028 = vadd.f32 %v2581, 1.0
      %v4029 = vadd.f32 %v2583, 1.0
      %v4030 = vmul.f32 %v3966, %v3998
      %v4031 = vmul.f32 %v3967, %v3999
      %v4032 = vmul.f32 %v3968, %v4000
      %v4033 = vmul.f32 %v3969, %v4001
      %v4034 = vmul.f32 %v3970, %v4002
      %v4035 = vmul.f32 %v3971, %v4003
      %v4036 = vmul.f32 %v3972, %v4004
      %v4037 = vmul.f32 %v3973, %v4005
      %v4038 = vmul.f32 %v3974, %v4006
      %v4039 = vmul.f32 %v3975, %v4007
      %v4040 = vmul.f32 %v3976, %v4008
      %v4041 = vmul.f32 %v3977, %v4009
      %v4042 = vmul.f32 %v3978, %v4010
      %v4043 = vmul.f32 %v3979, %v4011
      %v4044 = vmul.f32 %v3980, %v4012
      %v4045 = vmul.f32 %v3981, %v4013
      %v4046 = vmul.f32 %v3982, %v4014
      %v4047 = vmul.f32 %v3983, %v4015
      %v4048 = vmul.f32 %v3984, %v4016
      %v4049 = vmul.f32 %v3985, %v4017
      %v4050 = vmul.f32 %v3986, %v4018
      %v4051 = vmul.f32 %v3987, %v4019
      %v4052 = vmul.f32 %v3988, %v4020
      %v4053 = vmul.f32 %v3989, %v4021
      %v4054 = vmul.f32 %v3990, %v4022
      %v4055 = vmul.f32 %v3991, %v4023
      %v4056 = vmul.f32 %v3992, %v4024
      %v4057 = vmul.f32 %v3993, %v4025
      %v4058 = vmul.f32 %v3994, %v4026
      %v4059 = vmul.f32 %v3995, %v4027
      %v4060 = vmul.f32 %v3996, %v4028
      %v4061 = vmul.f32 %v3997, %v4029
      %v4062 = vadd.f32 %v4030, %v3887
      %v4063 = vadd.f32 %v4031, %v3889
      %v4064 = vadd.f32 %v4032, %v3892
      %v4065 = vadd.f32 %v4033, %v3894
      %v4066 = vadd.f32 %v4034, %v3897
      %v4067 = vadd.f32 %v4035, %v3899
      %v4068 = vadd.f32 %v4036, %v3902
      %v4069 = vadd.f32 %v4037, %v3904
      %v4070 = vadd.f32 %v4038, %v3907
      %v4071 = vadd.f32 %v4039, %v3909
      %v4072 = vadd.f32 %v4040, %v3912
      %v4073 = vadd.f32 %v4041, %v3914
      %v4074 = vadd.f32 %v4042, %v3917
      %v4075 = vadd.f32 %v4043, %v3919
      %v4076 = vadd.f32 %v4044, %v3922
      %v4077 = vadd.f32 %v4045, %v3924
      %v4078 = vadd.f32 %v4046, %v3927
      %v4079 = vadd.f32 %v4047, %v3929
      %v4080 = vadd.f32 %v4048, %v3932
      %v4081 = vadd.f32 %v4049, %v3934
      %v4082 = vadd.f32 %v4050, %v3937
      %v4083 = vadd.f32 %v4051, %v3939
      %v4084 = vadd.f32 %v4052, %v3942
      %v4085 = vadd.f32 %v4053, %v3944
      %v4086 = vadd.f32 %v4054, %v3947
      %v4087 = vadd.f32 %v4055, %v3949
      %v4088 = vadd.f32 %v4056, %v3952
      %v4089 = vadd.f32 %v4057, %v3954
      %v4090 = vadd.f32 %v4058, %v3957
      %v4091 = vadd.f32 %v4059, %v3959
      %v4092 = vadd.f32 %v4060, %v3962
      %v4093 = vadd.f32 %v4061, %v3964
      %4094 = vst [vmem:[%s306] sm:$0xff] %v4062
      %4095 = vst [vmem:[%s306 + $0x8] sm:$0xff] %v4063
      %4096 = vst [vmem:[%s306 + $0x10] sm:$0xff] %v4064
      %4097 = vst [vmem:[%s306 + $0x18] sm:$0xff] %v4065
      %4098 = vst [vmem:[%s306 + $0x20] sm:$0xff] %v4066
      %4099 = vst [vmem:[%s306 + $0x28] sm:$0xff] %v4067
      %4100 = vst [vmem:[%s306 + $0x30] sm:$0xff] %v4068
      %4101 = vst [vmem:[%s306 + $0x38] sm:$0xff] %v4069
      %4102 = vst [vmem:[%s306 + $0x40] sm:$0xff] %v4070
      %4103 = vst [vmem:[%s306 + $0x48] sm:$0xff] %v4071
      %4104 = vst [vmem:[%s306 + $0x50] sm:$0xff] %v4072
      %4105 = vst [vmem:[%s306 + $0x58] sm:$0xff] %v4073
      %4106 = vst [vmem:[%s306 + $0x60] sm:$0xff] %v4074
      %4107 = vst [vmem:[%s306 + $0x68] sm:$0xff] %v4075
      %4108 = vst [vmem:[%s306 + $0x70] sm:$0xff] %v4076
      %4109 = vst [vmem:[%s306 + $0x78] sm:$0xff] %v4077
      %4110 = vst [vmem:[%s306 + $0x80] sm:$0xff] %v4078
      %4111 = vst [vmem:[%s306 + $0x88] sm:$0xff] %v4079
      %4112 = vst [vmem:[%s306 + $0x90] sm:$0xff] %v4080
      %4113 = vst [vmem:[%s306 + $0x98] sm:$0xff] %v4081
      %4114 = vst [vmem:[%s306 + $0xa0] sm:$0xff] %v4082
      %4115 = vst [vmem:[%s306 + $0xa8] sm:$0xff] %v4083
      %4116 = vst [vmem:[%s306 + $0xb0] sm:$0xff] %v4084
      %4117 = vst [vmem:[%s306 + $0xb8] sm:$0xff] %v4085
      %4118 = vst [vmem:[%s306 + $0xc0] sm:$0xff] %v4086
      %4119 = vst [vmem:[%s306 + $0xc8] sm:$0xff] %v4087
      %4120 = vst [vmem:[%s306 + $0xd0] sm:$0xff] %v4088
      %4121 = vst [vmem:[%s306 + $0xd8] sm:$0xff] %v4089
      %4122 = vst [vmem:[%s306 + $0xe0] sm:$0xff] %v4090
      %4123 = vst [vmem:[%s306 + $0xe8] sm:$0xff] %v4091
      %4124 = vst [vmem:[%s306 + $0xf0] sm:$0xff] %v4092
      %4125 = vst [vmem:[%s306 + $0xf8] sm:$0xff] %v4093
      %s4126 = smul.u32 32, %s17
      %p4127 = scmp.lt.s32.totalorder %s4126, 63
      %s4128 = scalar_select %p4127, %s4126, 63
      %s4129 = smul.addr %s4128, 8
      %s4130 = scalar_lea.vmem %s6, %s4129
      // Predicated region
      $region45: #{spade_forward.5} parent=43 // pred_check
        %p4131 = pneg %p181
      $region46: #{spade_forward.5} parent=43 // pred_check_branch
        %4133 = sbr.rel (%p4131) target = $region48
      $region47: #{spade_forward.5} parent=43 // pred_region
        %s4134 = smul.u32 32, %s17
      $region48: #{spade_forward.5} parent=43 // pred_fallthru
        _
    $region44: #{spade_forward.5} parent=5 // pred_fallthru
      _
    %p4135 = scmp.le.s32.totalorder 2, %s12
    // Predicated region
    $region49: #{spade_forward.5} parent=5 // pred_check
      %p4136 = pneg %p4135
    $region50: #{spade_forward.5} parent=5 // pred_check_branch
      %4138 = sbr.rel (%p4136) target = $region52
    $region51: #{spade_forward.5} parent=5 // pred_region
      %s4139 = ssub.s32 %s12, 2
      // Predicated region
      $region53: #{spade_forward.5} parent=51 // pred_check
        %p4140 = pneg %p187
      $region54: #{spade_forward.5} parent=51 // pred_check_branch
        %4142 = sbr.rel (%p4140) target = $region56
      $region55: #{spade_forward.5} parent=51 // pred_region
        %s4143 = smul.u32 32, %s18
        %p4144 = scmp.lt.s32.totalorder %s4143, 63
        %s4145 = scalar_select %p4144, %s4143, 63
        %s4146 = smul.addr %s4145, 8
        %s4147 = scalar_lea.vmem %s6, %s4146
      $region56: #{spade_forward.5} parent=51 // pred_fallthru
        _
    $region52: #{spade_forward.5} parent=5 // pred_fallthru
      _
  $region6: #{spade_forward.5} parent=0 // loop_footer
    %s16 = sadd.s32 1, %s12
  $region7: #{spade_forward.5} parent=0 // loop_footer_branch
    %11 = sbr.rel target = $region3
  $region8: #{spade_forward.5} parent=0 // loop_exit
    _

</llo_original>
